<compile_context>
chip_gen: v7x
topology: tpu7x:2x2x1
jax: 0.10.0
libtpu: 0.0.40
codegen_flags: <defaults>
</compile_context>

<pallas_src>
import functools
import math

import jax
import jax.numpy as jnp
from jax.experimental import pallas as pl
from jax.experimental.pallas import tpu as pltpu

# ---------------------------------------------------------------------------
# Config (small shapes consistent with the module's constructor arguments)
# ---------------------------------------------------------------------------
N_BATCH = 2          # batch size
M_VIEWS = 2          # number of render views
IMG_RES = 32         # input image spatial resolution
PATCH = 16           # encoder patch size
ENC_FEAT = 64        # encoder_feat_dim (shrunk from 768 for the synthetic run)
CAM_EMBED = 32       # camera_embed_dim
CAM_RAW = 16         # 12 + 4
GDIM = 16            # gaussian_dim
TG_DIM = 32          # triplane_generate_dim
TRI_DIM = 16         # triplane_dim
LOW_RES = 4          # triplane_low_res
ALPHA = 0.05
NVP_HIDDEN = 512
NVP_BLOCKS = 4
RENDER_REGION = 8
SAMPLES_PER_RAY = 4  # rendering_samples_per_ray (unused in simplified synthesizer)

N_PATCH_PER_IMG = (IMG_RES // PATCH) ** 2          # 4 tokens per image
N_TOKENS = N_BATCH * N_PATCH_PER_IMG               # 8 rows in the patch matmul
PATCH_DIM = 3 * PATCH * PATCH                      # 768
TOKEN_WIDTH = 3 * LOW_RES * LOW_RES * TG_DIM       # 1536
LOG_VAR_MIN = math.log(1e-9)


# ---------------------------------------------------------------------------
# Small helpers
# ---------------------------------------------------------------------------
def _full_spec(shape):
    nd = len(shape)
    return pl.BlockSpec(shape, lambda b, _nd=nd: (0,) * _nd)


def _sigmoid(y):
    # EUP-friendly: exp + approximate reciprocal instead of a VPU divide.
    return pl.reciprocal(1.0 + jnp.exp(-y), approx=True)


# ---------------------------------------------------------------------------
# Pallas kernels
# ---------------------------------------------------------------------------
def _linear_kernel(x_ref, w_ref, b_ref, o_ref, *, activation):
    """y = act(x @ w + b) on a full VMEM-resident tile."""
    y = jnp.dot(x_ref[...].astype(w_ref.dtype), w_ref[...],
                preferred_element_type=jnp.float32) + b_ref[...]
    if activation == "relu":
        y = jnp.maximum(y, 0.0)
    elif activation == "sigmoid":
        y = _sigmoid(y)
    o_ref[...] = y.astype(o_ref.dtype)


def _latent_path_kernel(patch_ref, cam_ref, noise_ref,
                        encw_ref, encb_ref,
                        cw1_ref, cb1_ref, cw2_ref, cb2_ref,
                        gtwi_ref, gtwc_ref, gtb_ref,
                        w1_ref, b1_ref,
                        ws2_ref, bs2_ref, wt2_ref, bt2_ref,
                        ws3_ref, bs3_ref, wt3_ref, bt3_ref,
                        tgw_ref, tgb_ref,
                        means_ref, rawvar_ref, tok_ref,
                        carry_ref):
    """Encoder + CameraEmbedder + GaussianTransform + reparam + one RealNVP
    coupling block per grid step + alpha scaling + TriplaneGenerator
    projection, all fused in a single pallas_call.

    The latent x is a VMEM scratch carry; per-block NVP weights are streamed
    via BlockSpec double-buffering (block b+1's weights prefetch while b
    computes)."""
    b = pl.program_id(0)

    # ---- grid step 0: encoder + camera embedder + Gaussian head + reparam ----
    @pl.when(b == 0)
    def _():
        # TODO(synk): full DINO ViT encoder not reproducible; stand-in =
        # patch-embed matmul + per-image mean pool (fused as a pooling matmul).
        tok = jnp.dot(patch_ref[...].astype(encw_ref.dtype), encw_ref[...],
                      preferred_element_type=jnp.float32) + encb_ref[...]
        rows = jax.lax.broadcasted_iota(jnp.int32, (N_BATCH, N_TOKENS), 0)
        cols = jax.lax.broadcasted_iota(jnp.int32, (N_BATCH, N_TOKENS), 1)
        in_img = (cols >= rows * N_PATCH_PER_IMG) & (cols < (rows + 1) * N_PATCH_PER_IMG)
        pool = jnp.where(in_img, 1.0 / N_PATCH_PER_IMG, 0.0).astype(jnp.float32)
        image_feats = jnp.dot(pool, tok, preferred_element_type=jnp.float32)

        # CameraEmbedder: 2-layer MLP with SiLU.
        h = jnp.dot(cam_ref[...], cw1_ref[...],
                    preferred_element_type=jnp.float32) + cb1_ref[...]
        h = h * _sigmoid(h)
        cam_emb = jnp.dot(h, cw2_ref[...],
                          preferred_element_type=jnp.float32) + cb2_ref[...]

        # GaussianTransform projection on concat([image_feats, cam_emb]);
        # the concat is avoided by splitting the weight into two matmuls.
        # TODO(synk): GaussianTransform internals unknown; exp-parameterized variance head.
        gt = (jnp.dot(image_feats, gtwi_ref[...], preferred_element_type=jnp.float32)
              + jnp.dot(cam_emb, gtwc_ref[...], preferred_element_type=jnp.float32)
              + gtb_ref[...])
        means = gt[:, :GDIM]
        raw_var = gt[:, GDIM:]
        std = jnp.exp(0.5 * raw_var)          # sqrt(exp(raw_var)) without overflow
        means_ref[...] = means
        rawvar_ref[...] = raw_var
        carry_ref[...] = means + std * noise_ref[...]

    # ---- one RealNVP affine-coupling block per grid step ----
    x = carry_ref[...]
    lane = jax.lax.broadcasted_iota(jnp.int32, (N_BATCH, GDIM), 1)
    mask = ((lane & 1) == (b & 1)).astype(jnp.float32)   # alternating checkerboard
    xm = x * mask
    xm_b = xm.astype(w1_ref.dtype)

    # fused first layer of the s- and t-MLPs: single (N, GDIM) x (GDIM, 2H) matmul
    h1 = jnp.maximum(jnp.dot(xm_b, w1_ref[...],
                             preferred_element_type=jnp.float32) + b1_ref[...], 0.0)
    hs = h1[:, :NVP_HIDDEN]
    ht = h1[:, NVP_HIDDEN:]

    hs2 = jnp.maximum(jnp.dot(hs.astype(ws2_ref.dtype), ws2_ref[...],
                              preferred_element_type=jnp.float32) + bs2_ref[...], 0.0)
    ht2 = jnp.maximum(jnp.dot(ht.astype(wt2_ref.dtype), wt2_ref[...],
                              preferred_element_type=jnp.float32) + bt2_ref[...], 0.0)

    s = jnp.tanh(jnp.dot(hs2.astype(ws3_ref.dtype), ws3_ref[...],
                         preferred_element_type=jnp.float32) + bs3_ref[...])
    t = jnp.dot(ht2.astype(wt3_ref.dtype), wt3_ref[...],
                preferred_element_type=jnp.float32) + bt3_ref[...]

    x_new = xm + (1.0 - mask) * (x * jnp.exp(s) + t)
    carry_ref[...] = x_new

    # ---- last grid step: alpha scaling + TriplaneGenerator projection ----
    @pl.when(b == NVP_BLOCKS - 1)
    def _():
        # TODO(synk): generate_parameters() definition unknown; linear alpha scaling, no perturbation.
        nerf_params = ALPHA * x_new
        tok_ref[...] = jnp.dot(nerf_params.astype(tgw_ref.dtype), tgw_ref[...],
                               preferred_element_type=jnp.float32) + tgb_ref[...]


# ---------------------------------------------------------------------------
# pallas_call wrappers
# ---------------------------------------------------------------------------
def pallas_linear(x, w, b, activation="none"):
    m, k = x.shape
    k2, n = w.shape
    assert k == k2
    b2 = b.reshape(1, n)
    return pl.pallas_call(
        functools.partial(_linear_kernel, activation=activation),
        grid=(1,),
        in_specs=[_full_spec((m, k)), _full_spec((k, n)), _full_spec((1, n))],
        out_specs=_full_spec((m, n)),
        out_shape=jax.ShapeDtypeStruct((m, n), jnp.float32),
        compiler_params=pltpu.CompilerParams(dimension_semantics=("arbitrary",)),
    )(x, w, b2)


def latent_path(params, patches, camera, noise):
    nvp = params["nvp"]

    def blk_spec(arr):
        return pl.BlockSpec((None,) + arr.shape[1:], lambda b: (b, 0, 0))

    const_in = [patches, camera, noise,
                params["enc_w"], params["enc_b"],
                params["cam_w1"], params["cam_b1"], params["cam_w2"], params["cam_b2"],
                params["gt_w_img"], params["gt_w_cam"], params["gt_b"]]
    stacked = [nvp["w1"], nvp["b1"],
               nvp["ws2"], nvp["bs2"], nvp["wt2"], nvp["bt2"],
               nvp["ws3"], nvp["bs3"], nvp["wt3"], nvp["bt3"]]
    tail_in = [params["tg_w"], params["tg_b"]]

    in_specs = ([_full_spec(a.shape) for a in const_in]
                + [blk_spec(a) for a in stacked]
                + [_full_spec(a.shape) for a in tail_in])

    out_shape = (jax.ShapeDtypeStruct((N_BATCH, GDIM), jnp.float32),
                 jax.ShapeDtypeStruct((N_BATCH, GDIM), jnp.float32),
                 jax.ShapeDtypeStruct((N_BATCH, TOKEN_WIDTH), jnp.float32))
    out_specs = (_full_spec((N_BATCH, GDIM)),
                 _full_spec((N_BATCH, GDIM)),
                 _full_spec((N_BATCH, TOKEN_WIDTH)))

    means, raw_var, tokens = pl.pallas_call(
        _latent_path_kernel,
        grid=(NVP_BLOCKS,),
        in_specs=in_specs,
        out_specs=out_specs,
        out_shape=out_shape,
        scratch_shapes=[pltpu.VMEM((N_BATCH, GDIM), jnp.float32)],
        compiler_params=pltpu.CompilerParams(dimension_semantics=("arbitrary",)),
    )(*(const_in + stacked + tail_in))
    return means, raw_var, tokens


# ---------------------------------------------------------------------------
# Parameter init (deterministic, synthetic)
# ---------------------------------------------------------------------------
def _dense(key, fan_in, fan_out, dtype=jnp.float32):
    kw, kb = jax.random.split(key)
    w = (jax.random.normal(kw, (fan_in, fan_out), jnp.float32) / math.sqrt(fan_in)).astype(dtype)
    b = jax.random.normal(kb, (fan_out,), jnp.float32) * 0.01   # biases stay f32
    return w, b


def init_params(key):
    keys = jax.random.split(key, 16)
    params = {}

    enc_w, enc_b = _dense(keys[0], PATCH_DIM, ENC_FEAT, dtype=jnp.bfloat16)
    params["enc_w"], params["enc_b"] = enc_w, enc_b.reshape(1, ENC_FEAT)

    cam_w1, cam_b1 = _dense(keys[1], CAM_RAW, CAM_EMBED)
    cam_w2, cam_b2 = _dense(keys[2], CAM_EMBED, CAM_EMBED)
    params["cam_w1"], params["cam_b1"] = cam_w1, cam_b1.reshape(1, -1)
    params["cam_w2"], params["cam_b2"] = cam_w2, cam_b2.reshape(1, -1)

    gt_w, gt_b = _dense(keys[3], ENC_FEAT + CAM_EMBED, 2 * GDIM)
    params["gt_w_img"] = gt_w[:ENC_FEAT]          # split so the kernel avoids a concat
    params["gt_w_cam"] = gt_w[ENC_FEAT:]
    params["gt_b"] = gt_b.reshape(1, -1)

    # RealNVP: stack the 4 coupling blocks on a leading axis (bf16 weights, f32 biases);
    # the s- and t-MLP first layers are pre-concatenated into one (GDIM, 2H) weight.
    w1s, b1s = [], []
    ws2s, bs2s, wt2s, bt2s = [], [], [], []
    ws3s, bs3s, wt3s, bt3s = [], [], [], []
    for bk in jax.random.split(keys[4], NVP_BLOCKS):
        sub = jax.random.split(bk, 6)
        ws1, bs1 = _dense(sub[0], GDIM, NVP_HIDDEN, dtype=jnp.bfloat16)
        ws2, bs2 = _dense(sub[1], NVP_HIDDEN, NVP_HIDDEN, dtype=jnp.bfloat16)
        ws3, bs3 = _dense(sub[2], NVP_HIDDEN, GDIM, dtype=jnp.bfloat16)
        wt1, bt1 = _dense(sub[3], GDIM, NVP_HIDDEN, dtype=jnp.bfloat16)
        wt2, bt2 = _dense(sub[4], NVP_HIDDEN, NVP_HIDDEN, dtype=jnp.bfloat16)
        wt3, bt3 = _dense(sub[5], NVP_HIDDEN, GDIM, dtype=jnp.bfloat16)
        w1s.append(jnp.concatenate([ws1, wt1], axis=1))
        b1s.append(jnp.concatenate([bs1, bt1], axis=0).reshape(1, 2 * NVP_HIDDEN))
        ws2s.append(ws2); bs2s.append(bs2.reshape(1, -1))
        wt2s.append(wt2); bt2s.append(bt2.reshape(1, -1))
        ws3s.append(ws3); bs3s.append(bs3.reshape(1, -1))
        wt3s.append(wt3); bt3s.append(bt3.reshape(1, -1))
    params["nvp"] = dict(
        w1=jnp.stack(w1s), b1=jnp.stack(b1s),
        ws2=jnp.stack(ws2s), bs2=jnp.stack(bs2s),
        wt2=jnp.stack(wt2s), bt2=jnp.stack(bt2s),
        ws3=jnp.stack(ws3s), bs3=jnp.stack(bs3s),
        wt3=jnp.stack(wt3s), bt3=jnp.stack(bt3s),
    )

    tg_w, tg_b = _dense(keys[5], GDIM, TOKEN_WIDTH, dtype=jnp.bfloat16)
    params["tg_w"], params["tg_b"] = tg_w, tg_b.reshape(1, -1)

    # ConvTranspose2d(triplane_generate_dim, triplane_dim, k=2, s=2): weight (Cin, Cout, 2, 2)
    kw, kb = jax.random.split(keys[6])
    params["up_w"] = jax.random.normal(kw, (TG_DIM, TRI_DIM, 2, 2), jnp.float32) / math.sqrt(TG_DIM * 4)
    params["up_b"] = jax.random.normal(kb, (TRI_DIM,), jnp.float32) * 0.01

    rh_w, rh_b = _dense(keys[7], TRI_DIM + 25 + 1, 3)
    params["rh_w"], params["rh_b"] = rh_w, rh_b
    return params


# ---------------------------------------------------------------------------
# Model pieces (glue in JAX, compute in Pallas)
# ---------------------------------------------------------------------------
def patchify(image):
    # NCHW -> (N * num_patches, 3 * PATCH * PATCH)
    n, c, h, w = image.shape
    gh, gw = h // PATCH, w // PATCH
    x = image.reshape(n, c, gh, PATCH, gw, PATCH)
    x = jnp.transpose(x, (0, 2, 4, 1, 3, 5))          # (N, gh, gw, C, P, P)
    return x.reshape(n * gh * gw, c * PATCH * PATCH)


def reshape_upsample(params, tokens):
    """Mirrors ModelProbNeRF.reshape_upsample; ConvTranspose2d(k=2,s=2) as a Pallas matmul."""
    n = tokens.shape[0]
    h = w = LOW_RES
    d = TG_DIM
    x = tokens.reshape(n, 3, h, w, d)
    x = jnp.einsum("nihwd->indhw", x)                  # (3, N, D, H, W)
    x = x.reshape(3 * n, d, h, w)

    cout = TRI_DIM
    xm = jnp.transpose(x, (0, 2, 3, 1)).reshape(3 * n * h * w, d)          # rows = spatial positions
    wr = jnp.transpose(params["up_w"], (0, 2, 3, 1)).reshape(d, 4 * cout)  # [ci, (i,j,co)]
    br = jnp.tile(params["up_b"], 4)
    y = pallas_linear(xm, wr, br)                      # (3N*H*W, 4*Cout)
    y = y.reshape(3 * n, h, w, 2, 2, cout)
    y = jnp.transpose(y, (0, 5, 1, 3, 2, 4)).reshape(3 * n, cout, 2 * h, 2 * w)

    y = y.reshape(3, n, cout, 2 * h, 2 * w)
    planes = jnp.einsum("indhw->nidhw", y)             # (N, 3, triplane_dim, 2H, 2W)
    return planes


def synthesize(params, planes, render_cameras, render_anchors, render_resolutions,
               render_bg_colors, render_region_size):
    # TODO(synk): TriplaneSynthesizer's volumetric rendering (ray sampling, NeRF MLPs,
    # alpha compositing) is not defined in the reference; simplified render head instead.
    n, m = render_cameras.shape[:2]
    feat = jnp.mean(planes, axis=(1, 3, 4))                              # (N, triplane_dim)
    feat_b = jnp.broadcast_to(feat[:, None, :], (n, m, feat.shape[-1]))
    head_in = jnp.concatenate([feat_b, render_cameras, render_bg_colors], axis=-1)
    head_in = head_in.reshape(n * m, -1)
    rgb = pallas_linear(head_in, params["rh_w"], params["rh_b"], activation="sigmoid")  # (N*M, 3)
    r = render_region_size
    images_rgb = jnp.broadcast_to(rgb.reshape(n, m, 3, 1, 1), (n, m, 3, r, r))
    return {"images_rgb": images_rgb}


def forward_planes(params, image, camera, noise):
    n = image.shape[0]
    patches = patchify(image)
    # Fused: encoder + camera embedder + GaussianTransform + reparam +
    # 4 RealNVP blocks + alpha scale + TriplaneGenerator.
    means, raw_var, tokens = latent_path(params, patches, camera, noise)
    tokens = tokens.reshape(n, 3 * LOW_RES * LOW_RES, TG_DIM)
    planes = reshape_upsample(params, tokens)
    return planes, means, raw_var


def forward(params, image, source_camera, render_cameras, render_anchors,
            render_resolutions, render_bg_colors, noise, render_region_size):
    n, m = render_cameras.shape[:2]
    planes, means, raw_var = forward_planes(params, image, source_camera, noise)
    # log(clamp(exp(raw_var), 1e-9)) == max(raw_var, log(1e-9)), computed without the
    # overflow-prone exp/log round trip.
    log_var = jnp.maximum(raw_var, LOG_VAR_MIN)
    render_results = synthesize(params, planes, render_cameras, render_anchors,
                                render_resolutions, render_bg_colors, render_region_size)
    assert render_results["images_rgb"].shape[0] == n
    assert render_results["images_rgb"].shape[1] == m
    return {"planes": planes, "mu": means, "log_var": log_var, **render_results}


# ---------------------------------------------------------------------------
# Main
# ---------------------------------------------------------------------------
if __name__ == "__main__":
    key = jax.random.PRNGKey(0)
    kp, ki, kc, krc, krb, kn = jax.random.split(key, 6)

    params = init_params(kp)
    image = jax.random.normal(ki, (N_BATCH, 3, IMG_RES, IMG_RES), jnp.float32)
    source_camera = jax.random.normal(kc, (N_BATCH, CAM_RAW), jnp.float32)
    render_cameras = jax.random.normal(krc, (N_BATCH, M_VIEWS, 25), jnp.float32)
    render_anchors = jnp.zeros((N_BATCH, M_VIEWS, 2), jnp.float32)
    render_resolutions = jnp.full((N_BATCH, M_VIEWS, 1), float(RENDER_REGION), jnp.float32)
    render_bg_colors = jax.random.uniform(krb, (N_BATCH, M_VIEWS, 1), jnp.float32)
    noise = jax.random.normal(kn, (N_BATCH, GDIM), jnp.float32)

    fwd = jax.jit(forward, static_argnums=(8,))
    out = fwd(params, image, source_camera, render_cameras, render_anchors,
              render_resolutions, render_bg_colors, noise, RENDER_REGION)
    jax.block_until_ready(out)

    assert out["planes"].shape == (N_BATCH, 3, TRI_DIM, 2 * LOW_RES, 2 * LOW_RES)
    assert out["mu"].shape == (N_BATCH, GDIM)
    assert out["log_var"].shape == (N_BATCH, GDIM)
    assert out["images_rgb"].shape == (N_BATCH, M_VIEWS, 3, RENDER_REGION, RENDER_REGION)
    print("KERNEL_OK")
</pallas_src>

<mosaic_0001>
module attributes {stable_mosaic.version = 11 : i64} {
  func.func @_latent_path_kernel(%arg0: i32, %arg1: memref<8x768xf32, #tpu.memory_space<vmem>>, %arg2: memref<2x16xf32, #tpu.memory_space<vmem>>, %arg3: memref<2x16xf32, #tpu.memory_space<vmem>>, %arg4: memref<768x64xbf16, #tpu.memory_space<vmem>>, %arg5: memref<1x64xf32, #tpu.memory_space<vmem>>, %arg6: memref<16x32xf32, #tpu.memory_space<vmem>>, %arg7: memref<1x32xf32, #tpu.memory_space<vmem>>, %arg8: memref<32x32xf32, #tpu.memory_space<vmem>>, %arg9: memref<1x32xf32, #tpu.memory_space<vmem>>, %arg10: memref<64x32xf32, #tpu.memory_space<vmem>>, %arg11: memref<32x32xf32, #tpu.memory_space<vmem>>, %arg12: memref<1x32xf32, #tpu.memory_space<vmem>>, %arg13: memref<1x16x1024xbf16, #tpu.memory_space<vmem>>, %arg14: memref<1x1x1024xf32, #tpu.memory_space<vmem>>, %arg15: memref<1x512x512xbf16, #tpu.memory_space<vmem>>, %arg16: memref<1x1x512xf32, #tpu.memory_space<vmem>>, %arg17: memref<1x512x512xbf16, #tpu.memory_space<vmem>>, %arg18: memref<1x1x512xf32, #tpu.memory_space<vmem>>, %arg19: memref<1x512x16xbf16, #tpu.memory_space<vmem>>, %arg20: memref<1x1x16xf32, #tpu.memory_space<vmem>>, %arg21: memref<1x512x16xbf16, #tpu.memory_space<vmem>>, %arg22: memref<1x1x16xf32, #tpu.memory_space<vmem>>, %arg23: memref<16x1536xbf16, #tpu.memory_space<vmem>>, %arg24: memref<1x1536xf32, #tpu.memory_space<vmem>>, %arg25: memref<2x16xf32, #tpu.memory_space<vmem>>, %arg26: memref<2x16xf32, #tpu.memory_space<vmem>>, %arg27: memref<2x1536xf32, #tpu.memory_space<vmem>>, %arg28: memref<2x16xf32, #tpu.memory_space<vmem>>) attributes {dimension_semantics = [#tpu.dimension_semantics<arbitrary>], iteration_bounds = array<i64: 4>, scalar_prefetch = 0 : i64, scratch_operands = 1 : i64, tpu.core_type = #tpu.core_type<tc>, window_params = [{pipeline_mode = #tpu.pipeline_mode<synchronous>, transform_indices = @transform_0, window_bounds = array<i64: 8, 768>}, {pipeline_mode = #tpu.pipeline_mode<synchronous>, transform_indices = @transform_1, window_bounds = array<i64: 2, 16>}, {pipeline_mode = #tpu.pipeline_mode<synchronous>, transform_indices = @transform_2, window_bounds = array<i64: 2, 16>}, {pipeline_mode = #tpu.pipeline_mode<synchronous>, transform_indices = @transform_3, window_bounds = array<i64: 768, 64>}, {pipeline_mode = #tpu.pipeline_mode<synchronous>, transform_indices = @transform_4, window_bounds = array<i64: 1, 64>}, {pipeline_mode = #tpu.pipeline_mode<synchronous>, transform_indices = @transform_5, window_bounds = array<i64: 16, 32>}, {pipeline_mode = #tpu.pipeline_mode<synchronous>, transform_indices = @transform_6, window_bounds = array<i64: 1, 32>}, {pipeline_mode = #tpu.pipeline_mode<synchronous>, transform_indices = @transform_7, window_bounds = array<i64: 32, 32>}, {pipeline_mode = #tpu.pipeline_mode<synchronous>, transform_indices = @transform_8, window_bounds = array<i64: 1, 32>}, {pipeline_mode = #tpu.pipeline_mode<synchronous>, transform_indices = @transform_9, window_bounds = array<i64: 64, 32>}, {pipeline_mode = #tpu.pipeline_mode<synchronous>, transform_indices = @transform_10, window_bounds = array<i64: 32, 32>}, {pipeline_mode = #tpu.pipeline_mode<synchronous>, transform_indices = @transform_11, window_bounds = array<i64: 1, 32>}, {transform_indices = @transform_12, window_bounds = array<i64: 1, 16, 1024>}, {transform_indices = @transform_13, window_bounds = array<i64: 1, 1, 1024>}, {transform_indices = @transform_14, window_bounds = array<i64: 1, 512, 512>}, {transform_indices = @transform_15, window_bounds = array<i64: 1, 1, 512>}, {transform_indices = @transform_16, window_bounds = array<i64: 1, 512, 512>}, {transform_indices = @transform_17, window_bounds = array<i64: 1, 1, 512>}, {transform_indices = @transform_18, window_bounds = array<i64: 1, 512, 16>}, {transform_indices = @transform_19, window_bounds = array<i64: 1, 1, 16>}, {transform_indices = @transform_20, window_bounds = array<i64: 1, 512, 16>}, {transform_indices = @transform_21, window_bounds = array<i64: 1, 1, 16>}, {pipeline_mode = #tpu.pipeline_mode<synchronous>, transform_indices = @transform_22, window_bounds = array<i64: 16, 1536>}, {pipeline_mode = #tpu.pipeline_mode<synchronous>, transform_indices = @transform_23, window_bounds = array<i64: 1, 1536>}, {pipeline_mode = #tpu.pipeline_mode<synchronous>, transform_indices = @transform_24, window_bounds = array<i64: 2, 16>}, {pipeline_mode = #tpu.pipeline_mode<synchronous>, transform_indices = @transform_25, window_bounds = array<i64: 2, 16>}, {pipeline_mode = #tpu.pipeline_mode<synchronous>, transform_indices = @transform_26, window_bounds = array<i64: 2, 1536>}]} {
    %c0_i32 = arith.constant 0 : i32
    %0 = arith.cmpi eq, %arg0, %c0_i32 : i32
    %1 = arith.extui %0 : i1 to i32
    %c0_i32_0 = arith.constant 0 : i32
    %2 = arith.cmpi ne, %1, %c0_i32_0 : i32
    scf.if %2 {
      %c0_44 = arith.constant 0 : index
      %c0_45 = arith.constant 0 : index
      %73 = vector.load %arg1[%c0_44, %c0_45] : memref<8x768xf32, #tpu.memory_space<vmem>>, vector<8x768xf32>
      %74 = arith.truncf %73 : vector<8x768xf32> to vector<8x768xbf16>
      %c0_46 = arith.constant 0 : index
      %c0_47 = arith.constant 0 : index
      %75 = vector.load %arg4[%c0_46, %c0_47] : memref<768x64xbf16, #tpu.memory_space<vmem>>, vector<768x64xbf16>
      %cst_48 = arith.constant dense<0.000000e+00> : vector<8x64xf32>
      %76 = tpu.matmul %74, %75, %cst_48 {dimension_numbers = #tpu.dot_dimension_numbers<[1], [0], [0], [1], [0, 0, 1, 1], [], []>} : vector<8x768xbf16>, vector<768x64xbf16>, vector<8x64xf32> -> vector<8x64xf32>
      %c0_49 = arith.constant 0 : index
      %c0_50 = arith.constant 0 : index
      %77 = vector.load %arg5[%c0_49, %c0_50] : memref<1x64xf32, #tpu.memory_space<vmem>>, vector<1x64xf32>
      %78 = vector.broadcast %77 : vector<1x64xf32> to vector<8x64xf32>
      %79 = arith.addf %76, %78 : vector<8x64xf32>
      %80 = tpu.iota {dimensions = array<i32: 0>} : vector<2x8xi32>
      %81 = tpu.iota {dimensions = array<i32: 1>} : vector<2x8xi32>
      %c4_i32 = arith.constant 4 : i32
      %82 = vector.broadcast %c4_i32 : i32 to vector<2x8xi32>
      %83 = arith.muli %80, %82 : vector<2x8xi32>
      %84 = arith.cmpi sge, %81, %83 : vector<2x8xi32>
      %c1_i32_51 = arith.constant 1 : i32
      %85 = vector.broadcast %c1_i32_51 : i32 to vector<2x8xi32>
      %86 = arith.addi %80, %85 : vector<2x8xi32>
      %c4_i32_52 = arith.constant 4 : i32
      %87 = vector.broadcast %c4_i32_52 : i32 to vector<2x8xi32>
      %88 = arith.muli %86, %87 : vector<2x8xi32>
      %89 = arith.cmpi slt, %81, %88 : vector<2x8xi32>
      %90 = arith.andi %84, %89 : vector<2x8xi1>
      %cst_53 = arith.constant 2.500000e-01 : f32
      %cst_54 = arith.constant 0.000000e+00 : f32
      %91 = vector.broadcast %cst_53 : f32 to vector<2x8xf32>
      %92 = vector.broadcast %cst_54 : f32 to vector<2x8xf32>
      %93 = arith.select %90, %91, %92 : vector<2x8xi1>, vector<2x8xf32>
      %cst_55 = arith.constant dense<0.000000e+00> : vector<2x64xf32>
      %94 = tpu.matmul %93, %79, %cst_55 {dimension_numbers = #tpu.dot_dimension_numbers<[1], [0], [0], [1], [0, 0, 1, 1], [], []>} : vector<2x8xf32>, vector<8x64xf32>, vector<2x64xf32> -> vector<2x64xf32>
      %c0_56 = arith.constant 0 : index
      %c0_57 = arith.constant 0 : index
      %95 = vector.load %arg2[%c0_56, %c0_57] : memref<2x16xf32, #tpu.memory_space<vmem>>, vector<2x16xf32>
      %c0_58 = arith.constant 0 : index
      %c0_59 = arith.constant 0 : index
      %96 = vector.load %arg6[%c0_58, %c0_59] : memref<16x32xf32, #tpu.memory_space<vmem>>, vector<16x32xf32>
      %cst_60 = arith.constant dense<0.000000e+00> : vector<2x32xf32>
      %97 = tpu.matmul %95, %96, %cst_60 {dimension_numbers = #tpu.dot_dimension_numbers<[1], [0], [0], [1], [0, 0, 1, 1], [], []>} : vector<2x16xf32>, vector<16x32xf32>, vector<2x32xf32> -> vector<2x32xf32>
      %c0_61 = arith.constant 0 : index
      %c0_62 = arith.constant 0 : index
      %98 = vector.load %arg7[%c0_61, %c0_62] : memref<1x32xf32, #tpu.memory_space<vmem>>, vector<1x32xf32>
      %99 = vector.broadcast %98 : vector<1x32xf32> to vector<2x32xf32>
      %100 = arith.addf %97, %99 : vector<2x32xf32>
      %cst_63 = arith.constant 0.000000e+00 : f32
      %101 = vector.broadcast %cst_63 : f32 to vector<2x32xf32>
      %102 = arith.subf %101, %100 : vector<2x32xf32>
      %103 = math.exp %102 : vector<2x32xf32>
      %cst_64 = arith.constant 1.000000e+00 : f32
      %104 = vector.broadcast %cst_64 : f32 to vector<2x32xf32>
      %105 = arith.addf %104, %103 : vector<2x32xf32>
      %106 = tpu.reciprocal %105 {approx = true} : vector<2x32xf32> -> vector<2x32xf32>
      %107 = arith.mulf %100, %106 : vector<2x32xf32>
      %c0_65 = arith.constant 0 : index
      %c0_66 = arith.constant 0 : index
      %108 = vector.load %arg8[%c0_65, %c0_66] : memref<32x32xf32, #tpu.memory_space<vmem>>, vector<32x32xf32>
      %cst_67 = arith.constant dense<0.000000e+00> : vector<2x32xf32>
      %109 = tpu.matmul %107, %108, %cst_67 {dimension_numbers = #tpu.dot_dimension_numbers<[1], [0], [0], [1], [0, 0, 1, 1], [], []>} : vector<2x32xf32>, vector<32x32xf32>, vector<2x32xf32> -> vector<2x32xf32>
      %c0_68 = arith.constant 0 : index
      %c0_69 = arith.constant 0 : index
      %110 = vector.load %arg9[%c0_68, %c0_69] : memref<1x32xf32, #tpu.memory_space<vmem>>, vector<1x32xf32>
      %111 = vector.broadcast %110 : vector<1x32xf32> to vector<2x32xf32>
      %112 = arith.addf %109, %111 : vector<2x32xf32>
      %c0_70 = arith.constant 0 : index
      %c0_71 = arith.constant 0 : index
      %113 = vector.load %arg10[%c0_70, %c0_71] : memref<64x32xf32, #tpu.memory_space<vmem>>, vector<64x32xf32>
      %cst_72 = arith.constant dense<0.000000e+00> : vector<2x32xf32>
      %114 = tpu.matmul %94, %113, %cst_72 {dimension_numbers = #tpu.dot_dimension_numbers<[1], [0], [0], [1], [0, 0, 1, 1], [], []>} : vector<2x64xf32>, vector<64x32xf32>, vector<2x32xf32> -> vector<2x32xf32>
      %c0_73 = arith.constant 0 : index
      %c0_74 = arith.constant 0 : index
      %115 = vector.load %arg11[%c0_73, %c0_74] : memref<32x32xf32, #tpu.memory_space<vmem>>, vector<32x32xf32>
      %cst_75 = arith.constant dense<0.000000e+00> : vector<2x32xf32>
      %116 = tpu.matmul %112, %115, %cst_75 {dimension_numbers = #tpu.dot_dimension_numbers<[1], [0], [0], [1], [0, 0, 1, 1], [], []>} : vector<2x32xf32>, vector<32x32xf32>, vector<2x32xf32> -> vector<2x32xf32>
      %117 = arith.addf %114, %116 : vector<2x32xf32>
      %c0_76 = arith.constant 0 : index
      %c0_77 = arith.constant 0 : index
      %118 = vector.load %arg12[%c0_76, %c0_77] : memref<1x32xf32, #tpu.memory_space<vmem>>, vector<1x32xf32>
      %119 = vector.broadcast %118 : vector<1x32xf32> to vector<2x32xf32>
      %120 = arith.addf %117, %119 : vector<2x32xf32>
      %121 = vector.extract_strided_slice %120 {offsets = [0, 0], sizes = [2, 16], strides = [1, 1]} : vector<2x32xf32> to vector<2x16xf32>
      %122 = vector.extract_strided_slice %120 {offsets = [0, 16], sizes = [2, 16], strides = [1, 1]} : vector<2x32xf32> to vector<2x16xf32>
      %cst_78 = arith.constant 5.000000e-01 : f32
      %123 = vector.broadcast %cst_78 : f32 to vector<2x16xf32>
      %124 = arith.mulf %123, %122 : vector<2x16xf32>
      %125 = math.exp %124 : vector<2x16xf32>
      %c0_79 = arith.constant 0 : index
      %c0_80 = arith.constant 0 : index
      %126 = vector.load %arg25[%c0_79, %c0_80] : memref<2x16xf32, #tpu.memory_space<vmem>>, vector<2x16xf32>
      tpu.vector_store %arg25[%c0_79, %c0_80], %121 {strides = array<i32>} : memref<2x16xf32, #tpu.memory_space<vmem>>, vector<2x16xf32>,
      %c0_81 = arith.constant 0 : index
      %c0_82 = arith.constant 0 : index
      %127 = vector.load %arg26[%c0_81, %c0_82] : memref<2x16xf32, #tpu.memory_space<vmem>>, vector<2x16xf32>
      tpu.vector_store %arg26[%c0_81, %c0_82], %122 {strides = array<i32>} : memref<2x16xf32, #tpu.memory_space<vmem>>, vector<2x16xf32>,
      %c0_83 = arith.constant 0 : index
      %c0_84 = arith.constant 0 : index
      %128 = vector.load %arg3[%c0_83, %c0_84] : memref<2x16xf32, #tpu.memory_space<vmem>>, vector<2x16xf32>
      %129 = arith.mulf %125, %128 : vector<2x16xf32>
      %130 = arith.addf %121, %129 : vector<2x16xf32>
      %c0_85 = arith.constant 0 : index
      %c0_86 = arith.constant 0 : index
      %131 = vector.load %arg28[%c0_85, %c0_86] : memref<2x16xf32, #tpu.memory_space<vmem>>, vector<2x16xf32>
      tpu.vector_store %arg28[%c0_85, %c0_86], %130 {strides = array<i32>} : memref<2x16xf32, #tpu.memory_space<vmem>>, vector<2x16xf32>,
    } else {
    }
    %c0 = arith.constant 0 : index
    %c0_1 = arith.constant 0 : index
    %3 = vector.load %arg28[%c0, %c0_1] : memref<2x16xf32, #tpu.memory_space<vmem>>, vector<2x16xf32>
    %4 = tpu.iota {dimensions = array<i32: 1>} : vector<2x16xi32>
    %c1_i32 = arith.constant 1 : i32
    %5 = vector.broadcast %c1_i32 : i32 to vector<2x16xi32>
    %6 = arith.andi %4, %5 : vector<2x16xi32>
    %c1_i32_2 = arith.constant 1 : i32
    %7 = arith.andi %arg0, %c1_i32_2 : i32
    %8 = vector.broadcast %7 : i32 to vector<2x16xi32>
    %9 = arith.cmpi eq, %6, %8 : vector<2x16xi32>
    %10 = arith.extui %9 : vector<2x16xi1> to vector<2x16xi32>
    %11 = arith.sitofp %10 : vector<2x16xi32> to vector<2x16xf32>
    %12 = arith.mulf %3, %11 : vector<2x16xf32>
    %13 = arith.truncf %12 : vector<2x16xf32> to vector<2x16xbf16>
    %c0_3 = arith.constant 0 : index
    %c0_4 = arith.constant 0 : index
    %c0_5 = arith.constant 0 : index
    %14 = vector.load %arg13[%c0_3, %c0_4, %c0_5] : memref<1x16x1024xbf16, #tpu.memory_space<vmem>>, vector<1x16x1024xbf16>
    %15 = vector.shape_cast %14 : vector<1x16x1024xbf16> to vector<16x1024xbf16>
    %cst = arith.constant dense<0.000000e+00> : vector<2x1024xf32>
    %16 = tpu.matmul %13, %15, %cst {dimension_numbers = #tpu.dot_dimension_numbers<[1], [0], [0], [1], [0, 0, 1, 1], [], []>} : vector<2x16xbf16>, vector<16x1024xbf16>, vector<2x1024xf32> -> vector<2x1024xf32>
    %c0_6 = arith.constant 0 : index
    %c0_7 = arith.constant 0 : index
    %c0_8 = arith.constant 0 : index
    %17 = vector.load %arg14[%c0_6, %c0_7, %c0_8] : memref<1x1x1024xf32, #tpu.memory_space<vmem>>, vector<1x1x1024xf32>
    %18 = vector.shape_cast %17 : vector<1x1x1024xf32> to vector<1x1024xf32>
    %19 = vector.broadcast %18 : vector<1x1024xf32> to vector<2x1024xf32>
    %20 = arith.addf %16, %19 : vector<2x1024xf32>
    %cst_9 = arith.constant 0.000000e+00 : f32
    %21 = vector.broadcast %cst_9 : f32 to vector<2x1024xf32>
    %22 = arith.maximumf %20, %21 : vector<2x1024xf32>
    %23 = vector.extract_strided_slice %22 {offsets = [0, 0], sizes = [2, 512], strides = [1, 1]} : vector<2x1024xf32> to vector<2x512xf32>
    %24 = vector.extract_strided_slice %22 {offsets = [0, 512], sizes = [2, 512], strides = [1, 1]} : vector<2x1024xf32> to vector<2x512xf32>
    %25 = arith.truncf %23 : vector<2x512xf32> to vector<2x512xbf16>
    %c0_10 = arith.constant 0 : index
    %c0_11 = arith.constant 0 : index
    %c0_12 = arith.constant 0 : index
    %26 = vector.load %arg15[%c0_10, %c0_11, %c0_12] : memref<1x512x512xbf16, #tpu.memory_space<vmem>>, vector<1x512x512xbf16>
    %27 = vector.shape_cast %26 : vector<1x512x512xbf16> to vector<512x512xbf16>
    %cst_13 = arith.constant dense<0.000000e+00> : vector<2x512xf32>
    %28 = tpu.matmul %25, %27, %cst_13 {dimension_numbers = #tpu.dot_dimension_numbers<[1], [0], [0], [1], [0, 0, 1, 1], [], []>} : vector<2x512xbf16>, vector<512x512xbf16>, vector<2x512xf32> -> vector<2x512xf32>
    %c0_14 = arith.constant 0 : index
    %c0_15 = arith.constant 0 : index
    %c0_16 = arith.constant 0 : index
    %29 = vector.load %arg16[%c0_14, %c0_15, %c0_16] : memref<1x1x512xf32, #tpu.memory_space<vmem>>, vector<1x1x512xf32>
    %30 = vector.shape_cast %29 : vector<1x1x512xf32> to vector<1x512xf32>
    %31 = vector.broadcast %30 : vector<1x512xf32> to vector<2x512xf32>
    %32 = arith.addf %28, %31 : vector<2x512xf32>
    %cst_17 = arith.constant 0.000000e+00 : f32
    %33 = vector.broadcast %cst_17 : f32 to vector<2x512xf32>
    %34 = arith.maximumf %32, %33 : vector<2x512xf32>
    %35 = arith.truncf %24 : vector<2x512xf32> to vector<2x512xbf16>
    %c0_18 = arith.constant 0 : index
    %c0_19 = arith.constant 0 : index
    %c0_20 = arith.constant 0 : index
    %36 = vector.load %arg17[%c0_18, %c0_19, %c0_20] : memref<1x512x512xbf16, #tpu.memory_space<vmem>>, vector<1x512x512xbf16>
    %37 = vector.shape_cast %36 : vector<1x512x512xbf16> to vector<512x512xbf16>
    %cst_21 = arith.constant dense<0.000000e+00> : vector<2x512xf32>
    %38 = tpu.matmul %35, %37, %cst_21 {dimension_numbers = #tpu.dot_dimension_numbers<[1], [0], [0], [1], [0, 0, 1, 1], [], []>} : vector<2x512xbf16>, vector<512x512xbf16>, vector<2x512xf32> -> vector<2x512xf32>
    %c0_22 = arith.constant 0 : index
    %c0_23 = arith.constant 0 : index
    %c0_24 = arith.constant 0 : index
    %39 = vector.load %arg18[%c0_22, %c0_23, %c0_24] : memref<1x1x512xf32, #tpu.memory_space<vmem>>, vector<1x1x512xf32>
    %40 = vector.shape_cast %39 : vector<1x1x512xf32> to vector<1x512xf32>
    %41 = vector.broadcast %40 : vector<1x512xf32> to vector<2x512xf32>
    %42 = arith.addf %38, %41 : vector<2x512xf32>
    %cst_25 = arith.constant 0.000000e+00 : f32
    %43 = vector.broadcast %cst_25 : f32 to vector<2x512xf32>
    %44 = arith.maximumf %42, %43 : vector<2x512xf32>
    %45 = arith.truncf %34 : vector<2x512xf32> to vector<2x512xbf16>
    %c0_26 = arith.constant 0 : index
    %c0_27 = arith.constant 0 : index
    %c0_28 = arith.constant 0 : index
    %46 = vector.load %arg19[%c0_26, %c0_27, %c0_28] : memref<1x512x16xbf16, #tpu.memory_space<vmem>>, vector<1x512x16xbf16>
    %47 = vector.shape_cast %46 : vector<1x512x16xbf16> to vector<512x16xbf16>
    %cst_29 = arith.constant dense<0.000000e+00> : vector<2x16xf32>
    %48 = tpu.matmul %45, %47, %cst_29 {dimension_numbers = #tpu.dot_dimension_numbers<[1], [0], [0], [1], [0, 0, 1, 1], [], []>} : vector<2x512xbf16>, vector<512x16xbf16>, vector<2x16xf32> -> vector<2x16xf32>
    %c0_30 = arith.constant 0 : index
    %c0_31 = arith.constant 0 : index
    %c0_32 = arith.constant 0 : index
    %49 = vector.load %arg20[%c0_30, %c0_31, %c0_32] : memref<1x1x16xf32, #tpu.memory_space<vmem>>, vector<1x1x16xf32>
    %50 = vector.shape_cast %49 : vector<1x1x16xf32> to vector<1x16xf32>
    %51 = vector.broadcast %50 : vector<1x16xf32> to vector<2x16xf32>
    %52 = arith.addf %48, %51 : vector<2x16xf32>
    %53 = math.tanh %52 : vector<2x16xf32>
    %54 = arith.truncf %44 : vector<2x512xf32> to vector<2x512xbf16>
    %c0_33 = arith.constant 0 : index
    %c0_34 = arith.constant 0 : index
    %c0_35 = arith.constant 0 : index
    %55 = vector.load %arg21[%c0_33, %c0_34, %c0_35] : memref<1x512x16xbf16, #tpu.memory_space<vmem>>, vector<1x512x16xbf16>
    %56 = vector.shape_cast %55 : vector<1x512x16xbf16> to vector<512x16xbf16>
    %cst_36 = arith.constant dense<0.000000e+00> : vector<2x16xf32>
    %57 = tpu.matmul %54, %56, %cst_36 {dimension_numbers = #tpu.dot_dimension_numbers<[1], [0], [0], [1], [0, 0, 1, 1], [], []>} : vector<2x512xbf16>, vector<512x16xbf16>, vector<2x16xf32> -> vector<2x16xf32>
    %c0_37 = arith.constant 0 : index
    %c0_38 = arith.constant 0 : index
    %c0_39 = arith.constant 0 : index
    %58 = vector.load %arg22[%c0_37, %c0_38, %c0_39] : memref<1x1x16xf32, #tpu.memory_space<vmem>>, vector<1x1x16xf32>
    %59 = vector.shape_cast %58 : vector<1x1x16xf32> to vector<1x16xf32>
    %60 = vector.broadcast %59 : vector<1x16xf32> to vector<2x16xf32>
    %61 = arith.addf %57, %60 : vector<2x16xf32>
    %cst_40 = arith.constant 1.000000e+00 : f32
    %62 = vector.broadcast %cst_40 : f32 to vector<2x16xf32>
    %63 = arith.subf %62, %11 : vector<2x16xf32>
    %64 = math.exp %53 : vector<2x16xf32>
    %65 = arith.mulf %3, %64 : vector<2x16xf32>
    %66 = arith.addf %65, %61 : vector<2x16xf32>
    %67 = arith.mulf %63, %66 : vector<2x16xf32>
    %68 = arith.addf %12, %67 : vector<2x16xf32>
    %c0_41 = arith.constant 0 : index
    %c0_42 = arith.constant 0 : index
    %69 = vector.load %arg28[%c0_41, %c0_42] : memref<2x16xf32, #tpu.memory_space<vmem>>, vector<2x16xf32>
    tpu.vector_store %arg28[%c0_41, %c0_42], %68 {strides = array<i32>} : memref<2x16xf32, #tpu.memory_space<vmem>>, vector<2x16xf32>,
    %c3_i32 = arith.constant 3 : i32
    %70 = arith.cmpi eq, %arg0, %c3_i32 : i32
    %71 = arith.extui %70 : i1 to i32
    %c0_i32_43 = arith.constant 0 : i32
    %72 = arith.cmpi ne, %71, %c0_i32_43 : i32
    scf.if %72 {
      %cst_44 = arith.constant 5.000000e-02 : f32
      %73 = vector.broadcast %cst_44 : f32 to vector<2x16xf32>
      %74 = arith.mulf %73, %68 : vector<2x16xf32>
      %75 = arith.truncf %74 : vector<2x16xf32> to vector<2x16xbf16>
      %c0_45 = arith.constant 0 : index
      %c0_46 = arith.constant 0 : index
      %76 = vector.load %arg23[%c0_45, %c0_46] : memref<16x1536xbf16, #tpu.memory_space<vmem>>, vector<16x1536xbf16>
      %cst_47 = arith.constant dense<0.000000e+00> : vector<2x1536xf32>
      %77 = tpu.matmul %75, %76, %cst_47 {dimension_numbers = #tpu.dot_dimension_numbers<[1], [0], [0], [1], [0, 0, 1, 1], [], []>} : vector<2x16xbf16>, vector<16x1536xbf16>, vector<2x1536xf32> -> vector<2x1536xf32>
      %c0_48 = arith.constant 0 : index
      %c0_49 = arith.constant 0 : index
      %78 = vector.load %arg24[%c0_48, %c0_49] : memref<1x1536xf32, #tpu.memory_space<vmem>>, vector<1x1536xf32>
      %79 = vector.broadcast %78 : vector<1x1536xf32> to vector<2x1536xf32>
      %80 = arith.addf %77, %79 : vector<2x1536xf32>
      %c0_50 = arith.constant 0 : index
      %c0_51 = arith.constant 0 : index
      %81 = vector.load %arg27[%c0_50, %c0_51] : memref<2x1536xf32, #tpu.memory_space<vmem>>, vector<2x1536xf32>
      tpu.vector_store %arg27[%c0_50, %c0_51], %80 {strides = array<i32>} : memref<2x1536xf32, #tpu.memory_space<vmem>>, vector<2x1536xf32>,
    } else {
    }
    return
  }
  func.func @transform_0(%arg0: i32) -> (i32, i32) {
    %c0_i32 = arith.constant 0 : i32
    %c0_i32_0 = arith.constant 0 : i32
    %c0_i32_1 = arith.constant 0 : i32
    return %c0_i32, %c0_i32_0 : i32, i32
  }
  func.func @transform_1(%arg0: i32) -> (i32, i32) {
    %c0_i32 = arith.constant 0 : i32
    %c0_i32_0 = arith.constant 0 : i32
    %c0_i32_1 = arith.constant 0 : i32
    return %c0_i32, %c0_i32_0 : i32, i32
  }
  func.func @transform_2(%arg0: i32) -> (i32, i32) {
    %c0_i32 = arith.constant 0 : i32
    %c0_i32_0 = arith.constant 0 : i32
    %c0_i32_1 = arith.constant 0 : i32
    return %c0_i32, %c0_i32_0 : i32, i32
  }
  func.func @transform_3(%arg0: i32) -> (i32, i32) {
    %c0_i32 = arith.constant 0 : i32
    %c0_i32_0 = arith.constant 0 : i32
    %c0_i32_1 = arith.constant 0 : i32
    return %c0_i32, %c0_i32_0 : i32, i32
  }
  func.func @transform_4(%arg0: i32) -> (i32, i32) {
    %c0_i32 = arith.constant 0 : i32
    %c0_i32_0 = arith.constant 0 : i32
    %c0_i32_1 = arith.constant 0 : i32
    return %c0_i32, %c0_i32_0 : i32, i32
  }
  func.func @transform_5(%arg0: i32) -> (i32, i32) {
    %c0_i32 = arith.constant 0 : i32
    %c0_i32_0 = arith.constant 0 : i32
    %c0_i32_1 = arith.constant 0 : i32
    return %c0_i32, %c0_i32_0 : i32, i32
  }
  func.func @transform_6(%arg0: i32) -> (i32, i32) {
    %c0_i32 = arith.constant 0 : i32
    %c0_i32_0 = arith.constant 0 : i32
    %c0_i32_1 = arith.constant 0 : i32
    return %c0_i32, %c0_i32_0 : i32, i32
  }
  func.func @transform_7(%arg0: i32) -> (i32, i32) {
    %c0_i32 = arith.constant 0 : i32
    %c0_i32_0 = arith.constant 0 : i32
    %c0_i32_1 = arith.constant 0 : i32
    return %c0_i32, %c0_i32_0 : i32, i32
  }
  func.func @transform_8(%arg0: i32) -> (i32, i32) {
    %c0_i32 = arith.constant 0 : i32
    %c0_i32_0 = arith.constant 0 : i32
    %c0_i32_1 = arith.constant 0 : i32
    return %c0_i32, %c0_i32_0 : i32, i32
  }
  func.func @transform_9(%arg0: i32) -> (i32, i32) {
    %c0_i32 = arith.constant 0 : i32
    %c0_i32_0 = arith.constant 0 : i32
    %c0_i32_1 = arith.constant 0 : i32
    return %c0_i32, %c0_i32_0 : i32, i32
  }
  func.func @transform_10(%arg0: i32) -> (i32, i32) {
    %c0_i32 = arith.constant 0 : i32
    %c0_i32_0 = arith.constant 0 : i32
    %c0_i32_1 = arith.constant 0 : i32
    return %c0_i32, %c0_i32_0 : i32, i32
  }
  func.func @transform_11(%arg0: i32) -> (i32, i32) {
    %c0_i32 = arith.constant 0 : i32
    %c0_i32_0 = arith.constant 0 : i32
    %c0_i32_1 = arith.constant 0 : i32
    return %c0_i32, %c0_i32_0 : i32, i32
  }
  func.func @transform_12(%arg0: i32) -> (i32, i32, i32) {
    %c0_i32 = arith.constant 0 : i32
    %c0_i32_0 = arith.constant 0 : i32
    %c0_i32_1 = arith.constant 0 : i32
    return %arg0, %c0_i32, %c0_i32_0 : i32, i32, i32
  }
  func.func @transform_13(%arg0: i32) -> (i32, i32, i32) {
    %c0_i32 = arith.constant 0 : i32
    %c0_i32_0 = arith.constant 0 : i32
    %c0_i32_1 = arith.constant 0 : i32
    return %arg0, %c0_i32, %c0_i32_0 : i32, i32, i32
  }
  func.func @transform_14(%arg0: i32) -> (i32, i32, i32) {
    %c0_i32 = arith.constant 0 : i32
    %c0_i32_0 = arith.constant 0 : i32
    %c0_i32_1 = arith.constant 0 : i32
    return %arg0, %c0_i32, %c0_i32_0 : i32, i32, i32
  }
  func.func @transform_15(%arg0: i32) -> (i32, i32, i32) {
    %c0_i32 = arith.constant 0 : i32
    %c0_i32_0 = arith.constant 0 : i32
    %c0_i32_1 = arith.constant 0 : i32
    return %arg0, %c0_i32, %c0_i32_0 : i32, i32, i32
  }
  func.func @transform_16(%arg0: i32) -> (i32, i32, i32) {
    %c0_i32 = arith.constant 0 : i32
    %c0_i32_0 = arith.constant 0 : i32
    %c0_i32_1 = arith.constant 0 : i32
    return %arg0, %c0_i32, %c0_i32_0 : i32, i32, i32
  }
  func.func @transform_17(%arg0: i32) -> (i32, i32, i32) {
    %c0_i32 = arith.constant 0 : i32
    %c0_i32_0 = arith.constant 0 : i32
    %c0_i32_1 = arith.constant 0 : i32
    return %arg0, %c0_i32, %c0_i32_0 : i32, i32, i32
  }
  func.func @transform_18(%arg0: i32) -> (i32, i32, i32) {
    %c0_i32 = arith.constant 0 : i32
    %c0_i32_0 = arith.constant 0 : i32
    %c0_i32_1 = arith.constant 0 : i32
    return %arg0, %c0_i32, %c0_i32_0 : i32, i32, i32
  }
  func.func @transform_19(%arg0: i32) -> (i32, i32, i32) {
    %c0_i32 = arith.constant 0 : i32
    %c0_i32_0 = arith.constant 0 : i32
    %c0_i32_1 = arith.constant 0 : i32
    return %arg0, %c0_i32, %c0_i32_0 : i32, i32, i32
  }
  func.func @transform_20(%arg0: i32) -> (i32, i32, i32) {
    %c0_i32 = arith.constant 0 : i32
    %c0_i32_0 = arith.constant 0 : i32
    %c0_i32_1 = arith.constant 0 : i32
    return %arg0, %c0_i32, %c0_i32_0 : i32, i32, i32
  }
  func.func @transform_21(%arg0: i32) -> (i32, i32, i32) {
    %c0_i32 = arith.constant 0 : i32
    %c0_i32_0 = arith.constant 0 : i32
    %c0_i32_1 = arith.constant 0 : i32
    return %arg0, %c0_i32, %c0_i32_0 : i32, i32, i32
  }
  func.func @transform_22(%arg0: i32) -> (i32, i32) {
    %c0_i32 = arith.constant 0 : i32
    %c0_i32_0 = arith.constant 0 : i32
    %c0_i32_1 = arith.constant 0 : i32
    return %c0_i32, %c0_i32_0 : i32, i32
  }
  func.func @transform_23(%arg0: i32) -> (i32, i32) {
    %c0_i32 = arith.constant 0 : i32
    %c0_i32_0 = arith.constant 0 : i32
    %c0_i32_1 = arith.constant 0 : i32
    return %c0_i32, %c0_i32_0 : i32, i32
  }
  func.func @transform_24(%arg0: i32) -> (i32, i32) {
    %c0_i32 = arith.constant 0 : i32
    %c0_i32_0 = arith.constant 0 : i32
    %c0_i32_1 = arith.constant 0 : i32
    return %c0_i32, %c0_i32_0 : i32, i32
  }
  func.func @transform_25(%arg0: i32) -> (i32, i32) {
    %c0_i32 = arith.constant 0 : i32
    %c0_i32_0 = arith.constant 0 : i32
    %c0_i32_1 = arith.constant 0 : i32
    return %c0_i32, %c0_i32_0 : i32, i32
  }
  func.func @transform_26(%arg0: i32) -> (i32, i32) {
    %c0_i32 = arith.constant 0 : i32
    %c0_i32_0 = arith.constant 0 : i32
    %c0_i32_1 = arith.constant 0 : i32
    return %c0_i32, %c0_i32_0 : i32, i32
  }
}

module attributes {stable_mosaic.version = 11 : i64} {
  func.func @_linear_kernel(%arg0: i32, %arg1: memref<96x32xf32, #tpu.memory_space<vmem>>, %arg2: memref<32x64xf32, #tpu.memory_space<vmem>>, %arg3: memref<1x64xf32, #tpu.memory_space<vmem>>, %arg4: memref<96x64xf32, #tpu.memory_space<vmem>>) attributes {dimension_semantics = [#tpu.dimension_semantics<arbitrary>], iteration_bounds = array<i64: 1>, scalar_prefetch = 0 : i64, scratch_operands = 0 : i64, tpu.core_type = #tpu.core_type<tc>, window_params = [{pipeline_mode = #tpu.pipeline_mode<synchronous>, transform_indices = @transform_0, window_bounds = array<i64: 96, 32>}, {pipeline_mode = #tpu.pipeline_mode<synchronous>, transform_indices = @transform_1, window_bounds = array<i64: 32, 64>}, {pipeline_mode = #tpu.pipeline_mode<synchronous>, transform_indices = @transform_2, window_bounds = array<i64: 1, 64>}, {pipeline_mode = #tpu.pipeline_mode<synchronous>, transform_indices = @transform_3, window_bounds = array<i64: 96, 64>}]} {
    %c0 = arith.constant 0 : index
    %c0_0 = arith.constant 0 : index
    %0 = vector.load %arg1[%c0, %c0_0] : memref<96x32xf32, #tpu.memory_space<vmem>>, vector<96x32xf32>
    %c0_1 = arith.constant 0 : index
    %c0_2 = arith.constant 0 : index
    %1 = vector.load %arg2[%c0_1, %c0_2] : memref<32x64xf32, #tpu.memory_space<vmem>>, vector<32x64xf32>
    %cst = arith.constant dense<0.000000e+00> : vector<96x64xf32>
    %2 = tpu.matmul %0, %1, %cst {dimension_numbers = #tpu.dot_dimension_numbers<[1], [0], [0], [1], [0, 0, 1, 1], [], []>} : vector<96x32xf32>, vector<32x64xf32>, vector<96x64xf32> -> vector<96x64xf32>
    %c0_3 = arith.constant 0 : index
    %c0_4 = arith.constant 0 : index
    %3 = vector.load %arg3[%c0_3, %c0_4] : memref<1x64xf32, #tpu.memory_space<vmem>>, vector<1x64xf32>
    %4 = vector.broadcast %3 : vector<1x64xf32> to vector<96x64xf32>
    %5 = arith.addf %2, %4 : vector<96x64xf32>
    %c0_5 = arith.constant 0 : index
    %c0_6 = arith.constant 0 : index
    %6 = vector.load %arg4[%c0_5, %c0_6] : memref<96x64xf32, #tpu.memory_space<vmem>>, vector<96x64xf32>
    tpu.vector_store %arg4[%c0_5, %c0_6], %5 {strides = array<i32>} : memref<96x64xf32, #tpu.memory_space<vmem>>, vector<96x64xf32>,
    return
  }
  func.func @transform_0(%arg0: i32) -> (i32, i32) {
    %c0_i32 = arith.constant 0 : i32
    %c0_i32_0 = arith.constant 0 : i32
    %c0_i32_1 = arith.constant 0 : i32
    return %c0_i32, %c0_i32_0 : i32, i32
  }
  func.func @transform_1(%arg0: i32) -> (i32, i32) {
    %c0_i32 = arith.constant 0 : i32
    %c0_i32_0 = arith.constant 0 : i32
    %c0_i32_1 = arith.constant 0 : i32
    return %c0_i32, %c0_i32_0 : i32, i32
  }
  func.func @transform_2(%arg0: i32) -> (i32, i32) {
    %c0_i32 = arith.constant 0 : i32
    %c0_i32_0 = arith.constant 0 : i32
    %c0_i32_1 = arith.constant 0 : i32
    return %c0_i32, %c0_i32_0 : i32, i32
  }
  func.func @transform_3(%arg0: i32) -> (i32, i32) {
    %c0_i32 = arith.constant 0 : i32
    %c0_i32_0 = arith.constant 0 : i32
    %c0_i32_1 = arith.constant 0 : i32
    return %c0_i32, %c0_i32_0 : i32, i32
  }
}

module attributes {stable_mosaic.version = 11 : i64} {
  func.func @_linear_kernel(%arg0: i32, %arg1: memref<4x42xf32, #tpu.memory_space<vmem>>, %arg2: memref<42x3xf32, #tpu.memory_space<vmem>>, %arg3: memref<1x3xf32, #tpu.memory_space<vmem>>, %arg4: memref<4x3xf32, #tpu.memory_space<vmem>>) attributes {dimension_semantics = [#tpu.dimension_semantics<arbitrary>], iteration_bounds = array<i64: 1>, scalar_prefetch = 0 : i64, scratch_operands = 0 : i64, tpu.core_type = #tpu.core_type<tc>, window_params = [{pipeline_mode = #tpu.pipeline_mode<synchronous>, transform_indices = @transform_0, window_bounds = array<i64: 4, 42>}, {pipeline_mode = #tpu.pipeline_mode<synchronous>, transform_indices = @transform_1, window_bounds = array<i64: 42, 3>}, {pipeline_mode = #tpu.pipeline_mode<synchronous>, transform_indices = @transform_2, window_bounds = array<i64: 1, 3>}, {pipeline_mode = #tpu.pipeline_mode<synchronous>, transform_indices = @transform_3, window_bounds = array<i64: 4, 3>}]} {
    %c0 = arith.constant 0 : index
    %c0_0 = arith.constant 0 : index
    %0 = vector.load %arg1[%c0, %c0_0] : memref<4x42xf32, #tpu.memory_space<vmem>>, vector<4x42xf32>
    %c0_1 = arith.constant 0 : index
    %c0_2 = arith.constant 0 : index
    %1 = vector.load %arg2[%c0_1, %c0_2] : memref<42x3xf32, #tpu.memory_space<vmem>>, vector<42x3xf32>
    %cst = arith.constant dense<0.000000e+00> : vector<4x3xf32>
    %2 = tpu.matmul %0, %1, %cst {dimension_numbers = #tpu.dot_dimension_numbers<[1], [0], [0], [1], [0, 0, 1, 1], [], []>} : vector<4x42xf32>, vector<42x3xf32>, vector<4x3xf32> -> vector<4x3xf32>
    %c0_3 = arith.constant 0 : index
    %c0_4 = arith.constant 0 : index
    %3 = vector.load %arg3[%c0_3, %c0_4] : memref<1x3xf32, #tpu.memory_space<vmem>>, vector<1x3xf32>
    %4 = vector.broadcast %3 : vector<1x3xf32> to vector<4x3xf32>
    %5 = arith.addf %2, %4 : vector<4x3xf32>
    %cst_5 = arith.constant 0.000000e+00 : f32
    %6 = vector.broadcast %cst_5 : f32 to vector<4x3xf32>
    %7 = arith.subf %6, %5 : vector<4x3xf32>
    %8 = math.exp %7 : vector<4x3xf32>
    %cst_6 = arith.constant 1.000000e+00 : f32
    %9 = vector.broadcast %cst_6 : f32 to vector<4x3xf32>
    %10 = arith.addf %9, %8 : vector<4x3xf32>
    %11 = tpu.reciprocal %10 {approx = true} : vector<4x3xf32> -> vector<4x3xf32>
    %c0_7 = arith.constant 0 : index
    %c0_8 = arith.constant 0 : index
    %12 = vector.load %arg4[%c0_7, %c0_8] : memref<4x3xf32, #tpu.memory_space<vmem>>, vector<4x3xf32>
    tpu.vector_store %arg4[%c0_7, %c0_8], %11 {strides = array<i32>} : memref<4x3xf32, #tpu.memory_space<vmem>>, vector<4x3xf32>,
    return
  }
  func.func @transform_0(%arg0: i32) -> (i32, i32) {
    %c0_i32 = arith.constant 0 : i32
    %c0_i32_0 = arith.constant 0 : i32
    %c0_i32_1 = arith.constant 0 : i32
    return %c0_i32, %c0_i32_0 : i32, i32
  }
  func.func @transform_1(%arg0: i32) -> (i32, i32) {
    %c0_i32 = arith.constant 0 : i32
    %c0_i32_0 = arith.constant 0 : i32
    %c0_i32_1 = arith.constant 0 : i32
    return %c0_i32, %c0_i32_0 : i32, i32
  }
  func.func @transform_2(%arg0: i32) -> (i32, i32) {
    %c0_i32 = arith.constant 0 : i32
    %c0_i32_0 = arith.constant 0 : i32
    %c0_i32_1 = arith.constant 0 : i32
    return %c0_i32, %c0_i32_0 : i32, i32
  }
  func.func @transform_3(%arg0: i32) -> (i32, i32) {
    %c0_i32 = arith.constant 0 : i32
    %c0_i32_0 = arith.constant 0 : i32
    %c0_i32_1 = arith.constant 0 : i32
    return %c0_i32, %c0_i32_0 : i32, i32
  }
}

</mosaic_0001>

<llo_original>
// kernel: tile.8
$region0: #{tile.8}
  #allocation0 [shape = 's32[1]{0}', space=sflag, size = 0x4, scoped, tag = 'scoped memory for tile.8']
  %s0 = inlined_call_operand.vmem [shape: f32[16], index: 0, kind: input, shape index: {}]
  %s1 = inlined_call_operand.vmem [shape: f32[4,16], index: 1, kind: output, shape index: {}]
  // Predicated region
  $region2: #{tile.8} parent=0 // pred_check
    _
  $region3: #{tile.8} parent=0 // pred_check_branch
    %3 = sbr.rel (0) target = $region5
  $region4: #{tile.8} parent=0 // pred_region
    _
  $region5: #{tile.8} parent=0 // pred_fallthru
    _
  %v4 = vld [vmem:[%s0] ss:$0 sm:$0xff]
  %5 = vst [vmem:[%s1] sm:$0xf] %v4

// kernel: tile.9
$region0: #{tile.9}
  %s0 = inlined_call_operand.vmem [shape: f32[4,16], index: 0, kind: input, shape index: {}]
  %s1 = inlined_call_operand.vmem [shape: f32[1,64], index: 1, kind: output, shape index: {}]
  $region1: #{tile.9} parent=0
    #allocation0 [shape = 'u8[4096]{0}', space=vmem, size = 0x1000, scoped, tag = 'scoped mem for output reshape']
    #allocation1 [shape = 'u8[4096]{0}', space=vmem, size = 0x1000, scoped, tag = 'scoped mem for input reshape']
    %s3 = sshllo.u32 0, 4
    %v4 = vld [vmem:[%s0] sm:%s3]
    %5 = vst [vmem:[#allocation1] sm:%s3] %v4
    %v6 = vld [vmem:[#allocation1] sm:$0x1]
    %vm7 = vcmask 130048
    %8 = vst.msk [vmem:[#allocation0] sm:$0x1] %vm7, %v6
    %s9 = scalar_lea.vmem [#allocation1], 3
    %v10 = vld [vmem:[%s9] sm:$0x1]
    %11 = vrot.lane.b32.xlu0 %v10, 48
    %v12 = vpop.permute.xlu0 %11
    %vm13 = vcmask 523648
    %14 = vst.msk [vmem:[#allocation0] sm:$0x1] %vm13, %v12
    %s15 = scalar_lea.vmem [#allocation1], 2
    %v16 = vld [vmem:[%s15] sm:$0x1]
    %17 = vrot.lane.b32.xlu0 %v16, 32
    %v18 = vpop.permute.xlu0 %17
    %vm19 = vcmask 392448
    %20 = vst.msk [vmem:[#allocation0] sm:$0x1] %vm19, %v18
    %s21 = scalar_lea.vmem [#allocation1], 1
    %v22 = vld [vmem:[%s21] sm:$0x1]
    %23 = vrot.lane.b32.xlu0 %v22, 16
    %v24 = vpop.permute.xlu0 %23
    %vm25 = vcmask 261248
    %26 = vst.msk [vmem:[#allocation0] sm:$0x1] %vm25, %v24
    %s28 = sshllo.u32 0, 1
    %v30 = vld [vmem:[#allocation0] sm:%s28]
    %s31 = sshllo.u32 0, 1
    %32 = vst [vmem:[%s1] sm:%s31] %v30

// kernel: forward.4
$region0: #{forward.4}
  #allocation0 [shape = 'u32[]', space=smem, size = 0x4, offset = 0x4, fixed_abs, tag = 'smem constant byte address 0x4 - core index']
  #allocation1 [shape = 'u32[144,128]{1,0:T(1,128)}', space=vmem, size = 0x12000, scoped, tag = 'internal scratch']
  %s0 = inlined_call_operand.vmem [shape: f32[96,32], index: 0, kind: input, shape index: {}]
  %s1 = inlined_call_operand.vmem [shape: f32[32,64], index: 1, kind: input, shape index: {}]
  %s2 = inlined_call_operand.vmem [shape: f32[1,64], index: 2, kind: input, shape index: {}]
  %s3 = inlined_call_operand.vmem [shape: f32[96,64], index: 3, kind: output, shape index: {}]
  %s4 = sld [smem:[#allocation0]]
  $region22: #{forward.4} parent=0
    _
  %s6 = ssub.s32 1, %s4
  %s7 = scalar_select 0, %s6, %s4
  // Predicated region
  $region2: #{forward.4} parent=0 // pred_check
    _
  $region3: #{forward.4} parent=0 // pred_check_branch
    %9 = sbr.rel (0) target = $region5
  $region4: #{forward.4} parent=0 // pred_region
    _
  $region5: #{forward.4} parent=0 // pred_fallthru
    _
  // Predicated region
  $region6: #{forward.4} parent=0 // pred_check
    _
  $region7: #{forward.4} parent=0 // pred_check_branch
    %11 = sbr.rel (0) target = $region9
  $region8: #{forward.4} parent=0 // pred_region
    _
  $region9: #{forward.4} parent=0 // pred_fallthru
    _
  // Predicated region
  $region10: #{forward.4} parent=0 // pred_check
    _
  $region11: #{forward.4} parent=0 // pred_check_branch
    %13 = sbr.rel (0) target = $region13
  $region12: #{forward.4} parent=0 // pred_region
    _
  $region13: #{forward.4} parent=0 // pred_fallthru
    _
  %v14 = vld [vmem:[%s0] sm:$0xff]
  %v15 = vld [vmem:[%s0 + $0x8] sm:$0xff]
  %v16 = vld [vmem:[%s0 + $0x10] sm:$0xff]
  %v17 = vld [vmem:[%s0 + $0x18] sm:$0xff]
  %v18 = vld [vmem:[%s0 + $0x20] sm:$0xff]
  %v19 = vld [vmem:[%s0 + $0x28] sm:$0xff]
  %v20 = vld [vmem:[%s0 + $0x30] sm:$0xff]
  %v21 = vld [vmem:[%s0 + $0x38] sm:$0xff]
  %v22 = vld [vmem:[%s0 + $0x40] sm:$0xff]
  %v23 = vld [vmem:[%s0 + $0x48] sm:$0xff]
  %v24 = vld [vmem:[%s0 + $0x50] sm:$0xff]
  %v25 = vld [vmem:[%s0 + $0x58] sm:$0xff]
  %v26 = vld [vmem:[%s1] sm:$0xff]
  %v27 = vld [vmem:[%s1 + $0x8] sm:$0xff]
  %v28 = vld [vmem:[%s1 + $0x10] sm:$0xff]
  %v29 = vld [vmem:[%s1 + $0x18] sm:$0xff]
  %v30 = vld [vmem:[%s2] sm:$0x1]
  %v32 = vlaneseq
  %v33 = vshrl.u32 %v32, 7
  %v34 = vsub.s32 0, %v33
  %v35 = vrot.slane %v30, %v34
  %vm37 = vcmask 261120
  %v39 = vsel %vm37, %v14, 0
  %v42 = vsel %vm37, %v15, 0
  %v45 = vsel %vm37, %v16, 0
  %v48 = vsel %vm37, %v17, 0
  %v51 = vsel %vm37, %v18, 0
  %v54 = vsel %vm37, %v19, 0
  %v57 = vsel %vm37, %v20, 0
  %v60 = vsel %vm37, %v21, 0
  %v63 = vsel %vm37, %v22, 0
  %v66 = vsel %vm37, %v23, 0
  %v69 = vsel %vm37, %v24, 0
  %v72 = vsel %vm37, %v25, 0
  %74 = vmatprep.subr.mxu0 0.0
  %75 = vmatpush1.msra.mxu0 %v26
  %76 = vmatprep.subr.mxu0 0.0
  %77 = vmatpush1.msra.mxu0 %v27
  %78 = vmatprep.subr.mxu0 0.0
  %79 = vmatpush1.msra.mxu0 %v28
  %80 = vmatprep.subr.mxu0 0.0
  %81 = vmatpush1.msra.mxu0 %v29
  %82 = vmatprep.subr.mxu0 0.0
  %83 = vmatpush1.msra.mxu0 0.0
  %84 = vmatprep.subr.mxu0 0.0
  %85 = vmatpush1.msra.mxu0 0.0
  %86 = vmatprep.subr.mxu0 0.0
  %87 = vmatpush1.msra.mxu0 0.0
  %88 = vmatprep.subr.mxu0 0.0
  %89 = vmatpush1.msra.mxu0 0.0
  %90 = vmatprep.subr.mxu0 0.0
  %91 = vmatpush1.msra.mxu0 0.0
  %92 = vmatprep.subr.mxu0 0.0
  %93 = vmatpush1.msra.mxu0 0.0
  %94 = vmatprep.subr.mxu0 0.0
  %95 = vmatpush1.msra.mxu0 0.0
  %96 = vmatprep.subr.mxu0 0.0
  %97 = vmatpush1.msra.mxu0 0.0
  %98 = vmatprep.subr.mxu0 0.0
  %99 = vmatpush1.msra.mxu0 0.0
  %100 = vmatprep.subr.mxu0 0.0
  %101 = vmatpush1.msra.mxu0 0.0
  %102 = vmatprep.subr.mxu0 0.0
  %103 = vmatpush1.msra.mxu0 0.0
  %104 = vmatprep.subr.mxu0 0.0
  %105 = vmatpush1.msra.mxu0 0.0
  %106 = vmatprep.subr.mxu0 0.0
  %107 = vmatpush1.msra.mxu0 0.0
  %108 = vmatprep.subr.mxu0 0.0
  %109 = vmatpush1.msra.mxu0 0.0
  %110 = vmatprep.subr.mxu0 0.0
  %111 = vmatpush1.msra.mxu0 0.0
  %112 = vmatprep.subr.mxu0 0.0
  %113 = vmatpush1.msra.mxu0 0.0
  %114 = vmatprep.subr.mxu0 0.0
  %115 = vmatpush1.msra.mxu0 0.0
  %116 = vmatprep.subr.mxu0 0.0
  %117 = vmatpush1.msra.mxu0 0.0
  %118 = vmatprep.subr.mxu0 0.0
  %119 = vmatpush1.msra.mxu0 0.0
  %120 = vmatprep.subr.mxu0 0.0
  %121 = vmatpush1.msra.mxu0 0.0
  %122 = vmatprep.subr.mxu0 0.0
  %123 = vmatpush1.msra.mxu0 0.0
  %124 = vmatprep.subr.mxu0 0.0
  %125 = vmatpush1.msra.mxu0 0.0
  %126 = vmatprep.subr.mxu0 0.0
  %127 = vmatpush1.msra.mxu0 0.0
  %128 = vmatprep.subr.mxu0 0.0
  %129 = vmatpush1.msra.mxu0 0.0
  %130 = vmatprep.subr.mxu0 0.0
  %131 = vmatpush1.msra.mxu0 0.0
  %132 = vmatprep.subr.mxu0 0.0
  %133 = vmatpush1.msra.mxu0 0.0
  %134 = vmatprep.subr.mxu0 0.0
  %135 = vmatpush1.msra.mxu0 0.0
  %136 = vmatprep.subr.mxu0 0.0
  %137 = vmatpush1.msra.mxu0 0.0
  %138 = vmatprep.mubr.f32.mxu0 0.0
  %139 = vmatmul.mubr.f32.gmra.mrb[0].mxu0 %v39
  %v140 = vpop.f32.mrb[0].mxu0
  %v141 = vadd.f32 %v35, %v140
  %v142 = vpop.f32.mrb[0].mxu0
  %143 = vmatprep.mubr.f32.mxu0 0.0
  %144 = vmatmul.mubr.f32.gmra.mrb[0].mxu0 %v42
  %v145 = vpop.f32.mrb[0].mxu0
  %v146 = vadd.f32 %v35, %v145
  %v147 = vpop.f32.mrb[0].mxu0
  %148 = vmatprep.mubr.f32.mxu0 0.0
  %149 = vmatmul.mubr.f32.gmra.mrb[0].mxu0 %v45
  %v150 = vpop.f32.mrb[0].mxu0
  %v151 = vadd.f32 %v35, %v150
  %v152 = vpop.f32.mrb[0].mxu0
  %153 = vmatprep.mubr.f32.mxu0 0.0
  %154 = vmatmul.mubr.f32.gmra.mrb[0].mxu0 %v48
  %v155 = vpop.f32.mrb[0].mxu0
  %v156 = vadd.f32 %v35, %v155
  %v157 = vpop.f32.mrb[0].mxu0
  %158 = vmatprep.mubr.f32.mxu0 0.0
  %159 = vmatmul.mubr.f32.gmra.mrb[0].mxu0 %v51
  %v160 = vpop.f32.mrb[0].mxu0
  %v161 = vadd.f32 %v35, %v160
  %v162 = vpop.f32.mrb[0].mxu0
  %163 = vmatprep.mubr.f32.mxu0 0.0
  %164 = vmatmul.mubr.f32.gmra.mrb[0].mxu0 %v54
  %v165 = vpop.f32.mrb[0].mxu0
  %v166 = vadd.f32 %v35, %v165
  %v167 = vpop.f32.mrb[0].mxu0
  %168 = vmatprep.mubr.f32.mxu0 0.0
  %169 = vmatmul.mubr.f32.gmra.mrb[0].mxu0 %v57
  %v170 = vpop.f32.mrb[0].mxu0
  %v171 = vadd.f32 %v35, %v170
  %v172 = vpop.f32.mrb[0].mxu0
  %173 = vmatprep.mubr.f32.mxu0 0.0
  %174 = vmatmul.mubr.f32.gmra.mrb[0].mxu0 %v60
  %v175 = vpop.f32.mrb[0].mxu0
  %v176 = vadd.f32 %v35, %v175
  %v177 = vpop.f32.mrb[0].mxu0
  %178 = vmatprep.mubr.f32.mxu0 0.0
  %179 = vmatmul.mubr.f32.gmra.mrb[0].mxu0 %v63
  %v180 = vpop.f32.mrb[0].mxu0
  %v181 = vadd.f32 %v35, %v180
  %v182 = vpop.f32.mrb[0].mxu0
  %183 = vmatprep.mubr.f32.mxu0 0.0
  %184 = vmatmul.mubr.f32.gmra.mrb[0].mxu0 %v66
  %v185 = vpop.f32.mrb[0].mxu0
  %v186 = vadd.f32 %v35, %v185
  %v187 = vpop.f32.mrb[0].mxu0
  %188 = vmatprep.mubr.f32.mxu0 0.0
  %189 = vmatmul.mubr.f32.gmra.mrb[0].mxu0 %v69
  %v190 = vpop.f32.mrb[0].mxu0
  %v191 = vadd.f32 %v35, %v190
  %v192 = vpop.f32.mrb[0].mxu0
  %193 = vmatprep.mubr.f32.mxu0 0.0
  %194 = vmatmul.mubr.f32.gmra.mrb[0].mxu0 %v72
  %v195 = vpop.f32.mrb[0].mxu0
  %v196 = vadd.f32 %v35, %v195
  %v197 = vpop.f32.mrb[0].mxu0
  %198 = vdwg.mxu0
  %vm199 = vcmask 523264
  %200 = vst.msk [vmem:[%s3] sm:$0xff] %vm199, %v141
  %201 = vst.msk [vmem:[%s3 + $0x8] sm:$0xff] %vm199, %v146
  %202 = vst.msk [vmem:[%s3 + $0x10] sm:$0xff] %vm199, %v151
  %203 = vst.msk [vmem:[%s3 + $0x18] sm:$0xff] %vm199, %v156
  %204 = vst.msk [vmem:[%s3 + $0x20] sm:$0xff] %vm199, %v161
  %205 = vst.msk [vmem:[%s3 + $0x28] sm:$0xff] %vm199, %v166
  %206 = vst.msk [vmem:[%s3 + $0x30] sm:$0xff] %vm199, %v171
  %207 = vst.msk [vmem:[%s3 + $0x38] sm:$0xff] %vm199, %v176
  %208 = vst.msk [vmem:[%s3 + $0x40] sm:$0xff] %vm199, %v181
  %209 = vst.msk [vmem:[%s3 + $0x48] sm:$0xff] %vm199, %v186
  %210 = vst.msk [vmem:[%s3 + $0x50] sm:$0xff] %vm199, %v191
  %211 = vst.msk [vmem:[%s3 + $0x58] sm:$0xff] %vm199, %v196
  // Predicated region
  $region14: #{forward.4} parent=0 // pred_check
    _
  $region15: #{forward.4} parent=0 // pred_check_branch
    %213 = sbr.rel (0) target = $region17
  $region16: #{forward.4} parent=0 // pred_region
    _
  $region17: #{forward.4} parent=0 // pred_fallthru
    _
  // Predicated region
  $region18: #{forward.4} parent=0 // pred_check
    _
  $region19: #{forward.4} parent=0 // pred_check_branch
    %215 = sbr.rel (0) target = $region21
  $region20: #{forward.4} parent=0 // pred_region
    _
  $region21: #{forward.4} parent=0 // pred_fallthru
    _

// kernel: forward.5
$region0: #{forward.5}
  #allocation0 [shape = 'u32[]', space=smem, size = 0x4, offset = 0x4, fixed_abs, tag = 'smem constant byte address 0x4 - core index']
  #allocation1 [shape = 'u32[144,128]{1,0:T(1,128)}', space=vmem, size = 0x12000, scoped, tag = 'internal scratch']
  %s0 = inlined_call_operand.vmem [shape: f32[4,42], index: 0, kind: input, shape index: {}]
  %s1 = inlined_call_operand.vmem [shape: f32[42,3], index: 1, kind: input, shape index: {}]
  %s2 = inlined_call_operand.vmem [shape: f32[1,3], index: 2, kind: input, shape index: {}]
  %s3 = inlined_call_operand.vmem [shape: f32[4,3], index: 3, kind: output, shape index: {}]
  %s4 = sld [smem:[#allocation0]]
  $region22: #{forward.5} parent=0
    _
  %s6 = ssub.s32 1, %s4
  %s7 = scalar_select 0, %s6, %s4
  // Predicated region
  $region2: #{forward.5} parent=0 // pred_check
    _
  $region3: #{forward.5} parent=0 // pred_check_branch
    %9 = sbr.rel (0) target = $region5
  $region4: #{forward.5} parent=0 // pred_region
    _
  $region5: #{forward.5} parent=0 // pred_fallthru
    _
  // Predicated region
  $region6: #{forward.5} parent=0 // pred_check
    _
  $region7: #{forward.5} parent=0 // pred_check_branch
    %11 = sbr.rel (0) target = $region9
  $region8: #{forward.5} parent=0 // pred_region
    _
  $region9: #{forward.5} parent=0 // pred_fallthru
    _
  // Predicated region
  $region10: #{forward.5} parent=0 // pred_check
    _
  $region11: #{forward.5} parent=0 // pred_check_branch
    %13 = sbr.rel (0) target = $region13
  $region12: #{forward.5} parent=0 // pred_region
    _
  $region13: #{forward.5} parent=0 // pred_fallthru
    _
  %v14 = vld [vmem:[%s0] sm:$0xf]
  %v15 = vld [vmem:[%s1] sm:$0xff]
  %v16 = vld [vmem:[%s1 + $0x8] sm:$0xff]
  %v17 = vld [vmem:[%s1 + $0x10] sm:$0xff]
  %v18 = vld [vmem:[%s1 + $0x18] sm:$0xff]
  %v19 = vld [vmem:[%s1 + $0x20] sm:$0xff]
  %v20 = vld [vmem:[%s1 + $0x28] sm:$0x3]
  %v21 = vld [vmem:[%s2] sm:$0x1]
  %v23 = vlaneseq
  %v24 = vshrl.u32 %v23, 7
  %v25 = vsub.s32 0, %v24
  %v26 = vrot.slane %v21, %v25
  %vm28 = vcmask 343040
  %v30 = vsel %vm28, %v14, 0
  %vm32 = vcmask 1041408
  %v34 = vsel %vm32, %v20, 0
  %36 = vmatprep.subr.mxu0 0.0
  %37 = vmatpush1.msra.mxu0 %v15
  %38 = vmatprep.subr.mxu0 0.0
  %39 = vmatpush1.msra.mxu0 %v16
  %40 = vmatprep.subr.mxu0 0.0
  %41 = vmatpush1.msra.mxu0 %v17
  %42 = vmatprep.subr.mxu0 0.0
  %43 = vmatpush1.msra.mxu0 %v18
  %44 = vmatprep.subr.mxu0 0.0
  %45 = vmatpush1.msra.mxu0 %v19
  %46 = vmatprep.subr.mxu0 0.0
  %47 = vmatpush1.msra.mxu0 %v34
  %48 = vmatprep.subr.mxu0 0.0
  %49 = vmatpush1.msra.mxu0 0.0
  %50 = vmatprep.subr.mxu0 0.0
  %51 = vmatpush1.msra.mxu0 0.0
  %52 = vmatprep.subr.mxu0 0.0
  %53 = vmatpush1.msra.mxu0 0.0
  %54 = vmatprep.subr.mxu0 0.0
  %55 = vmatpush1.msra.mxu0 0.0
  %56 = vmatprep.subr.mxu0 0.0
  %57 = vmatpush1.msra.mxu0 0.0
  %58 = vmatprep.subr.mxu0 0.0
  %59 = vmatpush1.msra.mxu0 0.0
  %60 = vmatprep.subr.mxu0 0.0
  %61 = vmatpush1.msra.mxu0 0.0
  %62 = vmatprep.subr.mxu0 0.0
  %63 = vmatpush1.msra.mxu0 0.0
  %64 = vmatprep.subr.mxu0 0.0
  %65 = vmatpush1.msra.mxu0 0.0
  %66 = vmatprep.subr.mxu0 0.0
  %67 = vmatpush1.msra.mxu0 0.0
  %68 = vmatprep.subr.mxu0 0.0
  %69 = vmatpush1.msra.mxu0 0.0
  %70 = vmatprep.subr.mxu0 0.0
  %71 = vmatpush1.msra.mxu0 0.0
  %72 = vmatprep.subr.mxu0 0.0
  %73 = vmatpush1.msra.mxu0 0.0
  %74 = vmatprep.subr.mxu0 0.0
  %75 = vmatpush1.msra.mxu0 0.0
  %76 = vmatprep.subr.mxu0 0.0
  %77 = vmatpush1.msra.mxu0 0.0
  %78 = vmatprep.subr.mxu0 0.0
  %79 = vmatpush1.msra.mxu0 0.0
  %80 = vmatprep.subr.mxu0 0.0
  %81 = vmatpush1.msra.mxu0 0.0
  %82 = vmatprep.subr.mxu0 0.0
  %83 = vmatpush1.msra.mxu0 0.0
  %84 = vmatprep.subr.mxu0 0.0
  %85 = vmatpush1.msra.mxu0 0.0
  %86 = vmatprep.subr.mxu0 0.0
  %87 = vmatpush1.msra.mxu0 0.0
  %88 = vmatprep.subr.mxu0 0.0
  %89 = vmatpush1.msra.mxu0 0.0
  %90 = vmatprep.subr.mxu0 0.0
  %91 = vmatpush1.msra.mxu0 0.0
  %92 = vmatprep.subr.mxu0 0.0
  %93 = vmatpush1.msra.mxu0 0.0
  %94 = vmatprep.subr.mxu0 0.0
  %95 = vmatpush1.msra.mxu0 0.0
  %96 = vmatprep.subr.mxu0 0.0
  %97 = vmatpush1.msra.mxu0 0.0
  %98 = vmatprep.subr.mxu0 0.0
  %99 = vmatpush1.msra.mxu0 0.0
  %100 = vmatprep.mubr.f32.mxu0 0.0
  %101 = vmatmul.mubr.f32.gmra.mrb[0].mxu0 %v30
  %v102 = vpop.f32.mrb[0].mxu0
  %v103 = vadd.f32 %v26, %v102
  %v104 = vpop.f32.mrb[0].mxu0
  %105 = vdwg.mxu0
  %v106 = vsub.f32 0.0, %v103
  %v107 = vmul.f32 %v106, 1.442695
  %v108 = vpow.pop %v107
  %v109 = vadd.f32 %v108, 1.0
  %v110 = vrcp.pop %v109
  %vm111 = vcmask 19456
  %112 = vst.msk [vmem:[%s3] sm:$0xf] %vm111, %v110
  // Predicated region
  $region14: #{forward.5} parent=0 // pred_check
    _
  $region15: #{forward.5} parent=0 // pred_check_branch
    %114 = sbr.rel (0) target = $region17
  $region16: #{forward.5} parent=0 // pred_region
    _
  $region17: #{forward.5} parent=0 // pred_fallthru
    _
  // Predicated region
  $region18: #{forward.5} parent=0 // pred_check
    _
  $region19: #{forward.5} parent=0 // pred_check_branch
    %116 = sbr.rel (0) target = $region21
  $region20: #{forward.5} parent=0 // pred_region
    _
  $region21: #{forward.5} parent=0 // pred_fallthru
    _

// kernel: forward.3
$region0: #{forward.3}
  #allocation0 [shape = 'u32[]', space=smem, size = 0x4, offset = 0x4, fixed_abs, tag = 'smem constant byte address 0x4 - core index']
  #allocation1 [shape = 'u32[144,128]{1,0:T(1,128)}', space=vmem, size = 0x12000, scoped, tag = 'internal scratch']
  #allocation2 [shape = 'f32[2,16]{1,0:T(2,128)}', space=vmem, size = 0x400, scoped, tag = 'scratch operand']
  %s0 = inlined_call_operand.vmem [shape: f32[8,768], index: 0, kind: input, shape index: {}]
  %s1 = inlined_call_operand.vmem [shape: f32[2,16], index: 1, kind: input, shape index: {}]
  %s2 = inlined_call_operand.vmem [shape: f32[2,16], index: 2, kind: input, shape index: {}]
  %s3 = inlined_call_operand.vmem [shape: bf16[768,64], index: 3, kind: input, shape index: {}]
  %s4 = inlined_call_operand.vmem [shape: f32[1,64], index: 4, kind: input, shape index: {}]
  %s5 = inlined_call_operand.vmem [shape: f32[16,32], index: 5, kind: input, shape index: {}]
  %s6 = inlined_call_operand.vmem [shape: f32[1,32], index: 6, kind: input, shape index: {}]
  %s7 = inlined_call_operand.vmem [shape: f32[32,32], index: 7, kind: input, shape index: {}]
  %s8 = inlined_call_operand.vmem [shape: f32[1,32], index: 8, kind: input, shape index: {}]
  %s9 = inlined_call_operand.vmem [shape: f32[64,32], index: 9, kind: input, shape index: {}]
  %s10 = inlined_call_operand.vmem [shape: f32[32,32], index: 10, kind: input, shape index: {}]
  %s11 = inlined_call_operand.vmem [shape: f32[1,32], index: 11, kind: input, shape index: {}]
  %s12 = inlined_call_operand.vmem [shape: bf16[4,16,1024], index: 12, kind: input, shape index: {}]
  %s13 = inlined_call_operand.vmem [shape: f32[4,1,1024], index: 13, kind: input, shape index: {}]
  %s14 = inlined_call_operand.vmem [shape: bf16[4,512,512], index: 14, kind: input, shape index: {}]
  %s15 = inlined_call_operand.vmem [shape: f32[4,1,512], index: 15, kind: input, shape index: {}]
  %s16 = inlined_call_operand.hbm [shape: bf16[4,512,512], index: 16, kind: input, shape index: {}]
  %s17 = inlined_call_operand.vmem [shape: f32[4,1,512], index: 17, kind: input, shape index: {}]
  %s18 = inlined_call_operand.vmem [shape: bf16[4,512,16], index: 18, kind: input, shape index: {}]
  %s19 = inlined_call_operand.vmem [shape: f32[4,1,16], index: 19, kind: input, shape index: {}]
  %s20 = inlined_call_operand.vmem [shape: bf16[4,512,16], index: 20, kind: input, shape index: {}]
  %s21 = inlined_call_operand.vmem [shape: f32[4,1,16], index: 21, kind: input, shape index: {}]
  %s22 = inlined_call_operand.vmem [shape: bf16[16,1536], index: 22, kind: input, shape index: {}]
  %s23 = inlined_call_operand.vmem [shape: f32[1,1536], index: 23, kind: input, shape index: {}]
  %s24 = inlined_call_operand.hbm [shape: f32[2,16], index: 24, kind: output, shape index: {0}]
  %s25 = inlined_call_operand.vmem [shape: f32[2,16], index: 25, kind: output, shape index: {1}]
  %s26 = inlined_call_operand.vmem [shape: f32[2,1536], index: 26, kind: output, shape index: {2}]
  %27 = xla_tuple %s24, %s25, %s26
  %s28 = sld [smem:[#allocation0]]
  $region157: #{forward.3} parent=0
    _
  %s30 = ssub.s32 1, %s28
  %s31 = scalar_select 0, %s30, %s28
  $region1: #{forward.3} parent=0
    #allocation3 [shape = 'u8[1048576]{0}', space=vmem, size = 0x100000, scoped, tag = 'input window, operand 16']
    #allocation4 [shape = 's32[2]{0}', space=sflag, size = 0x8, scoped, tag = 'scoped memory for forward.3']
    #allocation5 [shape = 's32[2]{0}', space=sflag, size = 0x8, scoped, tag = 'scoped memory for forward.3']
    #allocation6 [shape = 'u8[1024]{0}', space=vmem, size = 0x400, scoped, tag = 'output window, operand 0, single buffered']
    %32 = vsyncpa [#allocation4], 0
    %s33 = scalar_lea.sflag [#allocation4], 1
    %34 = vsyncpa %s33, 0
    %35 = vsyncpa [#allocation5], 0
    loop: start=0, step=1, limit=6
    $region2: #{forward.3} parent=1 // loop_pre_header
      _
    $region3: #{forward.3} parent=1 // loop_header
      %s37 = sphi 0, %s41
      %p38 = scmp.ge.s32.totalorder %s37, 6
      %s45 = sphi 0, %s45
      %s47 = sphi 0, %s45
      %s48 = sphi 0, %s47
      %s62 = sphi 0, %s48
      %s66 = sphi 0, %s66
      %s68 = sphi 0, %s66
      %s69 = sphi 0, %s68
      %s83 = sphi 0, %s69
      %s87 = sphi 0, %s87
      %s89 = sphi 0, %s87
      %s90 = sphi 0, %s89
      %s104 = sphi 0, %s90
      %s108 = sphi 0, %s108
      %s110 = sphi 0, %s108
      %s111 = sphi 0, %s110
      %s125 = sphi 0, %s111
      %s129 = sphi 0, %s129
      %s131 = sphi 0, %s129
      %s132 = sphi 0, %s131
      %s146 = sphi 0, %s132
      %s150 = sphi 0, %s150
      %s152 = sphi 0, %s150
      %s153 = sphi 0, %s152
      %s167 = sphi 0, %s153
      %s171 = sphi 0, %s171
      %s173 = sphi 0, %s171
      %s174 = sphi 0, %s173
      %s188 = sphi 0, %s174
      %s192 = sphi 0, %s192
      %s194 = sphi 0, %s192
      %s195 = sphi 0, %s194
      %s209 = sphi 0, %s195
      %s213 = sphi 0, %s213
      %s215 = sphi 0, %s213
      %s216 = sphi 0, %s215
      %s230 = sphi 0, %s216
      %s234 = sphi 0, %s234
      %s236 = sphi 0, %s234
      %s237 = sphi 0, %s236
      %s251 = sphi 0, %s237
      %s255 = sphi 0, %s255
      %s257 = sphi 0, %s255
      %s258 = sphi 0, %s257
      %s272 = sphi 0, %s258
      %s276 = sphi 0, %s276
      %s278 = sphi 0, %s276
      %s279 = sphi 0, %s278
      %s293 = sphi 0, %s279
      %s299 = sphi 0, %s301
      %s302 = sphi 0, %s299
      %s303 = sphi 0, %s302
      %s319 = sphi 0, %s303
      %s325 = sphi 0, %s327
      %s328 = sphi 0, %s325
      %s329 = sphi 0, %s328
      %s345 = sphi 0, %s329
      %s351 = sphi 0, %s353
      %s354 = sphi 0, %s351
      %s355 = sphi 0, %s354
      %s371 = sphi 0, %s355
      %s377 = sphi 0, %s379
      %s380 = sphi 0, %s377
      %s381 = sphi 0, %s380
      %s397 = sphi 0, %s381
      %s403 = sphi 0, %s405
      %s406 = sphi 0, %s403
      %s407 = sphi 0, %s406
      %s423 = sphi 0, %s407
      %s429 = sphi 0, %s431
      %s432 = sphi 0, %s429
      %s433 = sphi 0, %s432
      %s449 = sphi 0, %s433
      %s455 = sphi 0, %s457
      %s458 = sphi 0, %s455
      %s459 = sphi 0, %s458
      %s475 = sphi 0, %s459
      %s481 = sphi 0, %s483
      %s484 = sphi 0, %s481
      %s485 = sphi 0, %s484
      %s501 = sphi 0, %s485
      %s507 = sphi 0, %s509
      %s510 = sphi 0, %s507
      %s511 = sphi 0, %s510
      %s527 = sphi 0, %s511
      %s533 = sphi 0, %s535
      %s536 = sphi 0, %s533
      %s537 = sphi 0, %s536
      %s553 = sphi 0, %s537
      %s557 = sphi 0, %s557
      %s559 = sphi 0, %s557
      %s560 = sphi 0, %s559
      %s574 = sphi 0, %s560
      %s578 = sphi 0, %s578
      %s580 = sphi 0, %s578
      %s581 = sphi 0, %s580
      %s595 = sphi 0, %s581
      %s599 = sphi 0, %s599
      %s601 = sphi 0, %s599
      %s602 = sphi 0, %s601
      %s616 = sphi 0, %s602
      %s620 = sphi 0, %s620
      %s622 = sphi 0, %s620
      %s623 = sphi 0, %s622
      %s637 = sphi 0, %s623
      %s641 = sphi 0, %s641
      %s643 = sphi 0, %s641
      %s644 = sphi 0, %s643
      %s658 = sphi 0, %s644
    $region4: #{forward.3} parent=1 // loop_header_branch
      %40 = sbr.rel (%p38) target = $region8
    $region5: #{forward.3} parent=1 // loop_body
      %s42 = ssub.s32 %s37, 1
      %s43 = ssub.s32 %s37, 2
      %s44 = sadd.s32 %s37, 1
      %s46 = sadd.s32 %s45, 1
      %p49 = scmp.eq.s32.totalorder %s37, 3
      %p50 = scmp.ne.s32.totalorder %s45, %s47
      %p51 = scmp.eq.s32.totalorder %s37, 0
      %p52 = por %p50, %p51
      %p53 = scmp.ne.s32.totalorder %s45, %s47
      %p54 = scmp.eq.s32.totalorder %s42, 3
      %p55 = por %p53, %p54
      %p56 = scmp.ne.s32.totalorder %s47, %s48
      %p57 = scmp.eq.s32.totalorder %s42, 0
      %p58 = por %p56, %p57
      %p59 = scmp.ne.s32.totalorder %s47, %s48
      %p60 = scmp.eq.s32.totalorder %s43, 3
      %p61 = por %p59, %p60
      %p63 = scmp.ne.s32.totalorder %s48, %s62
      %p64 = scmp.eq.s32.totalorder %s43, 0
      %p65 = por %p63, %p64
      %s67 = sadd.s32 %s66, 1
      %p70 = scmp.eq.s32.totalorder %s37, 3
      %p71 = scmp.ne.s32.totalorder %s66, %s68
      %p72 = scmp.eq.s32.totalorder %s37, 0
      %p73 = por %p71, %p72
      %p74 = scmp.ne.s32.totalorder %s66, %s68
      %p75 = scmp.eq.s32.totalorder %s42, 3
      %p76 = por %p74, %p75
      %p77 = scmp.ne.s32.totalorder %s68, %s69
      %p78 = scmp.eq.s32.totalorder %s42, 0
      %p79 = por %p77, %p78
      %p80 = scmp.ne.s32.totalorder %s68, %s69
      %p81 = scmp.eq.s32.totalorder %s43, 3
      %p82 = por %p80, %p81
      %p84 = scmp.ne.s32.totalorder %s69, %s83
      %p85 = scmp.eq.s32.totalorder %s43, 0
      %p86 = por %p84, %p85
      %s88 = sadd.s32 %s87, 1
      %p91 = scmp.eq.s32.totalorder %s37, 3
      %p92 = scmp.ne.s32.totalorder %s87, %s89
      %p93 = scmp.eq.s32.totalorder %s37, 0
      %p94 = por %p92, %p93
      %p95 = scmp.ne.s32.totalorder %s87, %s89
      %p96 = scmp.eq.s32.totalorder %s42, 3
      %p97 = por %p95, %p96
      %p98 = scmp.ne.s32.totalorder %s89, %s90
      %p99 = scmp.eq.s32.totalorder %s42, 0
      %p100 = por %p98, %p99
      %p101 = scmp.ne.s32.totalorder %s89, %s90
      %p102 = scmp.eq.s32.totalorder %s43, 3
      %p103 = por %p101, %p102
      %p105 = scmp.ne.s32.totalorder %s90, %s104
      %p106 = scmp.eq.s32.totalorder %s43, 0
      %p107 = por %p105, %p106
      %s109 = sadd.s32 %s108, 1
      %p112 = scmp.eq.s32.totalorder %s37, 3
      %p113 = scmp.ne.s32.totalorder %s108, %s110
      %p114 = scmp.eq.s32.totalorder %s37, 0
      %p115 = por %p113, %p114
      %p116 = scmp.ne.s32.totalorder %s108, %s110
      %p117 = scmp.eq.s32.totalorder %s42, 3
      %p118 = por %p116, %p117
      %p119 = scmp.ne.s32.totalorder %s110, %s111
      %p120 = scmp.eq.s32.totalorder %s42, 0
      %p121 = por %p119, %p120
      %p122 = scmp.ne.s32.totalorder %s110, %s111
      %p123 = scmp.eq.s32.totalorder %s43, 3
      %p124 = por %p122, %p123
      %p126 = scmp.ne.s32.totalorder %s111, %s125
      %p127 = scmp.eq.s32.totalorder %s43, 0
      %p128 = por %p126, %p127
      %s130 = sadd.s32 %s129, 1
      %p133 = scmp.eq.s32.totalorder %s37, 3
      %p134 = scmp.ne.s32.totalorder %s129, %s131
      %p135 = scmp.eq.s32.totalorder %s37, 0
      %p136 = por %p134, %p135
      %p137 = scmp.ne.s32.totalorder %s129, %s131
      %p138 = scmp.eq.s32.totalorder %s42, 3
      %p139 = por %p137, %p138
      %p140 = scmp.ne.s32.totalorder %s131, %s132
      %p141 = scmp.eq.s32.totalorder %s42, 0
      %p142 = por %p140, %p141
      %p143 = scmp.ne.s32.totalorder %s131, %s132
      %p144 = scmp.eq.s32.totalorder %s43, 3
      %p145 = por %p143, %p144
      %p147 = scmp.ne.s32.totalorder %s132, %s146
      %p148 = scmp.eq.s32.totalorder %s43, 0
      %p149 = por %p147, %p148
      %s151 = sadd.s32 %s150, 1
      %p154 = scmp.eq.s32.totalorder %s37, 3
      %p155 = scmp.ne.s32.totalorder %s150, %s152
      %p156 = scmp.eq.s32.totalorder %s37, 0
      %p157 = por %p155, %p156
      %p158 = scmp.ne.s32.totalorder %s150, %s152
      %p159 = scmp.eq.s32.totalorder %s42, 3
      %p160 = por %p158, %p159
      %p161 = scmp.ne.s32.totalorder %s152, %s153
      %p162 = scmp.eq.s32.totalorder %s42, 0
      %p163 = por %p161, %p162
      %p164 = scmp.ne.s32.totalorder %s152, %s153
      %p165 = scmp.eq.s32.totalorder %s43, 3
      %p166 = por %p164, %p165
      %p168 = scmp.ne.s32.totalorder %s153, %s167
      %p169 = scmp.eq.s32.totalorder %s43, 0
      %p170 = por %p168, %p169
      %s172 = sadd.s32 %s171, 1
      %p175 = scmp.eq.s32.totalorder %s37, 3
      %p176 = scmp.ne.s32.totalorder %s171, %s173
      %p177 = scmp.eq.s32.totalorder %s37, 0
      %p178 = por %p176, %p177
      %p179 = scmp.ne.s32.totalorder %s171, %s173
      %p180 = scmp.eq.s32.totalorder %s42, 3
      %p181 = por %p179, %p180
      %p182 = scmp.ne.s32.totalorder %s173, %s174
      %p183 = scmp.eq.s32.totalorder %s42, 0
      %p184 = por %p182, %p183
      %p185 = scmp.ne.s32.totalorder %s173, %s174
      %p186 = scmp.eq.s32.totalorder %s43, 3
      %p187 = por %p185, %p186
      %p189 = scmp.ne.s32.totalorder %s174, %s188
      %p190 = scmp.eq.s32.totalorder %s43, 0
      %p191 = por %p189, %p190
      %s193 = sadd.s32 %s192, 1
      %p196 = scmp.eq.s32.totalorder %s37, 3
      %p197 = scmp.ne.s32.totalorder %s192, %s194
      %p198 = scmp.eq.s32.totalorder %s37, 0
      %p199 = por %p197, %p198
      %p200 = scmp.ne.s32.totalorder %s192, %s194
      %p201 = scmp.eq.s32.totalorder %s42, 3
      %p202 = por %p200, %p201
      %p203 = scmp.ne.s32.totalorder %s194, %s195
      %p204 = scmp.eq.s32.totalorder %s42, 0
      %p205 = por %p203, %p204
      %p206 = scmp.ne.s32.totalorder %s194, %s195
      %p207 = scmp.eq.s32.totalorder %s43, 3
      %p208 = por %p206, %p207
      %p210 = scmp.ne.s32.totalorder %s195, %s209
      %p211 = scmp.eq.s32.totalorder %s43, 0
      %p212 = por %p210, %p211
      %s214 = sadd.s32 %s213, 1
      %p217 = scmp.eq.s32.totalorder %s37, 3
      %p218 = scmp.ne.s32.totalorder %s213, %s215
      %p219 = scmp.eq.s32.totalorder %s37, 0
      %p220 = por %p218, %p219
      %p221 = scmp.ne.s32.totalorder %s213, %s215
      %p222 = scmp.eq.s32.totalorder %s42, 3
      %p223 = por %p221, %p222
      %p224 = scmp.ne.s32.totalorder %s215, %s216
      %p225 = scmp.eq.s32.totalorder %s42, 0
      %p226 = por %p224, %p225
      %p227 = scmp.ne.s32.totalorder %s215, %s216
      %p228 = scmp.eq.s32.totalorder %s43, 3
      %p229 = por %p227, %p228
      %p231 = scmp.ne.s32.totalorder %s216, %s230
      %p232 = scmp.eq.s32.totalorder %s43, 0
      %p233 = por %p231, %p232
      %s235 = sadd.s32 %s234, 1
      %p238 = scmp.eq.s32.totalorder %s37, 3
      %p239 = scmp.ne.s32.totalorder %s234, %s236
      %p240 = scmp.eq.s32.totalorder %s37, 0
      %p241 = por %p239, %p240
      %p242 = scmp.ne.s32.totalorder %s234, %s236
      %p243 = scmp.eq.s32.totalorder %s42, 3
      %p244 = por %p242, %p243
      %p245 = scmp.ne.s32.totalorder %s236, %s237
      %p246 = scmp.eq.s32.totalorder %s42, 0
      %p247 = por %p245, %p246
      %p248 = scmp.ne.s32.totalorder %s236, %s237
      %p249 = scmp.eq.s32.totalorder %s43, 3
      %p250 = por %p248, %p249
      %p252 = scmp.ne.s32.totalorder %s237, %s251
      %p253 = scmp.eq.s32.totalorder %s43, 0
      %p254 = por %p252, %p253
      %s256 = sadd.s32 %s255, 1
      %p259 = scmp.eq.s32.totalorder %s37, 3
      %p260 = scmp.ne.s32.totalorder %s255, %s257
      %p261 = scmp.eq.s32.totalorder %s37, 0
      %p262 = por %p260, %p261
      %p263 = scmp.ne.s32.totalorder %s255, %s257
      %p264 = scmp.eq.s32.totalorder %s42, 3
      %p265 = por %p263, %p264
      %p266 = scmp.ne.s32.totalorder %s257, %s258
      %p267 = scmp.eq.s32.totalorder %s42, 0
      %p268 = por %p266, %p267
      %p269 = scmp.ne.s32.totalorder %s257, %s258
      %p270 = scmp.eq.s32.totalorder %s43, 3
      %p271 = por %p269, %p270
      %p273 = scmp.ne.s32.totalorder %s258, %s272
      %p274 = scmp.eq.s32.totalorder %s43, 0
      %p275 = por %p273, %p274
      %s277 = sadd.s32 %s276, 1
      %p280 = scmp.eq.s32.totalorder %s37, 3
      %p281 = scmp.ne.s32.totalorder %s276, %s278
      %p282 = scmp.eq.s32.totalorder %s37, 0
      %p283 = por %p281, %p282
      %p284 = scmp.ne.s32.totalorder %s276, %s278
      %p285 = scmp.eq.s32.totalorder %s42, 3
      %p286 = por %p284, %p285
      %p287 = scmp.ne.s32.totalorder %s278, %s279
      %p288 = scmp.eq.s32.totalorder %s42, 0
      %p289 = por %p287, %p288
      %p290 = scmp.ne.s32.totalorder %s278, %s279
      %p291 = scmp.eq.s32.totalorder %s43, 3
      %p292 = por %p290, %p291
      %p294 = scmp.ne.s32.totalorder %s279, %s293
      %p295 = scmp.eq.s32.totalorder %s43, 0
      %p296 = por %p294, %p295
      %s297 = ssub.s32 %s37, %s44
      %p298 = scmp.eq.s32.totalorder %s297, 0
      %s300 = sadd.s32 %s299, 1
      %s301 = scalar_select %p298, %s299, %s300
      %p304 = pneg %p298
      %p305 = scmp.eq.s32.totalorder %s37, 3
      %p306 = por %p304, %p305
      %p307 = scmp.ne.s32.totalorder %s299, %s302
      %p308 = scmp.eq.s32.totalorder %s37, 0
      %p309 = por %p307, %p308
      %p310 = scmp.ne.s32.totalorder %s299, %s302
      %p311 = scmp.eq.s32.totalorder %s42, 3
      %p312 = por %p310, %p311
      %p313 = scmp.ne.s32.totalorder %s302, %s303
      %p314 = scmp.eq.s32.totalorder %s42, 0
      %p315 = por %p313, %p314
      %p316 = scmp.ne.s32.totalorder %s302, %s303
      %p317 = scmp.eq.s32.totalorder %s43, 3
      %p318 = por %p316, %p317
      %p320 = scmp.ne.s32.totalorder %s303, %s319
      %p321 = scmp.eq.s32.totalorder %s43, 0
      %p322 = por %p320, %p321
      %s323 = ssub.s32 %s37, %s44
      %p324 = scmp.eq.s32.totalorder %s323, 0
      %s326 = sadd.s32 %s325, 1
      %s327 = scalar_select %p324, %s325, %s326
      %p330 = pneg %p324
      %p331 = scmp.eq.s32.totalorder %s37, 3
      %p332 = por %p330, %p331
      %p333 = scmp.ne.s32.totalorder %s325, %s328
      %p334 = scmp.eq.s32.totalorder %s37, 0
      %p335 = por %p333, %p334
      %p336 = scmp.ne.s32.totalorder %s325, %s328
      %p337 = scmp.eq.s32.totalorder %s42, 3
      %p338 = por %p336, %p337
      %p339 = scmp.ne.s32.totalorder %s328, %s329
      %p340 = scmp.eq.s32.totalorder %s42, 0
      %p341 = por %p339, %p340
      %p342 = scmp.ne.s32.totalorder %s328, %s329
      %p343 = scmp.eq.s32.totalorder %s43, 3
      %p344 = por %p342, %p343
      %p346 = scmp.ne.s32.totalorder %s329, %s345
      %p347 = scmp.eq.s32.totalorder %s43, 0
      %p348 = por %p346, %p347
      %s349 = ssub.s32 %s37, %s44
      %p350 = scmp.eq.s32.totalorder %s349, 0
      %s352 = sadd.s32 %s351, 1
      %s353 = scalar_select %p350, %s351, %s352
      %p356 = pneg %p350
      %p357 = scmp.eq.s32.totalorder %s37, 3
      %p358 = por %p356, %p357
      %p359 = scmp.ne.s32.totalorder %s351, %s354
      %p360 = scmp.eq.s32.totalorder %s37, 0
      %p361 = por %p359, %p360
      %p362 = scmp.ne.s32.totalorder %s351, %s354
      %p363 = scmp.eq.s32.totalorder %s42, 3
      %p364 = por %p362, %p363
      %p365 = scmp.ne.s32.totalorder %s354, %s355
      %p366 = scmp.eq.s32.totalorder %s42, 0
      %p367 = por %p365, %p366
      %p368 = scmp.ne.s32.totalorder %s354, %s355
      %p369 = scmp.eq.s32.totalorder %s43, 3
      %p370 = por %p368, %p369
      %p372 = scmp.ne.s32.totalorder %s355, %s371
      %p373 = scmp.eq.s32.totalorder %s43, 0
      %p374 = por %p372, %p373
      %s375 = ssub.s32 %s37, %s44
      %p376 = scmp.eq.s32.totalorder %s375, 0
      %s378 = sadd.s32 %s377, 1
      %s379 = scalar_select %p376, %s377, %s378
      %p382 = pneg %p376
      %p383 = scmp.eq.s32.totalorder %s37, 3
      %p384 = por %p382, %p383
      %p385 = scmp.ne.s32.totalorder %s377, %s380
      %p386 = scmp.eq.s32.totalorder %s37, 0
      %p387 = por %p385, %p386
      %p388 = scmp.ne.s32.totalorder %s377, %s380
      %p389 = scmp.eq.s32.totalorder %s42, 3
      %p390 = por %p388, %p389
      %p391 = scmp.ne.s32.totalorder %s380, %s381
      %p392 = scmp.eq.s32.totalorder %s42, 0
      %p393 = por %p391, %p392
      %p394 = scmp.ne.s32.totalorder %s380, %s381
      %p395 = scmp.eq.s32.totalorder %s43, 3
      %p396 = por %p394, %p395
      %p398 = scmp.ne.s32.totalorder %s381, %s397
      %p399 = scmp.eq.s32.totalorder %s43, 0
      %p400 = por %p398, %p399
      %s401 = ssub.s32 %s37, %s44
      %p402 = scmp.eq.s32.totalorder %s401, 0
      %s404 = sadd.s32 %s403, 1
      %s405 = scalar_select %p402, %s403, %s404
      %p408 = pneg %p402
      %p409 = scmp.eq.s32.totalorder %s37, 3
      %p410 = por %p408, %p409
      %p411 = scmp.ne.s32.totalorder %s403, %s406
      %p412 = scmp.eq.s32.totalorder %s37, 0
      %p413 = por %p411, %p412
      %p414 = scmp.ne.s32.totalorder %s403, %s406
      %p415 = scmp.eq.s32.totalorder %s42, 3
      %p416 = por %p414, %p415
      %p417 = scmp.ne.s32.totalorder %s406, %s407
      %p418 = scmp.eq.s32.totalorder %s42, 0
      %p419 = por %p417, %p418
      %p420 = scmp.ne.s32.totalorder %s406, %s407
      %p421 = scmp.eq.s32.totalorder %s43, 3
      %p422 = por %p420, %p421
      %p424 = scmp.ne.s32.totalorder %s407, %s423
      %p425 = scmp.eq.s32.totalorder %s43, 0
      %p426 = por %p424, %p425
      %s427 = ssub.s32 %s37, %s44
      %p428 = scmp.eq.s32.totalorder %s427, 0
      %s430 = sadd.s32 %s429, 1
      %s431 = scalar_select %p428, %s429, %s430
      %p434 = pneg %p428
      %p435 = scmp.eq.s32.totalorder %s37, 3
      %p436 = por %p434, %p435
      %p437 = scmp.ne.s32.totalorder %s429, %s432
      %p438 = scmp.eq.s32.totalorder %s37, 0
      %p439 = por %p437, %p438
      %p440 = scmp.ne.s32.totalorder %s429, %s432
      %p441 = scmp.eq.s32.totalorder %s42, 3
      %p442 = por %p440, %p441
      %p443 = scmp.ne.s32.totalorder %s432, %s433
      %p444 = scmp.eq.s32.totalorder %s42, 0
      %p445 = por %p443, %p444
      %p446 = scmp.ne.s32.totalorder %s432, %s433
      %p447 = scmp.eq.s32.totalorder %s43, 3
      %p448 = por %p446, %p447
      %p450 = scmp.ne.s32.totalorder %s433, %s449
      %p451 = scmp.eq.s32.totalorder %s43, 0
      %p452 = por %p450, %p451
      %s453 = ssub.s32 %s37, %s44
      %p454 = scmp.eq.s32.totalorder %s453, 0
      %s456 = sadd.s32 %s455, 1
      %s457 = scalar_select %p454, %s455, %s456
      %p460 = pneg %p454
      %p461 = scmp.eq.s32.totalorder %s37, 3
      %p462 = por %p460, %p461
      %p463 = scmp.ne.s32.totalorder %s455, %s458
      %p464 = scmp.eq.s32.totalorder %s37, 0
      %p465 = por %p463, %p464
      %p466 = scmp.ne.s32.totalorder %s455, %s458
      %p467 = scmp.eq.s32.totalorder %s42, 3
      %p468 = por %p466, %p467
      %p469 = scmp.ne.s32.totalorder %s458, %s459
      %p470 = scmp.eq.s32.totalorder %s42, 0
      %p471 = por %p469, %p470
      %p472 = scmp.ne.s32.totalorder %s458, %s459
      %p473 = scmp.eq.s32.totalorder %s43, 3
      %p474 = por %p472, %p473
      %p476 = scmp.ne.s32.totalorder %s459, %s475
      %p477 = scmp.eq.s32.totalorder %s43, 0
      %p478 = por %p476, %p477
      %s479 = ssub.s32 %s37, %s44
      %p480 = scmp.eq.s32.totalorder %s479, 0
      %s482 = sadd.s32 %s481, 1
      %s483 = scalar_select %p480, %s481, %s482
      %p486 = pneg %p480
      %p487 = scmp.eq.s32.totalorder %s37, 3
      %p488 = por %p486, %p487
      %p489 = scmp.ne.s32.totalorder %s481, %s484
      %p490 = scmp.eq.s32.totalorder %s37, 0
      %p491 = por %p489, %p490
      %p492 = scmp.ne.s32.totalorder %s481, %s484
      %p493 = scmp.eq.s32.totalorder %s42, 3
      %p494 = por %p492, %p493
      %p495 = scmp.ne.s32.totalorder %s484, %s485
      %p496 = scmp.eq.s32.totalorder %s42, 0
      %p497 = por %p495, %p496
      %p498 = scmp.ne.s32.totalorder %s484, %s485
      %p499 = scmp.eq.s32.totalorder %s43, 3
      %p500 = por %p498, %p499
      %p502 = scmp.ne.s32.totalorder %s485, %s501
      %p503 = scmp.eq.s32.totalorder %s43, 0
      %p504 = por %p502, %p503
      %s505 = ssub.s32 %s37, %s44
      %p506 = scmp.eq.s32.totalorder %s505, 0
      %s508 = sadd.s32 %s507, 1
      %s509 = scalar_select %p506, %s507, %s508
      %p512 = pneg %p506
      %p513 = scmp.eq.s32.totalorder %s37, 3
      %p514 = por %p512, %p513
      %p515 = scmp.ne.s32.totalorder %s507, %s510
      %p516 = scmp.eq.s32.totalorder %s37, 0
      %p517 = por %p515, %p516
      %p518 = scmp.ne.s32.totalorder %s507, %s510
      %p519 = scmp.eq.s32.totalorder %s42, 3
      %p520 = por %p518, %p519
      %p521 = scmp.ne.s32.totalorder %s510, %s511
      %p522 = scmp.eq.s32.totalorder %s42, 0
      %p523 = por %p521, %p522
      %p524 = scmp.ne.s32.totalorder %s510, %s511
      %p525 = scmp.eq.s32.totalorder %s43, 3
      %p526 = por %p524, %p525
      %p528 = scmp.ne.s32.totalorder %s511, %s527
      %p529 = scmp.eq.s32.totalorder %s43, 0
      %p530 = por %p528, %p529
      %s531 = ssub.s32 %s37, %s44
      %p532 = scmp.eq.s32.totalorder %s531, 0
      %s534 = sadd.s32 %s533, 1
      %s535 = scalar_select %p532, %s533, %s534
      %p538 = pneg %p532
      %p539 = scmp.eq.s32.totalorder %s37, 3
      %p540 = por %p538, %p539
      %p541 = scmp.ne.s32.totalorder %s533, %s536
      %p542 = scmp.eq.s32.totalorder %s37, 0
      %p543 = por %p541, %p542
      %p544 = scmp.ne.s32.totalorder %s533, %s536
      %p545 = scmp.eq.s32.totalorder %s42, 3
      %p546 = por %p544, %p545
      %p547 = scmp.ne.s32.totalorder %s536, %s537
      %p548 = scmp.eq.s32.totalorder %s42, 0
      %p549 = por %p547, %p548
      %p550 = scmp.ne.s32.totalorder %s536, %s537
      %p551 = scmp.eq.s32.totalorder %s43, 3
      %p552 = por %p550, %p551
      %p554 = scmp.ne.s32.totalorder %s537, %s553
      %p555 = scmp.eq.s32.totalorder %s43, 0
      %p556 = por %p554, %p555
      %s558 = sadd.s32 %s557, 1
      %p561 = scmp.eq.s32.totalorder %s37, 3
      %p562 = scmp.ne.s32.totalorder %s557, %s559
      %p563 = scmp.eq.s32.totalorder %s37, 0
      %p564 = por %p562, %p563
      %p565 = scmp.ne.s32.totalorder %s557, %s559
      %p566 = scmp.eq.s32.totalorder %s42, 3
      %p567 = por %p565, %p566
      %p568 = scmp.ne.s32.totalorder %s559, %s560
      %p569 = scmp.eq.s32.totalorder %s42, 0
      %p570 = por %p568, %p569
      %p571 = scmp.ne.s32.totalorder %s559, %s560
      %p572 = scmp.eq.s32.totalorder %s43, 3
      %p573 = por %p571, %p572
      %p575 = scmp.ne.s32.totalorder %s560, %s574
      %p576 = scmp.eq.s32.totalorder %s43, 0
      %p577 = por %p575, %p576
      %s579 = sadd.s32 %s578, 1
      %p582 = scmp.eq.s32.totalorder %s37, 3
      %p583 = scmp.ne.s32.totalorder %s578, %s580
      %p584 = scmp.eq.s32.totalorder %s37, 0
      %p585 = por %p583, %p584
      %p586 = scmp.ne.s32.totalorder %s578, %s580
      %p587 = scmp.eq.s32.totalorder %s42, 3
      %p588 = por %p586, %p587
      %p589 = scmp.ne.s32.totalorder %s580, %s581
      %p590 = scmp.eq.s32.totalorder %s42, 0
      %p591 = por %p589, %p590
      %p592 = scmp.ne.s32.totalorder %s580, %s581
      %p593 = scmp.eq.s32.totalorder %s43, 3
      %p594 = por %p592, %p593
      %p596 = scmp.ne.s32.totalorder %s581, %s595
      %p597 = scmp.eq.s32.totalorder %s43, 0
      %p598 = por %p596, %p597
      %s600 = sadd.s32 %s599, 1
      %p603 = scmp.eq.s32.totalorder %s37, 3
      %p604 = scmp.ne.s32.totalorder %s599, %s601
      %p605 = scmp.eq.s32.totalorder %s37, 0
      %p606 = por %p604, %p605
      %p607 = scmp.ne.s32.totalorder %s599, %s601
      %p608 = scmp.eq.s32.totalorder %s42, 3
      %p609 = por %p607, %p608
      %p610 = scmp.ne.s32.totalorder %s601, %s602
      %p611 = scmp.eq.s32.totalorder %s42, 0
      %p612 = por %p610, %p611
      %p613 = scmp.ne.s32.totalorder %s601, %s602
      %p614 = scmp.eq.s32.totalorder %s43, 3
      %p615 = por %p613, %p614
      %p617 = scmp.ne.s32.totalorder %s602, %s616
      %p618 = scmp.eq.s32.totalorder %s43, 0
      %p619 = por %p617, %p618
      %s621 = sadd.s32 %s620, 1
      %p624 = scmp.eq.s32.totalorder %s37, 3
      %p625 = scmp.ne.s32.totalorder %s620, %s622
      %p626 = scmp.eq.s32.totalorder %s37, 0
      %p627 = por %p625, %p626
      %p628 = scmp.ne.s32.totalorder %s620, %s622
      %p629 = scmp.eq.s32.totalorder %s42, 3
      %p630 = por %p628, %p629
      %p631 = scmp.ne.s32.totalorder %s622, %s623
      %p632 = scmp.eq.s32.totalorder %s42, 0
      %p633 = por %p631, %p632
      %p634 = scmp.ne.s32.totalorder %s622, %s623
      %p635 = scmp.eq.s32.totalorder %s43, 3
      %p636 = por %p634, %p635
      %p638 = scmp.ne.s32.totalorder %s623, %s637
      %p639 = scmp.eq.s32.totalorder %s43, 0
      %p640 = por %p638, %p639
      %s642 = sadd.s32 %s641, 1
      %p645 = scmp.eq.s32.totalorder %s37, 3
      %p646 = scmp.ne.s32.totalorder %s641, %s643
      %p647 = scmp.eq.s32.totalorder %s37, 0
      %p648 = por %p646, %p647
      %p649 = scmp.ne.s32.totalorder %s641, %s643
      %p650 = scmp.eq.s32.totalorder %s42, 3
      %p651 = por %p649, %p650
      %p652 = scmp.ne.s32.totalorder %s643, %s644
      %p653 = scmp.eq.s32.totalorder %s42, 0
      %p654 = por %p652, %p653
      %p655 = scmp.ne.s32.totalorder %s643, %s644
      %p656 = scmp.eq.s32.totalorder %s43, 3
      %p657 = por %p655, %p656
      %p659 = scmp.ne.s32.totalorder %s644, %s658
      %p660 = scmp.eq.s32.totalorder %s43, 0
      %p661 = por %p659, %p660
      %p662 = scmp.le.s32.totalorder 1, %s37
      %p663 = scmp.lt.s32.totalorder %s37, 5
      %p664 = pnand %p662, %p663
      %p665 = pneg %p664
      // Predicated region
      $region9: #{forward.3} parent=5 // pred_check
        _
      $region10: #{forward.3} parent=5 // pred_check_branch
        %667 = sbr.rel (%p664) target = $region12
      $region11: #{forward.3} parent=5 // pred_region
        %s668 = ssub.s32 %s37, 1
        // Predicated region
        $region13: #{forward.3} parent=11 // pred_check
          %p669 = pneg %p58
        $region14: #{forward.3} parent=11 // pred_check_branch
          %671 = sbr.rel (%p669) target = $region16
        $region15: #{forward.3} parent=11 // pred_region
          _
        $region16: #{forward.3} parent=11 // pred_fallthru
          _
        // Predicated region
        $region17: #{forward.3} parent=11 // pred_check
          %p672 = pneg %p79
        $region18: #{forward.3} parent=11 // pred_check_branch
          %674 = sbr.rel (%p672) target = $region20
        $region19: #{forward.3} parent=11 // pred_region
          _
        $region20: #{forward.3} parent=11 // pred_fallthru
          _
        // Predicated region
        $region21: #{forward.3} parent=11 // pred_check
          %p675 = pneg %p100
        $region22: #{forward.3} parent=11 // pred_check_branch
          %677 = sbr.rel (%p675) target = $region24
        $region23: #{forward.3} parent=11 // pred_region
          _
        $region24: #{forward.3} parent=11 // pred_fallthru
          _
        // Predicated region
        $region25: #{forward.3} parent=11 // pred_check
          %p678 = pneg %p121
        $region26: #{forward.3} parent=11 // pred_check_branch
          %680 = sbr.rel (%p678) target = $region28
        $region27: #{forward.3} parent=11 // pred_region
          _
        $region28: #{forward.3} parent=11 // pred_fallthru
          _
        // Predicated region
        $region29: #{forward.3} parent=11 // pred_check
          %p681 = pneg %p142
        $region30: #{forward.3} parent=11 // pred_check_branch
          %683 = sbr.rel (%p681) target = $region32
        $region31: #{forward.3} parent=11 // pred_region
          _
        $region32: #{forward.3} parent=11 // pred_fallthru
          _
        // Predicated region
        $region33: #{forward.3} parent=11 // pred_check
          %p684 = pneg %p163
        $region34: #{forward.3} parent=11 // pred_check_branch
          %686 = sbr.rel (%p684) target = $region36
        $region35: #{forward.3} parent=11 // pred_region
          _
        $region36: #{forward.3} parent=11 // pred_fallthru
          _
        // Predicated region
        $region37: #{forward.3} parent=11 // pred_check
          %p687 = pneg %p184
        $region38: #{forward.3} parent=11 // pred_check_branch
          %689 = sbr.rel (%p687) target = $region40
        $region39: #{forward.3} parent=11 // pred_region
          _
        $region40: #{forward.3} parent=11 // pred_fallthru
          _
        // Predicated region
        $region41: #{forward.3} parent=11 // pred_check
          %p690 = pneg %p205
        $region42: #{forward.3} parent=11 // pred_check_branch
          %692 = sbr.rel (%p690) target = $region44
        $region43: #{forward.3} parent=11 // pred_region
          _
        $region44: #{forward.3} parent=11 // pred_fallthru
          _
        // Predicated region
        $region45: #{forward.3} parent=11 // pred_check
          %p693 = pneg %p226
        $region46: #{forward.3} parent=11 // pred_check_branch
          %695 = sbr.rel (%p693) target = $region48
        $region47: #{forward.3} parent=11 // pred_region
          _
        $region48: #{forward.3} parent=11 // pred_fallthru
          _
        // Predicated region
        $region49: #{forward.3} parent=11 // pred_check
          %p696 = pneg %p247
        $region50: #{forward.3} parent=11 // pred_check_branch
          %698 = sbr.rel (%p696) target = $region52
        $region51: #{forward.3} parent=11 // pred_region
          _
        $region52: #{forward.3} parent=11 // pred_fallthru
          _
        // Predicated region
        $region53: #{forward.3} parent=11 // pred_check
          %p699 = pneg %p268
        $region54: #{forward.3} parent=11 // pred_check_branch
          %701 = sbr.rel (%p699) target = $region56
        $region55: #{forward.3} parent=11 // pred_region
          _
        $region56: #{forward.3} parent=11 // pred_fallthru
          _
        // Predicated region
        $region57: #{forward.3} parent=11 // pred_check
          %p702 = pneg %p289
        $region58: #{forward.3} parent=11 // pred_check_branch
          %704 = sbr.rel (%p702) target = $region60
        $region59: #{forward.3} parent=11 // pred_region
          _
        $region60: #{forward.3} parent=11 // pred_fallthru
          _
        // Predicated region
        $region61: #{forward.3} parent=11 // pred_check
          %p705 = pneg %p570
        $region62: #{forward.3} parent=11 // pred_check_branch
          %707 = sbr.rel (%p705) target = $region64
        $region63: #{forward.3} parent=11 // pred_region
          _
        $region64: #{forward.3} parent=11 // pred_fallthru
          _
        // Predicated region
        $region65: #{forward.3} parent=11 // pred_check
          %p708 = pneg %p591
        $region66: #{forward.3} parent=11 // pred_check_branch
          %710 = sbr.rel (%p708) target = $region68
        $region67: #{forward.3} parent=11 // pred_region
          _
        $region68: #{forward.3} parent=11 // pred_fallthru
          _
      $region12: #{forward.3} parent=5 // pred_fallthru
        _
      %p711 = scmp.lt.s32.totalorder %s37, 4
      // Predicated region
      $region69: #{forward.3} parent=5 // pred_check
        %p712 = pneg %p711
      $region70: #{forward.3} parent=5 // pred_check_branch
        %714 = sbr.rel (%p712) target = $region72
      $region71: #{forward.3} parent=5 // pred_region
        // Predicated region
        $region73: #{forward.3} parent=71 // pred_check
          %p715 = pneg %p309
        $region74: #{forward.3} parent=71 // pred_check_branch
          %717 = sbr.rel (%p715) target = $region76
        $region75: #{forward.3} parent=71 // pred_region
          %p718 = scmp.lt.s32.totalorder %s37, 3
          %s719 = scalar_select %p718, %s37, 3
          %s720 = smul.addr %s719, 16
          %s721 = smul.addr %s720, 4
          %s722 = scalar_lea.vmem %s12, %s721
        $region76: #{forward.3} parent=71 // pred_fallthru
          _
        // Predicated region
        $region77: #{forward.3} parent=71 // pred_check
          %p723 = pneg %p335
        $region78: #{forward.3} parent=71 // pred_check_branch
          %725 = sbr.rel (%p723) target = $region80
        $region79: #{forward.3} parent=71 // pred_region
          %p726 = scmp.lt.s32.totalorder %s37, 3
          %s727 = scalar_select %p726, %s37, 3
          %s728 = smul.addr %s727, 8
          %s729 = scalar_lea.vmem %s13, %s728
        $region80: #{forward.3} parent=71 // pred_fallthru
          _
        // Predicated region
        $region81: #{forward.3} parent=71 // pred_check
          %p730 = pneg %p361
        $region82: #{forward.3} parent=71 // pred_check_branch
          %732 = sbr.rel (%p730) target = $region84
        $region83: #{forward.3} parent=71 // pred_region
          %p733 = scmp.lt.s32.totalorder %s37, 3
          %s734 = scalar_select %p733, %s37, 3
          %s735 = smul.addr %s734, 256
          %s736 = smul.addr %s735, 4
          %s737 = scalar_lea.vmem %s14, %s736
        $region84: #{forward.3} parent=71 // pred_fallthru
          _
        // Predicated region
        $region85: #{forward.3} parent=71 // pred_check
          %p738 = pneg %p387
        $region86: #{forward.3} parent=71 // pred_check_branch
          %740 = sbr.rel (%p738) target = $region88
        $region87: #{forward.3} parent=71 // pred_region
          %p741 = scmp.lt.s32.totalorder %s37, 3
          %s742 = scalar_select %p741, %s37, 3
          %s743 = smul.addr %s742, 4
          %s744 = scalar_lea.vmem %s15, %s743
        $region88: #{forward.3} parent=71 // pred_fallthru
          _
        // Predicated region
        $region89: #{forward.3} parent=71 // pred_check
          %p745 = pneg %p413
        $region90: #{forward.3} parent=71 // pred_check_branch
          %747 = sbr.rel (%p745) target = $region92
        $region91: #{forward.3} parent=71 // pred_region
          %s748 = sand.u32 %s403, 1
          %s749 = scalar_lea.sflag [#allocation4], %s748
          %s750 = sand.u32 %s403, 1
          %s751 = smul.addr %s750, 1024
          %s752 = scalar_lea.vmem [#allocation3], %s751
          %s754 = ssub.s32 16384, 16384
          %755 = vsyncadd %s749, %s754
          %s756 = smul.addr %s37, 256
          %s757 = smul.addr %s756, 64
          %s758 = scalar_lea.hbm %s16, %s757
          %s759 = sshll.u32 %s752, 4
          %s760 = int_to_ptr.vmem [resolvable:$true] %s759
          %765 = dma.hbm_to_vmem [thread:$0]  %s758, 16384, %s760, %s749, 256, 256, 16
        $region92: #{forward.3} parent=71 // pred_fallthru
          _
        // Predicated region
        $region93: #{forward.3} parent=71 // pred_check
          %p766 = pneg %p439
        $region94: #{forward.3} parent=71 // pred_check_branch
          %768 = sbr.rel (%p766) target = $region96
        $region95: #{forward.3} parent=71 // pred_region
          %p769 = scmp.lt.s32.totalorder %s37, 3
          %s770 = scalar_select %p769, %s37, 3
          %s771 = smul.addr %s770, 4
          %s772 = scalar_lea.vmem %s17, %s771
        $region96: #{forward.3} parent=71 // pred_fallthru
          _
        // Predicated region
        $region97: #{forward.3} parent=71 // pred_check
          %p773 = pneg %p465
        $region98: #{forward.3} parent=71 // pred_check_branch
          %775 = sbr.rel (%p773) target = $region100
        $region99: #{forward.3} parent=71 // pred_region
          %p776 = scmp.lt.s32.totalorder %s37, 3
          %s777 = scalar_select %p776, %s37, 3
          %s778 = smul.addr %s777, 64
          %s779 = smul.addr %s778, 4
          %s780 = scalar_lea.vmem %s18, %s779
        $region100: #{forward.3} parent=71 // pred_fallthru
          _
        // Predicated region
        $region101: #{forward.3} parent=71 // pred_check
          %p781 = pneg %p491
        $region102: #{forward.3} parent=71 // pred_check_branch
          %783 = sbr.rel (%p781) target = $region104
        $region103: #{forward.3} parent=71 // pred_region
          %p784 = scmp.lt.s32.totalorder %s37, 3
          %s785 = scalar_select %p784, %s37, 3
          %s786 = scalar_lea.vmem %s19, %s785
        $region104: #{forward.3} parent=71 // pred_fallthru
          _
        // Predicated region
        $region105: #{forward.3} parent=71 // pred_check
          %p787 = pneg %p517
        $region106: #{forward.3} parent=71 // pred_check_branch
          %789 = sbr.rel (%p787) target = $region108
        $region107: #{forward.3} parent=71 // pred_region
          %p790 = scmp.lt.s32.totalorder %s37, 3
          %s791 = scalar_select %p790, %s37, 3
          %s792 = smul.addr %s791, 64
          %s793 = smul.addr %s792, 4
          %s794 = scalar_lea.vmem %s20, %s793
        $region108: #{forward.3} parent=71 // pred_fallthru
          _
        // Predicated region
        $region109: #{forward.3} parent=71 // pred_check
          %p795 = pneg %p543
        $region110: #{forward.3} parent=71 // pred_check_branch
          %797 = sbr.rel (%p795) target = $region112
        $region111: #{forward.3} parent=71 // pred_region
          %p798 = scmp.lt.s32.totalorder %s37, 3
          %s799 = scalar_select %p798, %s37, 3
          %s800 = scalar_lea.vmem %s21, %s799
        $region112: #{forward.3} parent=71 // pred_fallthru
          _
      $region72: #{forward.3} parent=5 // pred_fallthru
        _
      %p801 = scmp.le.s32.totalorder 1, %s37
      %p802 = scmp.lt.s32.totalorder %s37, 5
      %p803 = pnand %p801, %p802
      %p804 = pneg %p803
      // Predicated region
      $region113: #{forward.3} parent=5 // pred_check
        _
      $region114: #{forward.3} parent=5 // pred_check_branch
        %806 = sbr.rel (%p803) target = $region116
      $region115: #{forward.3} parent=5 // pred_region
        %s807 = ssub.s32 %s37, 1
        %s808 = sand.u32 %s406, 1
        %s809 = scalar_lea.sflag [#allocation4], %s808
        %s810 = sand.u32 %s406, 1
        %s811 = smul.addr %s810, 1024
        %s812 = scalar_lea.vmem [#allocation3], %s811
        // Predicated region
        $region117: #{forward.3} parent=115 // pred_check
          %p813 = pneg %p419
        $region118: #{forward.3} parent=115 // pred_check_branch
          %815 = sbr.rel (%p813) target = $region120
        $region119: #{forward.3} parent=115 // pred_region
          %816 = dma.done %s809, 16384
        $region120: #{forward.3} parent=115 // pred_fallthru
          _
        %p817 = pneg %p58
        %p818 = pneg %p55
        %p819 = pneg %p79
        %p820 = pneg %p76
        %p821 = pneg %p100
        %p822 = pneg %p97
        %p823 = pneg %p121
        %p824 = pneg %p118
        %p825 = pneg %p142
        %p826 = pneg %p139
        %p827 = pneg %p163
        %p828 = pneg %p160
        %p829 = pneg %p184
        %p830 = pneg %p181
        %p831 = pneg %p205
        %p832 = pneg %p202
        %p833 = pneg %p226
        %p834 = pneg %p223
        %p835 = pneg %p247
        %p836 = pneg %p244
        %p837 = pneg %p268
        %p838 = pneg %p265
        %p839 = pneg %p289
        %p840 = pneg %p286
        %p841 = scmp.lt.s32.totalorder %s42, 3
        %s842 = scalar_select %p841, %s42, 3
        %s843 = smul.addr %s842, 16
        %s844 = smul.addr %s843, 4
        %s845 = scalar_lea.vmem %s12, %s844
        %p846 = pneg %p315
        %p847 = pneg %p312
        %p848 = scmp.lt.s32.totalorder %s42, 3
        %s849 = scalar_select %p848, %s42, 3
        %s850 = smul.addr %s849, 8
        %s851 = scalar_lea.vmem %s13, %s850
        %p852 = pneg %p341
        %p853 = pneg %p338
        %p854 = scmp.lt.s32.totalorder %s42, 3
        %s855 = scalar_select %p854, %s42, 3
        %s856 = smul.addr %s855, 256
        %s857 = smul.addr %s856, 4
        %s858 = scalar_lea.vmem %s14, %s857
        %p859 = pneg %p367
        %p860 = pneg %p364
        %p861 = scmp.lt.s32.totalorder %s42, 3
        %s862 = scalar_select %p861, %s42, 3
        %s863 = smul.addr %s862, 4
        %s864 = scalar_lea.vmem %s15, %s863
        %p865 = pneg %p393
        %p866 = pneg %p390
        %s867 = sand.u32 %s406, 1
        %s868 = scalar_lea.sflag [#allocation4], %s867
        %s869 = sand.u32 %s406, 1
        %s870 = smul.addr %s869, 1024
        %s871 = scalar_lea.vmem [#allocation3], %s870
        %p872 = pneg %p419
        %p873 = pneg %p416
        %p874 = scmp.lt.s32.totalorder %s42, 3
        %s875 = scalar_select %p874, %s42, 3
        %s876 = smul.addr %s875, 4
        %s877 = scalar_lea.vmem %s17, %s876
        %p878 = pneg %p445
        %p879 = pneg %p442
        %p880 = scmp.lt.s32.totalorder %s42, 3
        %s881 = scalar_select %p880, %s42, 3
        %s882 = smul.addr %s881, 64
        %s883 = smul.addr %s882, 4
        %s884 = scalar_lea.vmem %s18, %s883
        %p885 = pneg %p471
        %p886 = pneg %p468
        %p887 = scmp.lt.s32.totalorder %s42, 3
        %s888 = scalar_select %p887, %s42, 3
        %s889 = scalar_lea.vmem %s19, %s888
        %p890 = pneg %p497
        %p891 = pneg %p494
        %p892 = scmp.lt.s32.totalorder %s42, 3
        %s893 = scalar_select %p892, %s42, 3
        %s894 = smul.addr %s893, 64
        %s895 = smul.addr %s894, 4
        %s896 = scalar_lea.vmem %s20, %s895
        %p897 = pneg %p523
        %p898 = pneg %p520
        %p899 = scmp.lt.s32.totalorder %s42, 3
        %s900 = scalar_select %p899, %s42, 3
        %s901 = scalar_lea.vmem %s21, %s900
        %p902 = pneg %p549
        %p903 = pneg %p546
        %p904 = pneg %p570
        %p905 = pneg %p567
        %p906 = pneg %p591
        %p907 = pneg %p588
        %p908 = pneg %p612
        %p909 = pneg %p609
        %p910 = pneg %p633
        %p911 = pneg %p630
        %p912 = pneg %p654
        %p913 = pneg %p651
        %p914 = scmp.lt.s32.totalorder %s42, 3
        %s915 = scalar_select %p914, %s42, 3
        %s916 = smul.addr %s915, 16
        %s917 = smul.addr %s916, 4
        %s918 = scalar_lea.vmem %s12, %s917
        %p919 = scmp.lt.s32.totalorder %s42, 3
        %s920 = scalar_select %p919, %s42, 3
        %s921 = smul.addr %s920, 8
        %s922 = scalar_lea.vmem %s13, %s921
        %p923 = scmp.lt.s32.totalorder %s42, 3
        %s924 = scalar_select %p923, %s42, 3
        %s925 = smul.addr %s924, 256
        %s926 = smul.addr %s925, 4
        %s927 = scalar_lea.vmem %s14, %s926
        %p928 = scmp.lt.s32.totalorder %s42, 3
        %s929 = scalar_select %p928, %s42, 3
        %s930 = smul.addr %s929, 4
        %s931 = scalar_lea.vmem %s15, %s930
        %p932 = scmp.lt.s32.totalorder %s42, 3
        %s933 = scalar_select %p932, %s42, 3
        %s934 = smul.addr %s933, 4
        %s935 = scalar_lea.vmem %s17, %s934
        %p936 = scmp.lt.s32.totalorder %s42, 3
        %s937 = scalar_select %p936, %s42, 3
        %s938 = smul.addr %s937, 64
        %s939 = smul.addr %s938, 4
        %s940 = scalar_lea.vmem %s18, %s939
        %p941 = scmp.lt.s32.totalorder %s42, 3
        %s942 = scalar_select %p941, %s42, 3
        %s943 = scalar_lea.vmem %s19, %s942
        %p944 = scmp.lt.s32.totalorder %s42, 3
        %s945 = scalar_select %p944, %s42, 3
        %s946 = smul.addr %s945, 64
        %s947 = smul.addr %s946, 4
        %s948 = scalar_lea.vmem %s20, %s947
        %p949 = scmp.lt.s32.totalorder %s42, 3
        %s950 = scalar_select %p949, %s42, 3
        %s951 = scalar_lea.vmem %s21, %s950
        %p953 = scmp.eq.s32.totalorder %s42, 0
        // Predicated region
        $region121: #{forward.3} parent=115 // pred_check
          %p954 = pneg %p953
        $region122: #{forward.3} parent=115 // pred_check_branch
          %956 = sbr.rel (%p954) target = $region124
        $region123: #{forward.3} parent=115 // pred_region
          %v957 = vld [vmem:[%s0] sm:$0xff]
          %v958 = vld [vmem:[%s0 + $0x8] sm:$0xff]
          %v959 = vld [vmem:[%s0 + $0x10] sm:$0xff]
          %v960 = vld [vmem:[%s0 + $0x18] sm:$0xff]
          %v961 = vld [vmem:[%s0 + $0x20] sm:$0xff]
          %v962 = vld [vmem:[%s0 + $0x28] sm:$0xff]
          %v963 = vpack.c.bf16 %v957, %v957
          %v964 = vpack.c.bf16 %v958, %v958
          %v965 = vpack.c.bf16 %v959, %v959
          %v966 = vpack.c.bf16 %v960, %v960
          %v967 = vpack.c.bf16 %v961, %v961
          %v968 = vpack.c.bf16 %v962, %v962
          %v969 = vld [vmem:[%s3] sm:$0xf]
          %v970 = vld [vmem:[%s3 + $0x4] sm:$0xf]
          %v971 = vld [vmem:[%s3 + $0x8] sm:$0xf]
          %v972 = vld [vmem:[%s3 + $0xc] sm:$0xf]
          %v973 = vld [vmem:[%s3 + $0x10] sm:$0xf]
          %v974 = vld [vmem:[%s3 + $0x14] sm:$0xf]
          %v975 = vld [vmem:[%s3 + $0x18] sm:$0xf]
          %v976 = vld [vmem:[%s3 + $0x1c] sm:$0xf]
          %v977 = vld [vmem:[%s3 + $0x20] sm:$0xf]
          %v978 = vld [vmem:[%s3 + $0x24] sm:$0xf]
          %v979 = vld [vmem:[%s3 + $0x28] sm:$0xf]
          %v980 = vld [vmem:[%s3 + $0x2c] sm:$0xf]
          %v981 = vld [vmem:[%s3 + $0x30] sm:$0xf]
          %v982 = vld [vmem:[%s3 + $0x34] sm:$0xf]
          %v983 = vld [vmem:[%s3 + $0x38] sm:$0xf]
          %v984 = vld [vmem:[%s3 + $0x3c] sm:$0xf]
          %v985 = vld [vmem:[%s3 + $0x40] sm:$0xf]
          %v986 = vld [vmem:[%s3 + $0x44] sm:$0xf]
          %v987 = vld [vmem:[%s3 + $0x48] sm:$0xf]
          %v988 = vld [vmem:[%s3 + $0x4c] sm:$0xf]
          %v989 = vld [vmem:[%s3 + $0x50] sm:$0xf]
          %v990 = vld [vmem:[%s3 + $0x54] sm:$0xf]
          %v991 = vld [vmem:[%s3 + $0x58] sm:$0xf]
          %v992 = vld [vmem:[%s3 + $0x5c] sm:$0xf]
          %v993 = vld [vmem:[%s3 + $0x60] sm:$0xf]
          %v994 = vld [vmem:[%s3 + $0x64] sm:$0xf]
          %v995 = vld [vmem:[%s3 + $0x68] sm:$0xf]
          %v996 = vld [vmem:[%s3 + $0x6c] sm:$0xf]
          %v997 = vld [vmem:[%s3 + $0x70] sm:$0xf]
          %v998 = vld [vmem:[%s3 + $0x74] sm:$0xf]
          %v999 = vld [vmem:[%s3 + $0x78] sm:$0xf]
          %v1000 = vld [vmem:[%s3 + $0x7c] sm:$0xf]
          %v1001 = vld [vmem:[%s3 + $0x80] sm:$0xf]
          %v1002 = vld [vmem:[%s3 + $0x84] sm:$0xf]
          %v1003 = vld [vmem:[%s3 + $0x88] sm:$0xf]
          %v1004 = vld [vmem:[%s3 + $0x8c] sm:$0xf]
          %v1005 = vld [vmem:[%s3 + $0x90] sm:$0xf]
          %v1006 = vld [vmem:[%s3 + $0x94] sm:$0xf]
          %v1007 = vld [vmem:[%s3 + $0x98] sm:$0xf]
          %v1008 = vld [vmem:[%s3 + $0x9c] sm:$0xf]
          %v1009 = vld [vmem:[%s3 + $0xa0] sm:$0xf]
          %v1010 = vld [vmem:[%s3 + $0xa4] sm:$0xf]
          %v1011 = vld [vmem:[%s3 + $0xa8] sm:$0xf]
          %v1012 = vld [vmem:[%s3 + $0xac] sm:$0xf]
          %v1013 = vld [vmem:[%s3 + $0xb0] sm:$0xf]
          %v1014 = vld [vmem:[%s3 + $0xb4] sm:$0xf]
          %v1015 = vld [vmem:[%s3 + $0xb8] sm:$0xf]
          %v1016 = vld [vmem:[%s3 + $0xbc] sm:$0xf]
          %v1017 = vld [vmem:[%s3 + $0xc0] sm:$0xf]
          %v1018 = vld [vmem:[%s3 + $0xc4] sm:$0xf]
          %v1019 = vld [vmem:[%s3 + $0xc8] sm:$0xf]
          %v1020 = vld [vmem:[%s3 + $0xcc] sm:$0xf]
          %v1021 = vld [vmem:[%s3 + $0xd0] sm:$0xf]
          %v1022 = vld [vmem:[%s3 + $0xd4] sm:$0xf]
          %v1023 = vld [vmem:[%s3 + $0xd8] sm:$0xf]
          %v1024 = vld [vmem:[%s3 + $0xdc] sm:$0xf]
          %v1025 = vld [vmem:[%s3 + $0xe0] sm:$0xf]
          %v1026 = vld [vmem:[%s3 + $0xe4] sm:$0xf]
          %v1027 = vld [vmem:[%s3 + $0xe8] sm:$0xf]
          %v1028 = vld [vmem:[%s3 + $0xec] sm:$0xf]
          %v1029 = vld [vmem:[%s3 + $0xf0] sm:$0xf]
          %v1030 = vld [vmem:[%s3 + $0xf4] sm:$0xf]
          %v1031 = vld [vmem:[%s3 + $0xf8] sm:$0xf]
          %v1032 = vld [vmem:[%s3 + $0xfc] sm:$0xf]
          %v1033 = vld [vmem:[%s3 + $0x100] sm:$0xf]
          %v1034 = vld [vmem:[%s3 + $0x104] sm:$0xf]
          %v1035 = vld [vmem:[%s3 + $0x108] sm:$0xf]
          %v1036 = vld [vmem:[%s3 + $0x10c] sm:$0xf]
          %v1037 = vld [vmem:[%s3 + $0x110] sm:$0xf]
          %v1038 = vld [vmem:[%s3 + $0x114] sm:$0xf]
          %v1039 = vld [vmem:[%s3 + $0x118] sm:$0xf]
          %v1040 = vld [vmem:[%s3 + $0x11c] sm:$0xf]
          %v1041 = vld [vmem:[%s3 + $0x120] sm:$0xf]
          %v1042 = vld [vmem:[%s3 + $0x124] sm:$0xf]
          %v1043 = vld [vmem:[%s3 + $0x128] sm:$0xf]
          %v1044 = vld [vmem:[%s3 + $0x12c] sm:$0xf]
          %v1045 = vld [vmem:[%s3 + $0x130] sm:$0xf]
          %v1046 = vld [vmem:[%s3 + $0x134] sm:$0xf]
          %v1047 = vld [vmem:[%s3 + $0x138] sm:$0xf]
          %v1048 = vld [vmem:[%s3 + $0x13c] sm:$0xf]
          %v1049 = vld [vmem:[%s3 + $0x140] sm:$0xf]
          %v1050 = vld [vmem:[%s3 + $0x144] sm:$0xf]
          %v1051 = vld [vmem:[%s3 + $0x148] sm:$0xf]
          %v1052 = vld [vmem:[%s3 + $0x14c] sm:$0xf]
          %v1053 = vld [vmem:[%s3 + $0x150] sm:$0xf]
          %v1054 = vld [vmem:[%s3 + $0x154] sm:$0xf]
          %v1055 = vld [vmem:[%s3 + $0x158] sm:$0xf]
          %v1056 = vld [vmem:[%s3 + $0x15c] sm:$0xf]
          %v1057 = vld [vmem:[%s3 + $0x160] sm:$0xf]
          %v1058 = vld [vmem:[%s3 + $0x164] sm:$0xf]
          %v1059 = vld [vmem:[%s3 + $0x168] sm:$0xf]
          %v1060 = vld [vmem:[%s3 + $0x16c] sm:$0xf]
          %v1061 = vld [vmem:[%s3 + $0x170] sm:$0xf]
          %v1062 = vld [vmem:[%s3 + $0x174] sm:$0xf]
          %v1063 = vld [vmem:[%s3 + $0x178] sm:$0xf]
          %v1064 = vld [vmem:[%s3 + $0x17c] sm:$0xf]
          %v1065 = vld [vmem:[%s4] sm:$0x1]
          %v1067 = vlaneseq
          %v1068 = vshrl.u32 %v1067, 7
          %v1069 = vsub.s32 0, %v1068
          %v1070 = vrot.slane %v1065, %v1069
          %v1168 = vunpack.c.l.b16 %v969
          %v1169 = vunpack.c.l.b16 %v970
          %v1170 = vunpack.c.l.b16 %v971
          %v1171 = vunpack.c.l.b16 %v972
          %v1172 = vunpack.c.l.b16 %v973
          %v1173 = vunpack.c.l.b16 %v974
          %v1174 = vunpack.c.l.b16 %v975
          %v1175 = vunpack.c.l.b16 %v976
          %v1176 = vunpack.c.l.b16 %v977
          %v1177 = vunpack.c.l.b16 %v978
          %v1178 = vunpack.c.l.b16 %v979
          %v1179 = vunpack.c.l.b16 %v980
          %v1180 = vunpack.c.l.b16 %v981
          %v1181 = vunpack.c.l.b16 %v982
          %v1182 = vunpack.c.l.b16 %v983
          %v1183 = vunpack.c.l.b16 %v984
          %v1184 = vunpack.c.l.b16 %v985
          %v1185 = vunpack.c.l.b16 %v986
          %v1186 = vunpack.c.l.b16 %v987
          %v1187 = vunpack.c.l.b16 %v988
          %v1188 = vunpack.c.l.b16 %v989
          %v1189 = vunpack.c.l.b16 %v990
          %v1190 = vunpack.c.l.b16 %v991
          %v1191 = vunpack.c.l.b16 %v992
          %v1192 = vunpack.c.l.b16 %v993
          %v1193 = vunpack.c.l.b16 %v994
          %v1194 = vunpack.c.l.b16 %v995
          %v1195 = vunpack.c.l.b16 %v996
          %v1196 = vunpack.c.l.b16 %v997
          %v1197 = vunpack.c.l.b16 %v998
          %v1198 = vunpack.c.l.b16 %v999
          %v1199 = vunpack.c.l.b16 %v1000
          %v1200 = vunpack.c.l.b16 %v1001
          %v1201 = vunpack.c.l.b16 %v1002
          %v1202 = vunpack.c.l.b16 %v1003
          %v1203 = vunpack.c.l.b16 %v1004
          %v1204 = vunpack.c.l.b16 %v1005
          %v1205 = vunpack.c.l.b16 %v1006
          %v1206 = vunpack.c.l.b16 %v1007
          %v1207 = vunpack.c.l.b16 %v1008
          %v1208 = vunpack.c.l.b16 %v1009
          %v1209 = vunpack.c.l.b16 %v1010
          %v1210 = vunpack.c.l.b16 %v1011
          %v1211 = vunpack.c.l.b16 %v1012
          %v1212 = vunpack.c.l.b16 %v1013
          %v1213 = vunpack.c.l.b16 %v1014
          %v1214 = vunpack.c.l.b16 %v1015
          %v1215 = vunpack.c.l.b16 %v1016
          %v1216 = vunpack.c.l.b16 %v1017
          %v1217 = vunpack.c.l.b16 %v1018
          %v1218 = vunpack.c.l.b16 %v1019
          %v1219 = vunpack.c.l.b16 %v1020
          %v1220 = vunpack.c.l.b16 %v1021
          %v1221 = vunpack.c.l.b16 %v1022
          %v1222 = vunpack.c.l.b16 %v1023
          %v1223 = vunpack.c.l.b16 %v1024
          %v1224 = vunpack.c.l.b16 %v1025
          %v1225 = vunpack.c.l.b16 %v1026
          %v1226 = vunpack.c.l.b16 %v1027
          %v1227 = vunpack.c.l.b16 %v1028
          %v1228 = vunpack.c.l.b16 %v1029
          %v1229 = vunpack.c.l.b16 %v1030
          %v1230 = vunpack.c.l.b16 %v1031
          %v1231 = vunpack.c.l.b16 %v1032
          %v1232 = vunpack.c.l.b16 %v1033
          %v1233 = vunpack.c.l.b16 %v1034
          %v1234 = vunpack.c.l.b16 %v1035
          %v1235 = vunpack.c.l.b16 %v1036
          %v1236 = vunpack.c.l.b16 %v1037
          %v1237 = vunpack.c.l.b16 %v1038
          %v1238 = vunpack.c.l.b16 %v1039
          %v1239 = vunpack.c.l.b16 %v1040
          %v1240 = vunpack.c.l.b16 %v1041
          %v1241 = vunpack.c.l.b16 %v1042
          %v1242 = vunpack.c.l.b16 %v1043
          %v1243 = vunpack.c.l.b16 %v1044
          %v1244 = vunpack.c.l.b16 %v1045
          %v1245 = vunpack.c.l.b16 %v1046
          %v1246 = vunpack.c.l.b16 %v1047
          %v1247 = vunpack.c.l.b16 %v1048
          %v1248 = vunpack.c.l.b16 %v1049
          %v1249 = vunpack.c.l.b16 %v1050
          %v1250 = vunpack.c.l.b16 %v1051
          %v1251 = vunpack.c.l.b16 %v1052
          %v1252 = vunpack.c.l.b16 %v1053
          %v1253 = vunpack.c.l.b16 %v1054
          %v1254 = vunpack.c.l.b16 %v1055
          %v1255 = vunpack.c.l.b16 %v1056
          %v1256 = vunpack.c.l.b16 %v1057
          %v1257 = vunpack.c.l.b16 %v1058
          %v1258 = vunpack.c.l.b16 %v1059
          %v1259 = vunpack.c.l.b16 %v1060
          %v1260 = vunpack.c.l.b16 %v1061
          %v1261 = vunpack.c.l.b16 %v1062
          %v1262 = vunpack.c.l.b16 %v1063
          %v1263 = vunpack.c.l.b16 %v1064
          %v1264 = vpack.c.b16 %v1169, %v1168
          %v1265 = vpack.c.b16 %v1171, %v1170
          %v1266 = vpack.c.b16 %v1173, %v1172
          %v1267 = vpack.c.b16 %v1175, %v1174
          %v1268 = vpack.c.b16 %v1177, %v1176
          %v1269 = vpack.c.b16 %v1179, %v1178
          %v1270 = vpack.c.b16 %v1181, %v1180
          %v1271 = vpack.c.b16 %v1183, %v1182
          %v1272 = vpack.c.b16 %v1185, %v1184
          %v1273 = vpack.c.b16 %v1187, %v1186
          %v1274 = vpack.c.b16 %v1189, %v1188
          %v1275 = vpack.c.b16 %v1191, %v1190
          %v1276 = vpack.c.b16 %v1193, %v1192
          %v1277 = vpack.c.b16 %v1195, %v1194
          %v1278 = vpack.c.b16 %v1197, %v1196
          %v1279 = vpack.c.b16 %v1199, %v1198
          %v1280 = vpack.c.b16 %v1201, %v1200
          %v1281 = vpack.c.b16 %v1203, %v1202
          %v1282 = vpack.c.b16 %v1205, %v1204
          %v1283 = vpack.c.b16 %v1207, %v1206
          %v1284 = vpack.c.b16 %v1209, %v1208
          %v1285 = vpack.c.b16 %v1211, %v1210
          %v1286 = vpack.c.b16 %v1213, %v1212
          %v1287 = vpack.c.b16 %v1215, %v1214
          %v1288 = vpack.c.b16 %v1217, %v1216
          %v1289 = vpack.c.b16 %v1219, %v1218
          %v1290 = vpack.c.b16 %v1221, %v1220
          %v1291 = vpack.c.b16 %v1223, %v1222
          %v1292 = vpack.c.b16 %v1225, %v1224
          %v1293 = vpack.c.b16 %v1227, %v1226
          %v1294 = vpack.c.b16 %v1229, %v1228
          %v1295 = vpack.c.b16 %v1231, %v1230
          %v1296 = vpack.c.b16 %v1233, %v1232
          %v1297 = vpack.c.b16 %v1235, %v1234
          %v1298 = vpack.c.b16 %v1237, %v1236
          %v1299 = vpack.c.b16 %v1239, %v1238
          %v1300 = vpack.c.b16 %v1241, %v1240
          %v1301 = vpack.c.b16 %v1243, %v1242
          %v1302 = vpack.c.b16 %v1245, %v1244
          %v1303 = vpack.c.b16 %v1247, %v1246
          %v1304 = vpack.c.b16 %v1249, %v1248
          %v1305 = vpack.c.b16 %v1251, %v1250
          %v1306 = vpack.c.b16 %v1253, %v1252
          %v1307 = vpack.c.b16 %v1255, %v1254
          %v1308 = vpack.c.b16 %v1257, %v1256
          %v1309 = vpack.c.b16 %v1259, %v1258
          %v1310 = vpack.c.b16 %v1261, %v1260
          %v1311 = vpack.c.b16 %v1263, %v1262
          %1360 = vmatprep.subr.bf16.mxu0 0
          %1361 = vmatpush1.bf16.msra.mxu0 %v1264
          %1362 = vmatprep.subr.bf16.mxu0 0
          %1363 = vmatpush1.bf16.msra.mxu0 %v1265
          %1364 = vmatprep.subr.bf16.mxu0 0
          %1365 = vmatpush1.bf16.msra.mxu0 %v1266
          %1366 = vmatprep.subr.bf16.mxu0 0
          %1367 = vmatpush1.bf16.msra.mxu0 %v1267
          %1368 = vmatprep.subr.bf16.mxu0 0
          %1369 = vmatpush1.bf16.msra.mxu0 %v1268
          %1370 = vmatprep.subr.bf16.mxu0 0
          %1371 = vmatpush1.bf16.msra.mxu0 %v1269
          %1372 = vmatprep.subr.bf16.mxu0 0
          %1373 = vmatpush1.bf16.msra.mxu0 %v1270
          %1374 = vmatprep.subr.bf16.mxu0 0
          %1375 = vmatpush1.bf16.msra.mxu0 %v1271
          %1376 = vmatprep.subr.bf16.mxu0 0
          %1377 = vmatpush1.bf16.msra.mxu0 %v1272
          %1378 = vmatprep.subr.bf16.mxu0 0
          %1379 = vmatpush1.bf16.msra.mxu0 %v1273
          %1380 = vmatprep.subr.bf16.mxu0 0
          %1381 = vmatpush1.bf16.msra.mxu0 %v1274
          %1382 = vmatprep.subr.bf16.mxu0 0
          %1383 = vmatpush1.bf16.msra.mxu0 %v1275
          %1384 = vmatprep.subr.bf16.mxu0 0
          %1385 = vmatpush1.bf16.msra.mxu0 %v1276
          %1386 = vmatprep.subr.bf16.mxu0 0
          %1387 = vmatpush1.bf16.msra.mxu0 %v1277
          %1388 = vmatprep.subr.bf16.mxu0 0
          %1389 = vmatpush1.bf16.msra.mxu0 %v1278
          %1390 = vmatprep.subr.bf16.mxu0 0
          %1391 = vmatpush1.bf16.msra.mxu0 %v1279
          %1392 = vmatprep.mubr.bf16.mxu0 %v964
          %1393 = vmatmul.mubr.bf16.gmra.mrb[0].mxu0 %v963
          %v1394 = vpop.f32.mrb[0].mxu0
          %v1395 = vadd.f32 %v1070, %v1394
          %v1396 = vpop.f32.mrb[0].mxu0
          %v1397 = vpop.f32.mrb[0].mxu0
          %v1398 = vpop.f32.mrb[0].mxu0
          %1399 = vdwg.mxu0
          %1400 = vmatprep.subr.bf16.mxu0 0
          %1401 = vmatpush1.bf16.msra.mxu0 %v1280
          %1402 = vmatprep.subr.bf16.mxu0 0
          %1403 = vmatpush1.bf16.msra.mxu0 %v1281
          %1404 = vmatprep.subr.bf16.mxu0 0
          %1405 = vmatpush1.bf16.msra.mxu0 %v1282
          %1406 = vmatprep.subr.bf16.mxu0 0
          %1407 = vmatpush1.bf16.msra.mxu0 %v1283
          %1408 = vmatprep.subr.bf16.mxu0 0
          %1409 = vmatpush1.bf16.msra.mxu0 %v1284
          %1410 = vmatprep.subr.bf16.mxu0 0
          %1411 = vmatpush1.bf16.msra.mxu0 %v1285
          %1412 = vmatprep.subr.bf16.mxu0 0
          %1413 = vmatpush1.bf16.msra.mxu0 %v1286
          %1414 = vmatprep.subr.bf16.mxu0 0
          %1415 = vmatpush1.bf16.msra.mxu0 %v1287
          %1416 = vmatprep.subr.bf16.mxu0 0
          %1417 = vmatpush1.bf16.msra.mxu0 %v1288
          %1418 = vmatprep.subr.bf16.mxu0 0
          %1419 = vmatpush1.bf16.msra.mxu0 %v1289
          %1420 = vmatprep.subr.bf16.mxu0 0
          %1421 = vmatpush1.bf16.msra.mxu0 %v1290
          %1422 = vmatprep.subr.bf16.mxu0 0
          %1423 = vmatpush1.bf16.msra.mxu0 %v1291
          %1424 = vmatprep.subr.bf16.mxu0 0
          %1425 = vmatpush1.bf16.msra.mxu0 %v1292
          %1426 = vmatprep.subr.bf16.mxu0 0
          %1427 = vmatpush1.bf16.msra.mxu0 %v1293
          %1428 = vmatprep.subr.bf16.mxu0 0
          %1429 = vmatpush1.bf16.msra.mxu0 %v1294
          %1430 = vmatprep.subr.bf16.mxu0 0
          %1431 = vmatpush1.bf16.msra.mxu0 %v1295
          %1432 = vmatprep.mubr.bf16.mxu0 %v966
          %1433 = vmatmul.mubr.bf16.gmra.mrb[0].mxu0 %v965
          %v1434 = vpop.f32.mrb[0].mxu0
          %v1435 = vadd.f32 %v1395, %v1434
          %v1436 = vpop.f32.mrb[0].mxu0
          %v1437 = vpop.f32.mrb[0].mxu0
          %v1438 = vpop.f32.mrb[0].mxu0
          %1439 = vdwg.mxu0
          %1440 = vmatprep.subr.bf16.mxu0 0
          %1441 = vmatpush1.bf16.msra.mxu0 %v1296
          %1442 = vmatprep.subr.bf16.mxu0 0
          %1443 = vmatpush1.bf16.msra.mxu0 %v1297
          %1444 = vmatprep.subr.bf16.mxu0 0
          %1445 = vmatpush1.bf16.msra.mxu0 %v1298
          %1446 = vmatprep.subr.bf16.mxu0 0
          %1447 = vmatpush1.bf16.msra.mxu0 %v1299
          %1448 = vmatprep.subr.bf16.mxu0 0
          %1449 = vmatpush1.bf16.msra.mxu0 %v1300
          %1450 = vmatprep.subr.bf16.mxu0 0
          %1451 = vmatpush1.bf16.msra.mxu0 %v1301
          %1452 = vmatprep.subr.bf16.mxu0 0
          %1453 = vmatpush1.bf16.msra.mxu0 %v1302
          %1454 = vmatprep.subr.bf16.mxu0 0
          %1455 = vmatpush1.bf16.msra.mxu0 %v1303
          %1456 = vmatprep.subr.bf16.mxu0 0
          %1457 = vmatpush1.bf16.msra.mxu0 %v1304
          %1458 = vmatprep.subr.bf16.mxu0 0
          %1459 = vmatpush1.bf16.msra.mxu0 %v1305
          %1460 = vmatprep.subr.bf16.mxu0 0
          %1461 = vmatpush1.bf16.msra.mxu0 %v1306
          %1462 = vmatprep.subr.bf16.mxu0 0
          %1463 = vmatpush1.bf16.msra.mxu0 %v1307
          %1464 = vmatprep.subr.bf16.mxu0 0
          %1465 = vmatpush1.bf16.msra.mxu0 %v1308
          %1466 = vmatprep.subr.bf16.mxu0 0
          %1467 = vmatpush1.bf16.msra.mxu0 %v1309
          %1468 = vmatprep.subr.bf16.mxu0 0
          %1469 = vmatpush1.bf16.msra.mxu0 %v1310
          %1470 = vmatprep.subr.bf16.mxu0 0
          %1471 = vmatpush1.bf16.msra.mxu0 %v1311
          %1472 = vmatprep.mubr.bf16.mxu0 %v968
          %1473 = vmatmul.mubr.bf16.gmra.mrb[0].mxu0 %v967
          %v1474 = vpop.f32.mrb[0].mxu0
          %v1475 = vadd.f32 %v1435, %v1474
          %v1476 = vpop.f32.mrb[0].mxu0
          %v1477 = vpop.f32.mrb[0].mxu0
          %v1478 = vpop.f32.mrb[0].mxu0
          %1479 = vdwg.mxu0
          %v1480 = vlaneseq
          %v1481 = vshrl.u32 %v1480, 7
          %v1482 = vlaneseq
          %v1483 = vand.u32 %v1482, 127
          %v1484 = vmul.u32 %v1481, 4
          %vm1485 = vcmp.ge.s32.totalorder %v1483, %v1484
          %v1486 = vadd.s32 %v1481, 1
          %v1487 = vmul.u32 %v1486, 4
          %vm1488 = vcmp.lt.s32.totalorder %v1483, %v1487
          %vm1489 = vmand %vm1485, %vm1488
          %v1490 = vsel %vm1489, 0.25, 0.0
          %vm1491 = vcmask 64512
          %v1493 = vsel %vm1491, %v1490, 0
          %1495 = vmatprep.subr.mxu0 0.0
          %1496 = vmatpush1.msra.mxu0 %v1475
          %1497 = vmatprep.subr.mxu0 0.0
          %1498 = vmatpush1.msra.mxu0 0.0
          %1499 = vmatprep.subr.mxu0 0.0
          %1500 = vmatpush1.msra.mxu0 0.0
          %1501 = vmatprep.subr.mxu0 0.0
          %1502 = vmatpush1.msra.mxu0 0.0
          %1503 = vmatprep.subr.mxu0 0.0
          %1504 = vmatpush1.msra.mxu0 0.0
          %1505 = vmatprep.subr.mxu0 0.0
          %1506 = vmatpush1.msra.mxu0 0.0
          %1507 = vmatprep.subr.mxu0 0.0
          %1508 = vmatpush1.msra.mxu0 0.0
          %1509 = vmatprep.subr.mxu0 0.0
          %1510 = vmatpush1.msra.mxu0 0.0
          %1511 = vmatprep.subr.mxu0 0.0
          %1512 = vmatpush1.msra.mxu0 0.0
          %1513 = vmatprep.subr.mxu0 0.0
          %1514 = vmatpush1.msra.mxu0 0.0
          %1515 = vmatprep.subr.mxu0 0.0
          %1516 = vmatpush1.msra.mxu0 0.0
          %1517 = vmatprep.subr.mxu0 0.0
          %1518 = vmatpush1.msra.mxu0 0.0
          %1519 = vmatprep.subr.mxu0 0.0
          %1520 = vmatpush1.msra.mxu0 0.0
          %1521 = vmatprep.subr.mxu0 0.0
          %1522 = vmatpush1.msra.mxu0 0.0
          %1523 = vmatprep.subr.mxu0 0.0
          %1524 = vmatpush1.msra.mxu0 0.0
          %1525 = vmatprep.subr.mxu0 0.0
          %1526 = vmatpush1.msra.mxu0 0.0
          %1527 = vmatprep.subr.mxu0 0.0
          %1528 = vmatpush1.msra.mxu0 0.0
          %1529 = vmatprep.subr.mxu0 0.0
          %1530 = vmatpush1.msra.mxu0 0.0
          %1531 = vmatprep.subr.mxu0 0.0
          %1532 = vmatpush1.msra.mxu0 0.0
          %1533 = vmatprep.subr.mxu0 0.0
          %1534 = vmatpush1.msra.mxu0 0.0
          %1535 = vmatprep.subr.mxu0 0.0
          %1536 = vmatpush1.msra.mxu0 0.0
          %1537 = vmatprep.subr.mxu0 0.0
          %1538 = vmatpush1.msra.mxu0 0.0
          %1539 = vmatprep.subr.mxu0 0.0
          %1540 = vmatpush1.msra.mxu0 0.0
          %1541 = vmatprep.subr.mxu0 0.0
          %1542 = vmatpush1.msra.mxu0 0.0
          %1543 = vmatprep.subr.mxu0 0.0
          %1544 = vmatpush1.msra.mxu0 0.0
          %1545 = vmatprep.subr.mxu0 0.0
          %1546 = vmatpush1.msra.mxu0 0.0
          %1547 = vmatprep.subr.mxu0 0.0
          %1548 = vmatpush1.msra.mxu0 0.0
          %1549 = vmatprep.subr.mxu0 0.0
          %1550 = vmatpush1.msra.mxu0 0.0
          %1551 = vmatprep.subr.mxu0 0.0
          %1552 = vmatpush1.msra.mxu0 0.0
          %1553 = vmatprep.subr.mxu0 0.0
          %1554 = vmatpush1.msra.mxu0 0.0
          %1555 = vmatprep.subr.mxu0 0.0
          %1556 = vmatpush1.msra.mxu0 0.0
          %1557 = vmatprep.subr.mxu0 0.0
          %1558 = vmatpush1.msra.mxu0 0.0
          %1559 = vmatprep.mubr.f32.mxu0 0.0
          %1560 = vmatmul.mubr.f32.gmra.mrb[0].mxu0 %v1493
          %v1561 = vpop.f32.mrb[0].mxu0
          %v1562 = vadd.f32 0.0, %v1561
          %v1563 = vpop.f32.mrb[0].mxu0
          %1564 = vdwg.mxu0
          %v1565 = vld [vmem:[%s1] sm:$0x3]
          %v1566 = vld [vmem:[%s5] sm:$0xff]
          %v1567 = vld [vmem:[%s5 + $0x8] sm:$0xff]
          %v1568 = vld [vmem:[%s6] sm:$0x1]
          %v1570 = vlaneseq
          %v1571 = vshrl.u32 %v1570, 7
          %v1572 = vsub.s32 0, %v1571
          %v1573 = vrot.slane %v1568, %v1572
          %vm1575 = vcmask 130048
          %v1577 = vsel %vm1575, %v1565, 0
          %1579 = vmatprep.subr.mxu0 0.0
          %1580 = vmatpush1.msra.mxu0 %v1566
          %1581 = vmatprep.subr.mxu0 0.0
          %1582 = vmatpush1.msra.mxu0 %v1567
          %1583 = vmatprep.subr.mxu0 0.0
          %1584 = vmatpush1.msra.mxu0 0.0
          %1585 = vmatprep.subr.mxu0 0.0
          %1586 = vmatpush1.msra.mxu0 0.0
          %1587 = vmatprep.subr.mxu0 0.0
          %1588 = vmatpush1.msra.mxu0 0.0
          %1589 = vmatprep.subr.mxu0 0.0
          %1590 = vmatpush1.msra.mxu0 0.0
          %1591 = vmatprep.subr.mxu0 0.0
          %1592 = vmatpush1.msra.mxu0 0.0
          %1593 = vmatprep.subr.mxu0 0.0
          %1594 = vmatpush1.msra.mxu0 0.0
          %1595 = vmatprep.subr.mxu0 0.0
          %1596 = vmatpush1.msra.mxu0 0.0
          %1597 = vmatprep.subr.mxu0 0.0
          %1598 = vmatpush1.msra.mxu0 0.0
          %1599 = vmatprep.subr.mxu0 0.0
          %1600 = vmatpush1.msra.mxu0 0.0
          %1601 = vmatprep.subr.mxu0 0.0
          %1602 = vmatpush1.msra.mxu0 0.0
          %1603 = vmatprep.subr.mxu0 0.0
          %1604 = vmatpush1.msra.mxu0 0.0
          %1605 = vmatprep.subr.mxu0 0.0
          %1606 = vmatpush1.msra.mxu0 0.0
          %1607 = vmatprep.subr.mxu0 0.0
          %1608 = vmatpush1.msra.mxu0 0.0
          %1609 = vmatprep.subr.mxu0 0.0
          %1610 = vmatpush1.msra.mxu0 0.0
          %1611 = vmatprep.subr.mxu0 0.0
          %1612 = vmatpush1.msra.mxu0 0.0
          %1613 = vmatprep.subr.mxu0 0.0
          %1614 = vmatpush1.msra.mxu0 0.0
          %1615 = vmatprep.subr.mxu0 0.0
          %1616 = vmatpush1.msra.mxu0 0.0
          %1617 = vmatprep.subr.mxu0 0.0
          %1618 = vmatpush1.msra.mxu0 0.0
          %1619 = vmatprep.subr.mxu0 0.0
          %1620 = vmatpush1.msra.mxu0 0.0
          %1621 = vmatprep.subr.mxu0 0.0
          %1622 = vmatpush1.msra.mxu0 0.0
          %1623 = vmatprep.subr.mxu0 0.0
          %1624 = vmatpush1.msra.mxu0 0.0
          %1625 = vmatprep.subr.mxu0 0.0
          %1626 = vmatpush1.msra.mxu0 0.0
          %1627 = vmatprep.subr.mxu0 0.0
          %1628 = vmatpush1.msra.mxu0 0.0
          %1629 = vmatprep.subr.mxu0 0.0
          %1630 = vmatpush1.msra.mxu0 0.0
          %1631 = vmatprep.subr.mxu0 0.0
          %1632 = vmatpush1.msra.mxu0 0.0
          %1633 = vmatprep.subr.mxu0 0.0
          %1634 = vmatpush1.msra.mxu0 0.0
          %1635 = vmatprep.subr.mxu0 0.0
          %1636 = vmatpush1.msra.mxu0 0.0
          %1637 = vmatprep.subr.mxu0 0.0
          %1638 = vmatpush1.msra.mxu0 0.0
          %1639 = vmatprep.subr.mxu0 0.0
          %1640 = vmatpush1.msra.mxu0 0.0
          %1641 = vmatprep.subr.mxu0 0.0
          %1642 = vmatpush1.msra.mxu0 0.0
          %1643 = vmatprep.mubr.f32.mxu0 0.0
          %1644 = vmatmul.mubr.f32.gmra.mrb[0].mxu0 %v1577
          %v1645 = vpop.f32.mrb[0].mxu0
          %v1646 = vadd.f32 %v1573, %v1645
          %v1647 = vpop.f32.mrb[0].mxu0
          %1648 = vdwg.mxu0
          %v1649 = vsub.f32 0.0, %v1646
          %v1650 = vmul.f32 %v1649, 1.442695
          %v1651 = vpow.pop %v1650
          %v1652 = vadd.f32 %v1651, 1.0
          %v1653 = vrcp.pop %v1652
          %v1654 = vmul.f32 %v1646, %v1653
          %v1655 = vld [vmem:[%s7] sm:$0xff]
          %v1656 = vld [vmem:[%s7 + $0x8] sm:$0xff]
          %v1657 = vld [vmem:[%s7 + $0x10] sm:$0xff]
          %v1658 = vld [vmem:[%s7 + $0x18] sm:$0xff]
          %v1659 = vld [vmem:[%s8] sm:$0x1]
          %v1661 = vlaneseq
          %v1662 = vshrl.u32 %v1661, 7
          %v1663 = vsub.s32 0, %v1662
          %v1664 = vrot.slane %v1659, %v1663
          %vm1666 = vcmask 261120
          %v1668 = vsel %vm1666, %v1654, 0
          %1670 = vmatprep.subr.mxu0 0.0
          %1671 = vmatpush1.msra.mxu0 %v1655
          %1672 = vmatprep.subr.mxu0 0.0
          %1673 = vmatpush1.msra.mxu0 %v1656
          %1674 = vmatprep.subr.mxu0 0.0
          %1675 = vmatpush1.msra.mxu0 %v1657
          %1676 = vmatprep.subr.mxu0 0.0
          %1677 = vmatpush1.msra.mxu0 %v1658
          %1678 = vmatprep.subr.mxu0 0.0
          %1679 = vmatpush1.msra.mxu0 0.0
          %1680 = vmatprep.subr.mxu0 0.0
          %1681 = vmatpush1.msra.mxu0 0.0
          %1682 = vmatprep.subr.mxu0 0.0
          %1683 = vmatpush1.msra.mxu0 0.0
          %1684 = vmatprep.subr.mxu0 0.0
          %1685 = vmatpush1.msra.mxu0 0.0
          %1686 = vmatprep.subr.mxu0 0.0
          %1687 = vmatpush1.msra.mxu0 0.0
          %1688 = vmatprep.subr.mxu0 0.0
          %1689 = vmatpush1.msra.mxu0 0.0
          %1690 = vmatprep.subr.mxu0 0.0
          %1691 = vmatpush1.msra.mxu0 0.0
          %1692 = vmatprep.subr.mxu0 0.0
          %1693 = vmatpush1.msra.mxu0 0.0
          %1694 = vmatprep.subr.mxu0 0.0
          %1695 = vmatpush1.msra.mxu0 0.0
          %1696 = vmatprep.subr.mxu0 0.0
          %1697 = vmatpush1.msra.mxu0 0.0
          %1698 = vmatprep.subr.mxu0 0.0
          %1699 = vmatpush1.msra.mxu0 0.0
          %1700 = vmatprep.subr.mxu0 0.0
          %1701 = vmatpush1.msra.mxu0 0.0
          %1702 = vmatprep.subr.mxu0 0.0
          %1703 = vmatpush1.msra.mxu0 0.0
          %1704 = vmatprep.subr.mxu0 0.0
          %1705 = vmatpush1.msra.mxu0 0.0
          %1706 = vmatprep.subr.mxu0 0.0
          %1707 = vmatpush1.msra.mxu0 0.0
          %1708 = vmatprep.subr.mxu0 0.0
          %1709 = vmatpush1.msra.mxu0 0.0
          %1710 = vmatprep.subr.mxu0 0.0
          %1711 = vmatpush1.msra.mxu0 0.0
          %1712 = vmatprep.subr.mxu0 0.0
          %1713 = vmatpush1.msra.mxu0 0.0
          %1714 = vmatprep.subr.mxu0 0.0
          %1715 = vmatpush1.msra.mxu0 0.0
          %1716 = vmatprep.subr.mxu0 0.0
          %1717 = vmatpush1.msra.mxu0 0.0
          %1718 = vmatprep.subr.mxu0 0.0
          %1719 = vmatpush1.msra.mxu0 0.0
          %1720 = vmatprep.subr.mxu0 0.0
          %1721 = vmatpush1.msra.mxu0 0.0
          %1722 = vmatprep.subr.mxu0 0.0
          %1723 = vmatpush1.msra.mxu0 0.0
          %1724 = vmatprep.subr.mxu0 0.0
          %1725 = vmatpush1.msra.mxu0 0.0
          %1726 = vmatprep.subr.mxu0 0.0
          %1727 = vmatpush1.msra.mxu0 0.0
          %1728 = vmatprep.subr.mxu0 0.0
          %1729 = vmatpush1.msra.mxu0 0.0
          %1730 = vmatprep.subr.mxu0 0.0
          %1731 = vmatpush1.msra.mxu0 0.0
          %1732 = vmatprep.subr.mxu0 0.0
          %1733 = vmatpush1.msra.mxu0 0.0
          %1734 = vmatprep.mubr.f32.mxu0 0.0
          %1735 = vmatmul.mubr.f32.gmra.mrb[0].mxu0 %v1668
          %v1736 = vpop.f32.mrb[0].mxu0
          %v1737 = vadd.f32 %v1664, %v1736
          %v1738 = vpop.f32.mrb[0].mxu0
          %1739 = vdwg.mxu0
          %v1740 = vld [vmem:[%s9] sm:$0xff]
          %v1741 = vld [vmem:[%s9 + $0x8] sm:$0xff]
          %v1742 = vld [vmem:[%s9 + $0x10] sm:$0xff]
          %v1743 = vld [vmem:[%s9 + $0x18] sm:$0xff]
          %v1744 = vld [vmem:[%s9 + $0x20] sm:$0xff]
          %v1745 = vld [vmem:[%s9 + $0x28] sm:$0xff]
          %v1746 = vld [vmem:[%s9 + $0x30] sm:$0xff]
          %v1747 = vld [vmem:[%s9 + $0x38] sm:$0xff]
          %v1748 = vld [vmem:[%s10] sm:$0xff]
          %v1749 = vld [vmem:[%s10 + $0x8] sm:$0xff]
          %v1750 = vld [vmem:[%s10 + $0x10] sm:$0xff]
          %v1751 = vld [vmem:[%s10 + $0x18] sm:$0xff]
          %v1753 = vsel %vm1666, %v1737, 0
          %1755 = vmatprep.subr.mxu0 0.0
          %1756 = vmatpush1.msra.mxu0 %v1748
          %1757 = vmatprep.subr.mxu0 0.0
          %1758 = vmatpush1.msra.mxu0 %v1749
          %1759 = vmatprep.subr.mxu0 0.0
          %1760 = vmatpush1.msra.mxu0 %v1750
          %1761 = vmatprep.subr.mxu0 0.0
          %1762 = vmatpush1.msra.mxu0 %v1751
          %1763 = vmatprep.subr.mxu0 0.0
          %1764 = vmatpush1.msra.mxu0 0.0
          %1765 = vmatprep.subr.mxu0 0.0
          %1766 = vmatpush1.msra.mxu0 0.0
          %1767 = vmatprep.subr.mxu0 0.0
          %1768 = vmatpush1.msra.mxu0 0.0
          %1769 = vmatprep.subr.mxu0 0.0
          %1770 = vmatpush1.msra.mxu0 0.0
          %1771 = vmatprep.subr.mxu0 0.0
          %1772 = vmatpush1.msra.mxu0 0.0
          %1773 = vmatprep.subr.mxu0 0.0
          %1774 = vmatpush1.msra.mxu0 0.0
          %1775 = vmatprep.subr.mxu0 0.0
          %1776 = vmatpush1.msra.mxu0 0.0
          %1777 = vmatprep.subr.mxu0 0.0
          %1778 = vmatpush1.msra.mxu0 0.0
          %1779 = vmatprep.subr.mxu0 0.0
          %1780 = vmatpush1.msra.mxu0 0.0
          %1781 = vmatprep.subr.mxu0 0.0
          %1782 = vmatpush1.msra.mxu0 0.0
          %1783 = vmatprep.subr.mxu0 0.0
          %1784 = vmatpush1.msra.mxu0 0.0
          %1785 = vmatprep.subr.mxu0 0.0
          %1786 = vmatpush1.msra.mxu0 0.0
          %1787 = vmatprep.subr.mxu0 0.0
          %1788 = vmatpush1.msra.mxu0 0.0
          %1789 = vmatprep.subr.mxu0 0.0
          %1790 = vmatpush1.msra.mxu0 0.0
          %1791 = vmatprep.subr.mxu0 0.0
          %1792 = vmatpush1.msra.mxu0 0.0
          %1793 = vmatprep.subr.mxu0 0.0
          %1794 = vmatpush1.msra.mxu0 0.0
          %1795 = vmatprep.subr.mxu0 0.0
          %1796 = vmatpush1.msra.mxu0 0.0
          %1797 = vmatprep.subr.mxu0 0.0
          %1798 = vmatpush1.msra.mxu0 0.0
          %1799 = vmatprep.subr.mxu0 0.0
          %1800 = vmatpush1.msra.mxu0 0.0
          %1801 = vmatprep.subr.mxu0 0.0
          %1802 = vmatpush1.msra.mxu0 0.0
          %1803 = vmatprep.subr.mxu0 0.0
          %1804 = vmatpush1.msra.mxu0 0.0
          %1805 = vmatprep.subr.mxu0 0.0
          %1806 = vmatpush1.msra.mxu0 0.0
          %1807 = vmatprep.subr.mxu0 0.0
          %1808 = vmatpush1.msra.mxu0 0.0
          %1809 = vmatprep.subr.mxu0 0.0
          %1810 = vmatpush1.msra.mxu0 0.0
          %1811 = vmatprep.subr.mxu0 0.0
          %1812 = vmatpush1.msra.mxu0 0.0
          %1813 = vmatprep.subr.mxu0 0.0
          %1814 = vmatpush1.msra.mxu0 0.0
          %1815 = vmatprep.subr.mxu0 0.0
          %1816 = vmatpush1.msra.mxu0 0.0
          %1817 = vmatprep.subr.mxu0 0.0
          %1818 = vmatpush1.msra.mxu0 0.0
          %1819 = vmatprep.mubr.f32.mxu0 0.0
          %1820 = vmatmul.mubr.f32.gmra.mrb[0].mxu0 %v1753
          %v1821 = vpop.f32.mrb[0].mxu0
          %v1822 = vadd.f32 0.0, %v1821
          %v1823 = vpop.f32.mrb[0].mxu0
          %1824 = vdwg.mxu0
          %vm1825 = vcmask 523264
          %v1827 = vsel %vm1825, %v1562, 0
          %1829 = vmatprep.subr.mxu0 0.0
          %1830 = vmatpush1.msra.mxu0 %v1740
          %1831 = vmatprep.subr.mxu0 0.0
          %1832 = vmatpush1.msra.mxu0 %v1741
          %1833 = vmatprep.subr.mxu0 0.0
          %1834 = vmatpush1.msra.mxu0 %v1742
          %1835 = vmatprep.subr.mxu0 0.0
          %1836 = vmatpush1.msra.mxu0 %v1743
          %1837 = vmatprep.subr.mxu0 0.0
          %1838 = vmatpush1.msra.mxu0 %v1744
          %1839 = vmatprep.subr.mxu0 0.0
          %1840 = vmatpush1.msra.mxu0 %v1745
          %1841 = vmatprep.subr.mxu0 0.0
          %1842 = vmatpush1.msra.mxu0 %v1746
          %1843 = vmatprep.subr.mxu0 0.0
          %1844 = vmatpush1.msra.mxu0 %v1747
          %1845 = vmatprep.subr.mxu0 0.0
          %1846 = vmatpush1.msra.mxu0 0.0
          %1847 = vmatprep.subr.mxu0 0.0
          %1848 = vmatpush1.msra.mxu0 0.0
          %1849 = vmatprep.subr.mxu0 0.0
          %1850 = vmatpush1.msra.mxu0 0.0
          %1851 = vmatprep.subr.mxu0 0.0
          %1852 = vmatpush1.msra.mxu0 0.0
          %1853 = vmatprep.subr.mxu0 0.0
          %1854 = vmatpush1.msra.mxu0 0.0
          %1855 = vmatprep.subr.mxu0 0.0
          %1856 = vmatpush1.msra.mxu0 0.0
          %1857 = vmatprep.subr.mxu0 0.0
          %1858 = vmatpush1.msra.mxu0 0.0
          %1859 = vmatprep.subr.mxu0 0.0
          %1860 = vmatpush1.msra.mxu0 0.0
          %1861 = vmatprep.subr.mxu0 0.0
          %1862 = vmatpush1.msra.mxu0 0.0
          %1863 = vmatprep.subr.mxu0 0.0
          %1864 = vmatpush1.msra.mxu0 0.0
          %1865 = vmatprep.subr.mxu0 0.0
          %1866 = vmatpush1.msra.mxu0 0.0
          %1867 = vmatprep.subr.mxu0 0.0
          %1868 = vmatpush1.msra.mxu0 0.0
          %1869 = vmatprep.subr.mxu0 0.0
          %1870 = vmatpush1.msra.mxu0 0.0
          %1871 = vmatprep.subr.mxu0 0.0
          %1872 = vmatpush1.msra.mxu0 0.0
          %1873 = vmatprep.subr.mxu0 0.0
          %1874 = vmatpush1.msra.mxu0 0.0
          %1875 = vmatprep.subr.mxu0 0.0
          %1876 = vmatpush1.msra.mxu0 0.0
          %1877 = vmatprep.subr.mxu0 0.0
          %1878 = vmatpush1.msra.mxu0 0.0
          %1879 = vmatprep.subr.mxu0 0.0
          %1880 = vmatpush1.msra.mxu0 0.0
          %1881 = vmatprep.subr.mxu0 0.0
          %1882 = vmatpush1.msra.mxu0 0.0
          %1883 = vmatprep.subr.mxu0 0.0
          %1884 = vmatpush1.msra.mxu0 0.0
          %1885 = vmatprep.subr.mxu0 0.0
          %1886 = vmatpush1.msra.mxu0 0.0
          %1887 = vmatprep.subr.mxu0 0.0
          %1888 = vmatpush1.msra.mxu0 0.0
          %1889 = vmatprep.subr.mxu0 0.0
          %1890 = vmatpush1.msra.mxu0 0.0
          %1891 = vmatprep.subr.mxu0 0.0
          %1892 = vmatpush1.msra.mxu0 0.0
          %1893 = vmatprep.mubr.f32.mxu0 0.0
          %1894 = vmatmul.mubr.f32.gmra.mrb[0].mxu0 %v1827
          %v1895 = vpop.f32.mrb[0].mxu0
          %v1896 = vadd.f32 %v1822, %v1895
          %v1897 = vpop.f32.mrb[0].mxu0
          %1898 = vdwg.mxu0
          %v1899 = vld [vmem:[%s11] sm:$0x1]
          %v1901 = vlaneseq
          %v1902 = vshrl.u32 %v1901, 7
          %v1903 = vsub.s32 0, %v1902
          %v1904 = vrot.slane %v1899, %v1903
          %v1906 = vadd.f32 %v1896, %v1904
          %v1907 = vmul.f32 %v1906, 0.5
          %v1908 = vmul.f32 %v1907, 1.442695
          %v1909 = vpow.pop %v1908
          %vm1910 = vcmask 123904
          %1911 = vst.msk [vmem:[#allocation6] sm:$0x3] %vm1910, %v1906
          %1913 = vrot.lane.b32.xlu0 %v1906, 112
          %v1914 = vpop.permute.xlu0 %1913
          %1916 = vst.msk [vmem:[%s25] sm:$0x3] %vm1910, %v1914
          %v1917 = vld [vmem:[%s2] sm:$0x3]
          %1919 = vrot.lane.b32.xlu0 %v1917, 16
          %v1920 = vpop.permute.xlu0 %1919
          %v1922 = vmul.f32 %v1909, %v1920
          %1924 = vrot.lane.b32.xlu0 %v1922, 112
          %v1925 = vpop.permute.xlu0 %1924
          %v1927 = vadd.f32 %v1906, %v1925
          %1928 = vst.msk [vmem:[#allocation2] sm:$0x3] %vm1910, %v1927
        $region124: #{forward.3} parent=115 // pred_fallthru
          _
        %v1929 = vld [vmem:[#allocation2] sm:$0x3]
        %v1930 = vlaneseq
        %v1931 = vand.u32 %v1930, 127
        %v1932 = vand.u32 %v1931, 1
        %s1933 = sand.u32 %s42, 1
        %v1934 = vstv %s1933
        %vm1935 = vcmp.eq.s32.totalorder %v1932, %v1934
        %v1936 = vsel %vm1935, 1, 0
        %v1937 = vcvt.s32.f32 %v1936
        %v1938 = vmul.f32 %v1929, %v1937
        %v1939 = vpack.c.bf16 %v1938, %v1938
        %v1940 = vld [vmem:[%s918] sm:$0xff]
        %v1941 = vld [vmem:[%s918 + $0x8] sm:$0xff]
        %v1942 = vld [vmem:[%s918 + $0x10] sm:$0xff]
        %v1943 = vld [vmem:[%s918 + $0x18] sm:$0xff]
        %v1944 = vld [vmem:[%s918 + $0x20] sm:$0xff]
        %v1945 = vld [vmem:[%s918 + $0x28] sm:$0xff]
        %v1946 = vld [vmem:[%s918 + $0x30] sm:$0xff]
        %v1947 = vld [vmem:[%s918 + $0x38] sm:$0xff]
        %v1948 = vld [vmem:[%s922] sm:$0xff]
        %v1950 = vlaneseq
        %v1951 = vshrl.u32 %v1950, 7
        %v1952 = vsub.s32 0, %v1951
        %v1953 = vrot.slane %v1948, %v1952
        %v1954 = vlaneseq
        %v1955 = vshrl.u32 %v1954, 7
        %v1956 = vsub.s32 1, %v1955
        %v1957 = vrot.slane %v1948, %v1956
        %v1958 = vlaneseq
        %v1959 = vshrl.u32 %v1958, 7
        %v1960 = vsub.s32 2, %v1959
        %v1961 = vrot.slane %v1948, %v1960
        %v1962 = vlaneseq
        %v1963 = vshrl.u32 %v1962, 7
        %v1964 = vsub.s32 3, %v1963
        %v1965 = vrot.slane %v1948, %v1964
        %v1966 = vlaneseq
        %v1967 = vshrl.u32 %v1966, 7
        %v1968 = vsub.s32 4, %v1967
        %v1969 = vrot.slane %v1948, %v1968
        %v1970 = vlaneseq
        %v1971 = vshrl.u32 %v1970, 7
        %v1972 = vsub.s32 5, %v1971
        %v1973 = vrot.slane %v1948, %v1972
        %v1974 = vlaneseq
        %v1975 = vshrl.u32 %v1974, 7
        %v1976 = vsub.s32 6, %v1975
        %v1977 = vrot.slane %v1948, %v1976
        %v1978 = vlaneseq
        %v1979 = vshrl.u32 %v1978, 7
        %v1980 = vsub.s32 7, %v1979
        %v1981 = vrot.slane %v1948, %v1980
        %v1998 = vunpack.c.l.b16 %v1940
        %v1999 = vunpack.c.h.b16 %v1940
        %v2000 = vunpack.c.l.b16 %v1941
        %v2001 = vunpack.c.h.b16 %v1941
        %v2002 = vunpack.c.l.b16 %v1942
        %v2003 = vunpack.c.h.b16 %v1942
        %v2004 = vunpack.c.l.b16 %v1943
        %v2005 = vunpack.c.h.b16 %v1943
        %v2006 = vunpack.c.l.b16 %v1944
        %v2007 = vunpack.c.h.b16 %v1944
        %v2008 = vunpack.c.l.b16 %v1945
        %v2009 = vunpack.c.h.b16 %v1945
        %v2010 = vunpack.c.l.b16 %v1946
        %v2011 = vunpack.c.h.b16 %v1946
        %v2012 = vunpack.c.l.b16 %v1947
        %v2013 = vunpack.c.h.b16 %v1947
        %v2014 = vpack.c.b16 %v2006, %v1998
        %v2015 = vpack.c.b16 %v2007, %v1999
        %v2016 = vpack.c.b16 %v2008, %v2000
        %v2017 = vpack.c.b16 %v2009, %v2001
        %v2018 = vpack.c.b16 %v2010, %v2002
        %v2019 = vpack.c.b16 %v2011, %v2003
        %v2020 = vpack.c.b16 %v2012, %v2004
        %v2021 = vpack.c.b16 %v2013, %v2005
        %vm2030 = vcmask 130048
        %v2032 = vsel %vm2030, %v1939, 0
        %2034 = vmatprep.subr.bf16.mxu0 %v2015
        %2035 = vmatpush1.bf16.msra.mxu0 %v2014
        %2036 = vmatprep.subr.bf16.mxu0 0
        %2037 = vmatpush1.bf16.msra.mxu0 0
        %2038 = vmatprep.subr.bf16.mxu0 0
        %2039 = vmatpush1.bf16.msra.mxu0 0
        %2040 = vmatprep.subr.bf16.mxu0 0
        %2041 = vmatpush1.bf16.msra.mxu0 0
        %2042 = vmatprep.subr.bf16.mxu0 0
        %2043 = vmatpush1.bf16.msra.mxu0 0
        %2044 = vmatprep.subr.bf16.mxu0 0
        %2045 = vmatpush1.bf16.msra.mxu0 0
        %2046 = vmatprep.subr.bf16.mxu0 0
        %2047 = vmatpush1.bf16.msra.mxu0 0
        %2048 = vmatprep.subr.bf16.mxu0 0
        %2049 = vmatpush1.bf16.msra.mxu0 0
        %2050 = vmatprep.subr.bf16.mxu0 0
        %2051 = vmatpush1.bf16.msra.mxu0 0
        %2052 = vmatprep.subr.bf16.mxu0 0
        %2053 = vmatpush1.bf16.msra.mxu0 0
        %2054 = vmatprep.subr.bf16.mxu0 0
        %2055 = vmatpush1.bf16.msra.mxu0 0
        %2056 = vmatprep.subr.bf16.mxu0 0
        %2057 = vmatpush1.bf16.msra.mxu0 0
        %2058 = vmatprep.subr.bf16.mxu0 0
        %2059 = vmatpush1.bf16.msra.mxu0 0
        %2060 = vmatprep.subr.bf16.mxu0 0
        %2061 = vmatpush1.bf16.msra.mxu0 0
        %2062 = vmatprep.subr.bf16.mxu0 0
        %2063 = vmatpush1.bf16.msra.mxu0 0
        %2064 = vmatprep.subr.bf16.mxu0 0
        %2065 = vmatpush1.bf16.msra.mxu0 0
        %2066 = vmatprep.mubr.bf16.mxu0 0
        %2067 = vmatmul.mubr.bf16.gmra.mrb[0].mxu0 %v2032
        %v2068 = vpop.f32.mrb[0].mxu0
        %v2069 = vadd.f32 %v1953, %v2068
        %v2070 = vpop.f32.mrb[0].mxu0
        %v2071 = vadd.f32 %v1957, %v2070
        %v2072 = vpop.f32.mrb[0].mxu0
        %v2073 = vpop.f32.mrb[0].mxu0
        %2074 = vdwg.mxu0
        %2075 = vmatprep.subr.bf16.mxu0 %v2017
        %2076 = vmatpush1.bf16.msra.mxu0 %v2016
        %2077 = vmatprep.subr.bf16.mxu0 0
        %2078 = vmatpush1.bf16.msra.mxu0 0
        %2079 = vmatprep.subr.bf16.mxu0 0
        %2080 = vmatpush1.bf16.msra.mxu0 0
        %2081 = vmatprep.subr.bf16.mxu0 0
        %2082 = vmatpush1.bf16.msra.mxu0 0
        %2083 = vmatprep.subr.bf16.mxu0 0
        %2084 = vmatpush1.bf16.msra.mxu0 0
        %2085 = vmatprep.subr.bf16.mxu0 0
        %2086 = vmatpush1.bf16.msra.mxu0 0
        %2087 = vmatprep.subr.bf16.mxu0 0
        %2088 = vmatpush1.bf16.msra.mxu0 0
        %2089 = vmatprep.subr.bf16.mxu0 0
        %2090 = vmatpush1.bf16.msra.mxu0 0
        %2091 = vmatprep.subr.bf16.mxu0 0
        %2092 = vmatpush1.bf16.msra.mxu0 0
        %2093 = vmatprep.subr.bf16.mxu0 0
        %2094 = vmatpush1.bf16.msra.mxu0 0
        %2095 = vmatprep.subr.bf16.mxu0 0
        %2096 = vmatpush1.bf16.msra.mxu0 0
        %2097 = vmatprep.subr.bf16.mxu0 0
        %2098 = vmatpush1.bf16.msra.mxu0 0
        %2099 = vmatprep.subr.bf16.mxu0 0
        %2100 = vmatpush1.bf16.msra.mxu0 0
        %2101 = vmatprep.subr.bf16.mxu0 0
        %2102 = vmatpush1.bf16.msra.mxu0 0
        %2103 = vmatprep.subr.bf16.mxu0 0
        %2104 = vmatpush1.bf16.msra.mxu0 0
        %2105 = vmatprep.subr.bf16.mxu0 0
        %2106 = vmatpush1.bf16.msra.mxu0 0
        %2107 = vmatprep.mubr.bf16.mxu0 0
        %2108 = vmatmul.mubr.bf16.gmra.mrb[0].mxu0 %v2032
        %v2109 = vpop.f32.mrb[0].mxu0
        %v2110 = vadd.f32 %v1961, %v2109
        %v2111 = vpop.f32.mrb[0].mxu0
        %v2112 = vadd.f32 %v1965, %v2111
        %v2113 = vpop.f32.mrb[0].mxu0
        %v2114 = vpop.f32.mrb[0].mxu0
        %2115 = vdwg.mxu0
        %2116 = vmatprep.subr.bf16.mxu0 %v2019
        %2117 = vmatpush1.bf16.msra.mxu0 %v2018
        %2118 = vmatprep.subr.bf16.mxu0 0
        %2119 = vmatpush1.bf16.msra.mxu0 0
        %2120 = vmatprep.subr.bf16.mxu0 0
        %2121 = vmatpush1.bf16.msra.mxu0 0
        %2122 = vmatprep.subr.bf16.mxu0 0
        %2123 = vmatpush1.bf16.msra.mxu0 0
        %2124 = vmatprep.subr.bf16.mxu0 0
        %2125 = vmatpush1.bf16.msra.mxu0 0
        %2126 = vmatprep.subr.bf16.mxu0 0
        %2127 = vmatpush1.bf16.msra.mxu0 0
        %2128 = vmatprep.subr.bf16.mxu0 0
        %2129 = vmatpush1.bf16.msra.mxu0 0
        %2130 = vmatprep.subr.bf16.mxu0 0
        %2131 = vmatpush1.bf16.msra.mxu0 0
        %2132 = vmatprep.subr.bf16.mxu0 0
        %2133 = vmatpush1.bf16.msra.mxu0 0
        %2134 = vmatprep.subr.bf16.mxu0 0
        %2135 = vmatpush1.bf16.msra.mxu0 0
        %2136 = vmatprep.subr.bf16.mxu0 0
        %2137 = vmatpush1.bf16.msra.mxu0 0
        %2138 = vmatprep.subr.bf16.mxu0 0
        %2139 = vmatpush1.bf16.msra.mxu0 0
        %2140 = vmatprep.subr.bf16.mxu0 0
        %2141 = vmatpush1.bf16.msra.mxu0 0
        %2142 = vmatprep.subr.bf16.mxu0 0
        %2143 = vmatpush1.bf16.msra.mxu0 0
        %2144 = vmatprep.subr.bf16.mxu0 0
        %2145 = vmatpush1.bf16.msra.mxu0 0
        %2146 = vmatprep.subr.bf16.mxu0 0
        %2147 = vmatpush1.bf16.msra.mxu0 0
        %2148 = vmatprep.mubr.bf16.mxu0 0
        %2149 = vmatmul.mubr.bf16.gmra.mrb[0].mxu0 %v2032
        %v2150 = vpop.f32.mrb[0].mxu0
        %v2151 = vadd.f32 %v1969, %v2150
        %v2152 = vpop.f32.mrb[0].mxu0
        %v2153 = vadd.f32 %v1973, %v2152
        %v2154 = vpop.f32.mrb[0].mxu0
        %v2155 = vpop.f32.mrb[0].mxu0
        %2156 = vdwg.mxu0
        %2157 = vmatprep.subr.bf16.mxu0 %v2021
        %2158 = vmatpush1.bf16.msra.mxu0 %v2020
        %2159 = vmatprep.subr.bf16.mxu0 0
        %2160 = vmatpush1.bf16.msra.mxu0 0
        %2161 = vmatprep.subr.bf16.mxu0 0
        %2162 = vmatpush1.bf16.msra.mxu0 0
        %2163 = vmatprep.subr.bf16.mxu0 0
        %2164 = vmatpush1.bf16.msra.mxu0 0
        %2165 = vmatprep.subr.bf16.mxu0 0
        %2166 = vmatpush1.bf16.msra.mxu0 0
        %2167 = vmatprep.subr.bf16.mxu0 0
        %2168 = vmatpush1.bf16.msra.mxu0 0
        %2169 = vmatprep.subr.bf16.mxu0 0
        %2170 = vmatpush1.bf16.msra.mxu0 0
        %2171 = vmatprep.subr.bf16.mxu0 0
        %2172 = vmatpush1.bf16.msra.mxu0 0
        %2173 = vmatprep.subr.bf16.mxu0 0
        %2174 = vmatpush1.bf16.msra.mxu0 0
        %2175 = vmatprep.subr.bf16.mxu0 0
        %2176 = vmatpush1.bf16.msra.mxu0 0
        %2177 = vmatprep.subr.bf16.mxu0 0
        %2178 = vmatpush1.bf16.msra.mxu0 0
        %2179 = vmatprep.subr.bf16.mxu0 0
        %2180 = vmatpush1.bf16.msra.mxu0 0
        %2181 = vmatprep.subr.bf16.mxu0 0
        %2182 = vmatpush1.bf16.msra.mxu0 0
        %2183 = vmatprep.subr.bf16.mxu0 0
        %2184 = vmatpush1.bf16.msra.mxu0 0
        %2185 = vmatprep.subr.bf16.mxu0 0
        %2186 = vmatpush1.bf16.msra.mxu0 0
        %2187 = vmatprep.subr.bf16.mxu0 0
        %2188 = vmatpush1.bf16.msra.mxu0 0
        %2189 = vmatprep.mubr.bf16.mxu0 0
        %2190 = vmatmul.mubr.bf16.gmra.mrb[0].mxu0 %v2032
        %v2191 = vpop.f32.mrb[0].mxu0
        %v2192 = vadd.f32 %v1977, %v2191
        %v2193 = vpop.f32.mrb[0].mxu0
        %v2194 = vadd.f32 %v1981, %v2193
        %v2195 = vpop.f32.mrb[0].mxu0
        %v2196 = vpop.f32.mrb[0].mxu0
        %2197 = vdwg.mxu0
        %v2198 = vmax.f32 %v2069, 0.0
        %v2199 = vmax.f32 %v2071, 0.0
        %v2200 = vmax.f32 %v2110, 0.0
        %v2201 = vmax.f32 %v2112, 0.0
        %v2202 = vmax.f32 %v2151, 0.0
        %v2203 = vmax.f32 %v2153, 0.0
        %v2204 = vmax.f32 %v2192, 0.0
        %v2205 = vmax.f32 %v2194, 0.0
        %v2206 = vpack.c.bf16 %v2198, %v2198
        %v2207 = vpack.c.bf16 %v2199, %v2199
        %v2208 = vpack.c.bf16 %v2200, %v2200
        %v2209 = vpack.c.bf16 %v2201, %v2201
        %v2210 = vld [vmem:[%s927] sm:$0xff]
        %v2211 = vld [vmem:[%s927 + $0x8] sm:$0xff]
        %v2212 = vld [vmem:[%s927 + $0x10] sm:$0xff]
        %v2213 = vld [vmem:[%s927 + $0x18] sm:$0xff]
        %v2214 = vld [vmem:[%s927 + $0x20] sm:$0xff]
        %v2215 = vld [vmem:[%s927 + $0x28] sm:$0xff]
        %v2216 = vld [vmem:[%s927 + $0x30] sm:$0xff]
        %v2217 = vld [vmem:[%s927 + $0x38] sm:$0xff]
        %v2218 = vld [vmem:[%s927 + $0x40] sm:$0xff]
        %v2219 = vld [vmem:[%s927 + $0x48] sm:$0xff]
        %v2220 = vld [vmem:[%s927 + $0x50] sm:$0xff]
        %v2221 = vld [vmem:[%s927 + $0x58] sm:$0xff]
        %v2222 = vld [vmem:[%s927 + $0x60] sm:$0xff]
        %v2223 = vld [vmem:[%s927 + $0x68] sm:$0xff]
        %v2224 = vld [vmem:[%s927 + $0x70] sm:$0xff]
        %v2225 = vld [vmem:[%s927 + $0x78] sm:$0xff]
        %v2226 = vld [vmem:[%s927 + $0x80] sm:$0xff]
        %v2227 = vld [vmem:[%s927 + $0x88] sm:$0xff]
        %v2228 = vld [vmem:[%s927 + $0x90] sm:$0xff]
        %v2229 = vld [vmem:[%s927 + $0x98] sm:$0xff]
        %v2230 = vld [vmem:[%s927 + $0xa0] sm:$0xff]
        %v2231 = vld [vmem:[%s927 + $0xa8] sm:$0xff]
        %v2232 = vld [vmem:[%s927 + $0xb0] sm:$0xff]
        %v2233 = vld [vmem:[%s927 + $0xb8] sm:$0xff]
        %v2234 = vld [vmem:[%s927 + $0xc0] sm:$0xff]
        %v2235 = vld [vmem:[%s927 + $0xc8] sm:$0xff]
        %v2236 = vld [vmem:[%s927 + $0xd0] sm:$0xff]
        %v2237 = vld [vmem:[%s927 + $0xd8] sm:$0xff]
        %v2238 = vld [vmem:[%s927 + $0xe0] sm:$0xff]
        %v2239 = vld [vmem:[%s927 + $0xe8] sm:$0xff]
        %v2240 = vld [vmem:[%s927 + $0xf0] sm:$0xff]
        %v2241 = vld [vmem:[%s927 + $0xf8] sm:$0xff]
        %v2242 = vld [vmem:[%s927 + $0x100] sm:$0xff]
        %v2243 = vld [vmem:[%s927 + $0x108] sm:$0xff]
        %v2244 = vld [vmem:[%s927 + $0x110] sm:$0xff]
        %v2245 = vld [vmem:[%s927 + $0x118] sm:$0xff]
        %v2246 = vld [vmem:[%s927 + $0x120] sm:$0xff]
        %v2247 = vld [vmem:[%s927 + $0x128] sm:$0xff]
        %v2248 = vld [vmem:[%s927 + $0x130] sm:$0xff]
        %v2249 = vld [vmem:[%s927 + $0x138] sm:$0xff]
        %v2250 = vld [vmem:[%s927 + $0x140] sm:$0xff]
        %v2251 = vld [vmem:[%s927 + $0x148] sm:$0xff]
        %v2252 = vld [vmem:[%s927 + $0x150] sm:$0xff]
        %v2253 = vld [vmem:[%s927 + $0x158] sm:$0xff]
        %v2254 = vld [vmem:[%s927 + $0x160] sm:$0xff]
        %v2255 = vld [vmem:[%s927 + $0x168] sm:$0xff]
        %v2256 = vld [vmem:[%s927 + $0x170] sm:$0xff]
        %v2257 = vld [vmem:[%s927 + $0x178] sm:$0xff]
        %v2258 = vld [vmem:[%s927 + $0x180] sm:$0xff]
        %v2259 = vld [vmem:[%s927 + $0x188] sm:$0xff]
        %v2260 = vld [vmem:[%s927 + $0x190] sm:$0xff]
        %v2261 = vld [vmem:[%s927 + $0x198] sm:$0xff]
        %v2262 = vld [vmem:[%s927 + $0x1a0] sm:$0xff]
        %v2263 = vld [vmem:[%s927 + $0x1a8] sm:$0xff]
        %v2264 = vld [vmem:[%s927 + $0x1b0] sm:$0xff]
        %v2265 = vld [vmem:[%s927 + $0x1b8] sm:$0xff]
        %v2266 = vld [vmem:[%s927 + $0x1c0] sm:$0xff]
        %v2267 = vld [vmem:[%s927 + $0x1c8] sm:$0xff]
        %v2268 = vld [vmem:[%s927 + $0x1d0] sm:$0xff]
        %v2269 = vld [vmem:[%s927 + $0x1d8] sm:$0xff]
        %v2270 = vld [vmem:[%s927 + $0x1e0] sm:$0xff]
        %v2271 = vld [vmem:[%s927 + $0x1e8] sm:$0xff]
        %v2272 = vld [vmem:[%s927 + $0x1f0] sm:$0xff]
        %v2273 = vld [vmem:[%s927 + $0x1f8] sm:$0xff]
        %v2274 = vld [vmem:[%s927 + $0x200] sm:$0xff]
        %v2275 = vld [vmem:[%s927 + $0x208] sm:$0xff]
        %v2276 = vld [vmem:[%s927 + $0x210] sm:$0xff]
        %v2277 = vld [vmem:[%s927 + $0x218] sm:$0xff]
        %v2278 = vld [vmem:[%s927 + $0x220] sm:$0xff]
        %v2279 = vld [vmem:[%s927 + $0x228] sm:$0xff]
        %v2280 = vld [vmem:[%s927 + $0x230] sm:$0xff]
        %v2281 = vld [vmem:[%s927 + $0x238] sm:$0xff]
        %v2282 = vld [vmem:[%s927 + $0x240] sm:$0xff]
        %v2283 = vld [vmem:[%s927 + $0x248] sm:$0xff]
        %v2284 = vld [vmem:[%s927 + $0x250] sm:$0xff]
        %v2285 = vld [vmem:[%s927 + $0x258] sm:$0xff]
        %v2286 = vld [vmem:[%s927 + $0x260] sm:$0xff]
        %v2287 = vld [vmem:[%s927 + $0x268] sm:$0xff]
        %v2288 = vld [vmem:[%s927 + $0x270] sm:$0xff]
        %v2289 = vld [vmem:[%s927 + $0x278] sm:$0xff]
        %v2290 = vld [vmem:[%s927 + $0x280] sm:$0xff]
        %v2291 = vld [vmem:[%s927 + $0x288] sm:$0xff]
        %v2292 = vld [vmem:[%s927 + $0x290] sm:$0xff]
        %v2293 = vld [vmem:[%s927 + $0x298] sm:$0xff]
        %v2294 = vld [vmem:[%s927 + $0x2a0] sm:$0xff]
        %v2295 = vld [vmem:[%s927 + $0x2a8] sm:$0xff]
        %v2296 = vld [vmem:[%s927 + $0x2b0] sm:$0xff]
        %v2297 = vld [vmem:[%s927 + $0x2b8] sm:$0xff]
        %v2298 = vld [vmem:[%s927 + $0x2c0] sm:$0xff]
        %v2299 = vld [vmem:[%s927 + $0x2c8] sm:$0xff]
        %v2300 = vld [vmem:[%s927 + $0x2d0] sm:$0xff]
        %v2301 = vld [vmem:[%s927 + $0x2d8] sm:$0xff]
        %v2302 = vld [vmem:[%s927 + $0x2e0] sm:$0xff]
        %v2303 = vld [vmem:[%s927 + $0x2e8] sm:$0xff]
        %v2304 = vld [vmem:[%s927 + $0x2f0] sm:$0xff]
        %v2305 = vld [vmem:[%s927 + $0x2f8] sm:$0xff]
        %v2306 = vld [vmem:[%s927 + $0x300] sm:$0xff]
        %v2307 = vld [vmem:[%s927 + $0x308] sm:$0xff]
        %v2308 = vld [vmem:[%s927 + $0x310] sm:$0xff]
        %v2309 = vld [vmem:[%s927 + $0x318] sm:$0xff]
        %v2310 = vld [vmem:[%s927 + $0x320] sm:$0xff]
        %v2311 = vld [vmem:[%s927 + $0x328] sm:$0xff]
        %v2312 = vld [vmem:[%s927 + $0x330] sm:$0xff]
        %v2313 = vld [vmem:[%s927 + $0x338] sm:$0xff]
        %v2314 = vld [vmem:[%s927 + $0x340] sm:$0xff]
        %v2315 = vld [vmem:[%s927 + $0x348] sm:$0xff]
        %v2316 = vld [vmem:[%s927 + $0x350] sm:$0xff]
        %v2317 = vld [vmem:[%s927 + $0x358] sm:$0xff]
        %v2318 = vld [vmem:[%s927 + $0x360] sm:$0xff]
        %v2319 = vld [vmem:[%s927 + $0x368] sm:$0xff]
        %v2320 = vld [vmem:[%s927 + $0x370] sm:$0xff]
        %v2321 = vld [vmem:[%s927 + $0x378] sm:$0xff]
        %v2322 = vld [vmem:[%s927 + $0x380] sm:$0xff]
        %v2323 = vld [vmem:[%s927 + $0x388] sm:$0xff]
        %v2324 = vld [vmem:[%s927 + $0x390] sm:$0xff]
        %v2325 = vld [vmem:[%s927 + $0x398] sm:$0xff]
        %v2326 = vld [vmem:[%s927 + $0x3a0] sm:$0xff]
        %v2327 = vld [vmem:[%s927 + $0x3a8] sm:$0xff]
        %v2328 = vld [vmem:[%s927 + $0x3b0] sm:$0xff]
        %v2329 = vld [vmem:[%s927 + $0x3b8] sm:$0xff]
        %v2330 = vld [vmem:[%s927 + $0x3c0] sm:$0xff]
        %v2331 = vld [vmem:[%s927 + $0x3c8] sm:$0xff]
        %v2332 = vld [vmem:[%s927 + $0x3d0] sm:$0xff]
        %v2333 = vld [vmem:[%s927 + $0x3d8] sm:$0xff]
        %v2334 = vld [vmem:[%s927 + $0x3e0] sm:$0xff]
        %v2335 = vld [vmem:[%s927 + $0x3e8] sm:$0xff]
        %v2336 = vld [vmem:[%s927 + $0x3f0] sm:$0xff]
        %v2337 = vld [vmem:[%s927 + $0x3f8] sm:$0xff]
        %v2338 = vld [vmem:[%s931] sm:$0xf]
        %v2340 = vlaneseq
        %v2341 = vshrl.u32 %v2340, 7
        %v2342 = vsub.s32 0, %v2341
        %v2343 = vrot.slane %v2338, %v2342
        %v2344 = vlaneseq
        %v2345 = vshrl.u32 %v2344, 7
        %v2346 = vsub.s32 1, %v2345
        %v2347 = vrot.slane %v2338, %v2346
        %v2348 = vlaneseq
        %v2349 = vshrl.u32 %v2348, 7
        %v2350 = vsub.s32 2, %v2349
        %v2351 = vrot.slane %v2338, %v2350
        %v2352 = vlaneseq
        %v2353 = vshrl.u32 %v2352, 7
        %v2354 = vsub.s32 3, %v2353
        %v2355 = vrot.slane %v2338, %v2354
        %v2488 = vunpack.c.l.b16 %v2210
        %v2489 = vunpack.c.h.b16 %v2210
        %v2490 = vunpack.c.l.b16 %v2211
        %v2491 = vunpack.c.h.b16 %v2211
        %v2492 = vunpack.c.l.b16 %v2212
        %v2493 = vunpack.c.h.b16 %v2212
        %v2494 = vunpack.c.l.b16 %v2213
        %v2495 = vunpack.c.h.b16 %v2213
        %v2496 = vunpack.c.l.b16 %v2214
        %v2497 = vunpack.c.h.b16 %v2214
        %v2498 = vunpack.c.l.b16 %v2215
        %v2499 = vunpack.c.h.b16 %v2215
        %v2500 = vunpack.c.l.b16 %v2216
        %v2501 = vunpack.c.h.b16 %v2216
        %v2502 = vunpack.c.l.b16 %v2217
        %v2503 = vunpack.c.h.b16 %v2217
        %v2504 = vunpack.c.l.b16 %v2218
        %v2505 = vunpack.c.h.b16 %v2218
        %v2506 = vunpack.c.l.b16 %v2219
        %v2507 = vunpack.c.h.b16 %v2219
        %v2508 = vunpack.c.l.b16 %v2220
        %v2509 = vunpack.c.h.b16 %v2220
        %v2510 = vunpack.c.l.b16 %v2221
        %v2511 = vunpack.c.h.b16 %v2221
        %v2512 = vunpack.c.l.b16 %v2222
        %v2513 = vunpack.c.h.b16 %v2222
        %v2514 = vunpack.c.l.b16 %v2223
        %v2515 = vunpack.c.h.b16 %v2223
        %v2516 = vunpack.c.l.b16 %v2224
        %v2517 = vunpack.c.h.b16 %v2224
        %v2518 = vunpack.c.l.b16 %v2225
        %v2519 = vunpack.c.h.b16 %v2225
        %v2520 = vunpack.c.l.b16 %v2226
        %v2521 = vunpack.c.h.b16 %v2226
        %v2522 = vunpack.c.l.b16 %v2227
        %v2523 = vunpack.c.h.b16 %v2227
        %v2524 = vunpack.c.l.b16 %v2228
        %v2525 = vunpack.c.h.b16 %v2228
        %v2526 = vunpack.c.l.b16 %v2229
        %v2527 = vunpack.c.h.b16 %v2229
        %v2528 = vunpack.c.l.b16 %v2230
        %v2529 = vunpack.c.h.b16 %v2230
        %v2530 = vunpack.c.l.b16 %v2231
        %v2531 = vunpack.c.h.b16 %v2231
        %v2532 = vunpack.c.l.b16 %v2232
        %v2533 = vunpack.c.h.b16 %v2232
        %v2534 = vunpack.c.l.b16 %v2233
        %v2535 = vunpack.c.h.b16 %v2233
        %v2536 = vunpack.c.l.b16 %v2234
        %v2537 = vunpack.c.h.b16 %v2234
        %v2538 = vunpack.c.l.b16 %v2235
        %v2539 = vunpack.c.h.b16 %v2235
        %v2540 = vunpack.c.l.b16 %v2236
        %v2541 = vunpack.c.h.b16 %v2236
        %v2542 = vunpack.c.l.b16 %v2237
        %v2543 = vunpack.c.h.b16 %v2237
        %v2544 = vunpack.c.l.b16 %v2238
        %v2545 = vunpack.c.h.b16 %v2238
        %v2546 = vunpack.c.l.b16 %v2239
        %v2547 = vunpack.c.h.b16 %v2239
        %v2548 = vunpack.c.l.b16 %v2240
        %v2549 = vunpack.c.h.b16 %v2240
        %v2550 = vunpack.c.l.b16 %v2241
        %v2551 = vunpack.c.h.b16 %v2241
        %v2552 = vunpack.c.l.b16 %v2242
        %v2553 = vunpack.c.h.b16 %v2242
        %v2554 = vunpack.c.l.b16 %v2243
        %v2555 = vunpack.c.h.b16 %v2243
        %v2556 = vunpack.c.l.b16 %v2244
        %v2557 = vunpack.c.h.b16 %v2244
        %v2558 = vunpack.c.l.b16 %v2245
        %v2559 = vunpack.c.h.b16 %v2245
        %v2560 = vunpack.c.l.b16 %v2246
        %v2561 = vunpack.c.h.b16 %v2246
        %v2562 = vunpack.c.l.b16 %v2247
        %v2563 = vunpack.c.h.b16 %v2247
        %v2564 = vunpack.c.l.b16 %v2248
        %v2565 = vunpack.c.h.b16 %v2248
        %v2566 = vunpack.c.l.b16 %v2249
        %v2567 = vunpack.c.h.b16 %v2249
        %v2568 = vunpack.c.l.b16 %v2250
        %v2569 = vunpack.c.h.b16 %v2250
        %v2570 = vunpack.c.l.b16 %v2251
        %v2571 = vunpack.c.h.b16 %v2251
        %v2572 = vunpack.c.l.b16 %v2252
        %v2573 = vunpack.c.h.b16 %v2252
        %v2574 = vunpack.c.l.b16 %v2253
        %v2575 = vunpack.c.h.b16 %v2253
        %v2576 = vunpack.c.l.b16 %v2254
        %v2577 = vunpack.c.h.b16 %v2254
        %v2578 = vunpack.c.l.b16 %v2255
        %v2579 = vunpack.c.h.b16 %v2255
        %v2580 = vunpack.c.l.b16 %v2256
        %v2581 = vunpack.c.h.b16 %v2256
        %v2582 = vunpack.c.l.b16 %v2257
        %v2583 = vunpack.c.h.b16 %v2257
        %v2584 = vunpack.c.l.b16 %v2258
        %v2585 = vunpack.c.h.b16 %v2258
        %v2586 = vunpack.c.l.b16 %v2259
        %v2587 = vunpack.c.h.b16 %v2259
        %v2588 = vunpack.c.l.b16 %v2260
        %v2589 = vunpack.c.h.b16 %v2260
        %v2590 = vunpack.c.l.b16 %v2261
        %v2591 = vunpack.c.h.b16 %v2261
        %v2592 = vunpack.c.l.b16 %v2262
        %v2593 = vunpack.c.h.b16 %v2262
        %v2594 = vunpack.c.l.b16 %v2263
        %v2595 = vunpack.c.h.b16 %v2263
        %v2596 = vunpack.c.l.b16 %v2264
        %v2597 = vunpack.c.h.b16 %v2264
        %v2598 = vunpack.c.l.b16 %v2265
        %v2599 = vunpack.c.h.b16 %v2265
        %v2600 = vunpack.c.l.b16 %v2266
        %v2601 = vunpack.c.h.b16 %v2266
        %v2602 = vunpack.c.l.b16 %v2267
        %v2603 = vunpack.c.h.b16 %v2267
        %v2604 = vunpack.c.l.b16 %v2268
        %v2605 = vunpack.c.h.b16 %v2268
        %v2606 = vunpack.c.l.b16 %v2269
        %v2607 = vunpack.c.h.b16 %v2269
        %v2608 = vunpack.c.l.b16 %v2270
        %v2609 = vunpack.c.h.b16 %v2270
        %v2610 = vunpack.c.l.b16 %v2271
        %v2611 = vunpack.c.h.b16 %v2271
        %v2612 = vunpack.c.l.b16 %v2272
        %v2613 = vunpack.c.h.b16 %v2272
        %v2614 = vunpack.c.l.b16 %v2273
        %v2615 = vunpack.c.h.b16 %v2273
        %v2616 = vunpack.c.l.b16 %v2274
        %v2617 = vunpack.c.h.b16 %v2274
        %v2618 = vunpack.c.l.b16 %v2275
        %v2619 = vunpack.c.h.b16 %v2275
        %v2620 = vunpack.c.l.b16 %v2276
        %v2621 = vunpack.c.h.b16 %v2276
        %v2622 = vunpack.c.l.b16 %v2277
        %v2623 = vunpack.c.h.b16 %v2277
        %v2624 = vunpack.c.l.b16 %v2278
        %v2625 = vunpack.c.h.b16 %v2278
        %v2626 = vunpack.c.l.b16 %v2279
        %v2627 = vunpack.c.h.b16 %v2279
        %v2628 = vunpack.c.l.b16 %v2280
        %v2629 = vunpack.c.h.b16 %v2280
        %v2630 = vunpack.c.l.b16 %v2281
        %v2631 = vunpack.c.h.b16 %v2281
        %v2632 = vunpack.c.l.b16 %v2282
        %v2633 = vunpack.c.h.b16 %v2282
        %v2634 = vunpack.c.l.b16 %v2283
        %v2635 = vunpack.c.h.b16 %v2283
        %v2636 = vunpack.c.l.b16 %v2284
        %v2637 = vunpack.c.h.b16 %v2284
        %v2638 = vunpack.c.l.b16 %v2285
        %v2639 = vunpack.c.h.b16 %v2285
        %v2640 = vunpack.c.l.b16 %v2286
        %v2641 = vunpack.c.h.b16 %v2286
        %v2642 = vunpack.c.l.b16 %v2287
        %v2643 = vunpack.c.h.b16 %v2287
        %v2644 = vunpack.c.l.b16 %v2288
        %v2645 = vunpack.c.h.b16 %v2288
        %v2646 = vunpack.c.l.b16 %v2289
        %v2647 = vunpack.c.h.b16 %v2289
        %v2648 = vunpack.c.l.b16 %v2290
        %v2649 = vunpack.c.h.b16 %v2290
        %v2650 = vunpack.c.l.b16 %v2291
        %v2651 = vunpack.c.h.b16 %v2291
        %v2652 = vunpack.c.l.b16 %v2292
        %v2653 = vunpack.c.h.b16 %v2292
        %v2654 = vunpack.c.l.b16 %v2293
        %v2655 = vunpack.c.h.b16 %v2293
        %v2656 = vunpack.c.l.b16 %v2294
        %v2657 = vunpack.c.h.b16 %v2294
        %v2658 = vunpack.c.l.b16 %v2295
        %v2659 = vunpack.c.h.b16 %v2295
        %v2660 = vunpack.c.l.b16 %v2296
        %v2661 = vunpack.c.h.b16 %v2296
        %v2662 = vunpack.c.l.b16 %v2297
        %v2663 = vunpack.c.h.b16 %v2297
        %v2664 = vunpack.c.l.b16 %v2298
        %v2665 = vunpack.c.h.b16 %v2298
        %v2666 = vunpack.c.l.b16 %v2299
        %v2667 = vunpack.c.h.b16 %v2299
        %v2668 = vunpack.c.l.b16 %v2300
        %v2669 = vunpack.c.h.b16 %v2300
        %v2670 = vunpack.c.l.b16 %v2301
        %v2671 = vunpack.c.h.b16 %v2301
        %v2672 = vunpack.c.l.b16 %v2302
        %v2673 = vunpack.c.h.b16 %v2302
        %v2674 = vunpack.c.l.b16 %v2303
        %v2675 = vunpack.c.h.b16 %v2303
        %v2676 = vunpack.c.l.b16 %v2304
        %v2677 = vunpack.c.h.b16 %v2304
        %v2678 = vunpack.c.l.b16 %v2305
        %v2679 = vunpack.c.h.b16 %v2305
        %v2680 = vunpack.c.l.b16 %v2306
        %v2681 = vunpack.c.h.b16 %v2306
        %v2682 = vunpack.c.l.b16 %v2307
        %v2683 = vunpack.c.h.b16 %v2307
        %v2684 = vunpack.c.l.b16 %v2308
        %v2685 = vunpack.c.h.b16 %v2308
        %v2686 = vunpack.c.l.b16 %v2309
        %v2687 = vunpack.c.h.b16 %v2309
        %v2688 = vunpack.c.l.b16 %v2310
        %v2689 = vunpack.c.h.b16 %v2310
        %v2690 = vunpack.c.l.b16 %v2311
        %v2691 = vunpack.c.h.b16 %v2311
        %v2692 = vunpack.c.l.b16 %v2312
        %v2693 = vunpack.c.h.b16 %v2312
        %v2694 = vunpack.c.l.b16 %v2313
        %v2695 = vunpack.c.h.b16 %v2313
        %v2696 = vunpack.c.l.b16 %v2314
        %v2697 = vunpack.c.h.b16 %v2314
        %v2698 = vunpack.c.l.b16 %v2315
        %v2699 = vunpack.c.h.b16 %v2315
        %v2700 = vunpack.c.l.b16 %v2316
        %v2701 = vunpack.c.h.b16 %v2316
        %v2702 = vunpack.c.l.b16 %v2317
        %v2703 = vunpack.c.h.b16 %v2317
        %v2704 = vunpack.c.l.b16 %v2318
        %v2705 = vunpack.c.h.b16 %v2318
        %v2706 = vunpack.c.l.b16 %v2319
        %v2707 = vunpack.c.h.b16 %v2319
        %v2708 = vunpack.c.l.b16 %v2320
        %v2709 = vunpack.c.h.b16 %v2320
        %v2710 = vunpack.c.l.b16 %v2321
        %v2711 = vunpack.c.h.b16 %v2321
        %v2712 = vunpack.c.l.b16 %v2322
        %v2713 = vunpack.c.h.b16 %v2322
        %v2714 = vunpack.c.l.b16 %v2323
        %v2715 = vunpack.c.h.b16 %v2323
        %v2716 = vunpack.c.l.b16 %v2324
        %v2717 = vunpack.c.h.b16 %v2324
        %v2718 = vunpack.c.l.b16 %v2325
        %v2719 = vunpack.c.h.b16 %v2325
        %v2720 = vunpack.c.l.b16 %v2326
        %v2721 = vunpack.c.h.b16 %v2326
        %v2722 = vunpack.c.l.b16 %v2327
        %v2723 = vunpack.c.h.b16 %v2327
        %v2724 = vunpack.c.l.b16 %v2328
        %v2725 = vunpack.c.h.b16 %v2328
        %v2726 = vunpack.c.l.b16 %v2329
        %v2727 = vunpack.c.h.b16 %v2329
        %v2728 = vunpack.c.l.b16 %v2330
        %v2729 = vunpack.c.h.b16 %v2330
        %v2730 = vunpack.c.l.b16 %v2331
        %v2731 = vunpack.c.h.b16 %v2331
        %v2732 = vunpack.c.l.b16 %v2332
        %v2733 = vunpack.c.h.b16 %v2332
        %v2734 = vunpack.c.l.b16 %v2333
        %v2735 = vunpack.c.h.b16 %v2333
        %v2736 = vunpack.c.l.b16 %v2334
        %v2737 = vunpack.c.h.b16 %v2334
        %v2738 = vunpack.c.l.b16 %v2335
        %v2739 = vunpack.c.h.b16 %v2335
        %v2740 = vunpack.c.l.b16 %v2336
        %v2741 = vunpack.c.h.b16 %v2336
        %v2742 = vunpack.c.l.b16 %v2337
        %v2743 = vunpack.c.h.b16 %v2337
        %v2744 = vpack.c.b16 %v2492, %v2488
        %v2745 = vpack.c.b16 %v2493, %v2489
        %v2746 = vpack.c.b16 %v2494, %v2490
        %v2747 = vpack.c.b16 %v2495, %v2491
        %v2748 = vpack.c.b16 %v2500, %v2496
        %v2749 = vpack.c.b16 %v2501, %v2497
        %v2750 = vpack.c.b16 %v2502, %v2498
        %v2751 = vpack.c.b16 %v2503, %v2499
        %v2752 = vpack.c.b16 %v2508, %v2504
        %v2753 = vpack.c.b16 %v2509, %v2505
        %v2754 = vpack.c.b16 %v2510, %v2506
        %v2755 = vpack.c.b16 %v2511, %v2507
        %v2756 = vpack.c.b16 %v2516, %v2512
        %v2757 = vpack.c.b16 %v2517, %v2513
        %v2758 = vpack.c.b16 %v2518, %v2514
        %v2759 = vpack.c.b16 %v2519, %v2515
        %v2760 = vpack.c.b16 %v2524, %v2520
        %v2761 = vpack.c.b16 %v2525, %v2521
        %v2762 = vpack.c.b16 %v2526, %v2522
        %v2763 = vpack.c.b16 %v2527, %v2523
        %v2764 = vpack.c.b16 %v2532, %v2528
        %v2765 = vpack.c.b16 %v2533, %v2529
        %v2766 = vpack.c.b16 %v2534, %v2530
        %v2767 = vpack.c.b16 %v2535, %v2531
        %v2768 = vpack.c.b16 %v2540, %v2536
        %v2769 = vpack.c.b16 %v2541, %v2537
        %v2770 = vpack.c.b16 %v2542, %v2538
        %v2771 = vpack.c.b16 %v2543, %v2539
        %v2772 = vpack.c.b16 %v2548, %v2544
        %v2773 = vpack.c.b16 %v2549, %v2545
        %v2774 = vpack.c.b16 %v2550, %v2546
        %v2775 = vpack.c.b16 %v2551, %v2547
        %v2776 = vpack.c.b16 %v2556, %v2552
        %v2777 = vpack.c.b16 %v2557, %v2553
        %v2778 = vpack.c.b16 %v2558, %v2554
        %v2779 = vpack.c.b16 %v2559, %v2555
        %v2780 = vpack.c.b16 %v2564, %v2560
        %v2781 = vpack.c.b16 %v2565, %v2561
        %v2782 = vpack.c.b16 %v2566, %v2562
        %v2783 = vpack.c.b16 %v2567, %v2563
        %v2784 = vpack.c.b16 %v2572, %v2568
        %v2785 = vpack.c.b16 %v2573, %v2569
        %v2786 = vpack.c.b16 %v2574, %v2570
        %v2787 = vpack.c.b16 %v2575, %v2571
        %v2788 = vpack.c.b16 %v2580, %v2576
        %v2789 = vpack.c.b16 %v2581, %v2577
        %v2790 = vpack.c.b16 %v2582, %v2578
        %v2791 = vpack.c.b16 %v2583, %v2579
        %v2792 = vpack.c.b16 %v2588, %v2584
        %v2793 = vpack.c.b16 %v2589, %v2585
        %v2794 = vpack.c.b16 %v2590, %v2586
        %v2795 = vpack.c.b16 %v2591, %v2587
        %v2796 = vpack.c.b16 %v2596, %v2592
        %v2797 = vpack.c.b16 %v2597, %v2593
        %v2798 = vpack.c.b16 %v2598, %v2594
        %v2799 = vpack.c.b16 %v2599, %v2595
        %v2800 = vpack.c.b16 %v2604, %v2600
        %v2801 = vpack.c.b16 %v2605, %v2601
        %v2802 = vpack.c.b16 %v2606, %v2602
        %v2803 = vpack.c.b16 %v2607, %v2603
        %v2804 = vpack.c.b16 %v2612, %v2608
        %v2805 = vpack.c.b16 %v2613, %v2609
        %v2806 = vpack.c.b16 %v2614, %v2610
        %v2807 = vpack.c.b16 %v2615, %v2611
        %v2808 = vpack.c.b16 %v2620, %v2616
        %v2809 = vpack.c.b16 %v2621, %v2617
        %v2810 = vpack.c.b16 %v2622, %v2618
        %v2811 = vpack.c.b16 %v2623, %v2619
        %v2812 = vpack.c.b16 %v2628, %v2624
        %v2813 = vpack.c.b16 %v2629, %v2625
        %v2814 = vpack.c.b16 %v2630, %v2626
        %v2815 = vpack.c.b16 %v2631, %v2627
        %v2816 = vpack.c.b16 %v2636, %v2632
        %v2817 = vpack.c.b16 %v2637, %v2633
        %v2818 = vpack.c.b16 %v2638, %v2634
        %v2819 = vpack.c.b16 %v2639, %v2635
        %v2820 = vpack.c.b16 %v2644, %v2640
        %v2821 = vpack.c.b16 %v2645, %v2641
        %v2822 = vpack.c.b16 %v2646, %v2642
        %v2823 = vpack.c.b16 %v2647, %v2643
        %v2824 = vpack.c.b16 %v2652, %v2648
        %v2825 = vpack.c.b16 %v2653, %v2649
        %v2826 = vpack.c.b16 %v2654, %v2650
        %v2827 = vpack.c.b16 %v2655, %v2651
        %v2828 = vpack.c.b16 %v2660, %v2656
        %v2829 = vpack.c.b16 %v2661, %v2657
        %v2830 = vpack.c.b16 %v2662, %v2658
        %v2831 = vpack.c.b16 %v2663, %v2659
        %v2832 = vpack.c.b16 %v2668, %v2664
        %v2833 = vpack.c.b16 %v2669, %v2665
        %v2834 = vpack.c.b16 %v2670, %v2666
        %v2835 = vpack.c.b16 %v2671, %v2667
        %v2836 = vpack.c.b16 %v2676, %v2672
        %v2837 = vpack.c.b16 %v2677, %v2673
        %v2838 = vpack.c.b16 %v2678, %v2674
        %v2839 = vpack.c.b16 %v2679, %v2675
        %v2840 = vpack.c.b16 %v2684, %v2680
        %v2841 = vpack.c.b16 %v2685, %v2681
        %v2842 = vpack.c.b16 %v2686, %v2682
        %v2843 = vpack.c.b16 %v2687, %v2683
        %v2844 = vpack.c.b16 %v2692, %v2688
        %v2845 = vpack.c.b16 %v2693, %v2689
        %v2846 = vpack.c.b16 %v2694, %v2690
        %v2847 = vpack.c.b16 %v2695, %v2691
        %v2848 = vpack.c.b16 %v2700, %v2696
        %v2849 = vpack.c.b16 %v2701, %v2697
        %v2850 = vpack.c.b16 %v2702, %v2698
        %v2851 = vpack.c.b16 %v2703, %v2699
        %v2852 = vpack.c.b16 %v2708, %v2704
        %v2853 = vpack.c.b16 %v2709, %v2705
        %v2854 = vpack.c.b16 %v2710, %v2706
        %v2855 = vpack.c.b16 %v2711, %v2707
        %v2856 = vpack.c.b16 %v2716, %v2712
        %v2857 = vpack.c.b16 %v2717, %v2713
        %v2858 = vpack.c.b16 %v2718, %v2714
        %v2859 = vpack.c.b16 %v2719, %v2715
        %v2860 = vpack.c.b16 %v2724, %v2720
        %v2861 = vpack.c.b16 %v2725, %v2721
        %v2862 = vpack.c.b16 %v2726, %v2722
        %v2863 = vpack.c.b16 %v2727, %v2723
        %v2864 = vpack.c.b16 %v2732, %v2728
        %v2865 = vpack.c.b16 %v2733, %v2729
        %v2866 = vpack.c.b16 %v2734, %v2730
        %v2867 = vpack.c.b16 %v2735, %v2731
        %v2868 = vpack.c.b16 %v2740, %v2736
        %v2869 = vpack.c.b16 %v2741, %v2737
        %v2870 = vpack.c.b16 %v2742, %v2738
        %v2871 = vpack.c.b16 %v2743, %v2739
        %3000 = vmatprep.subr.bf16.mxu0 %v2745
        %3001 = vmatpush1.bf16.msra.mxu0 %v2744
        %3002 = vmatprep.subr.bf16.mxu0 %v2749
        %3003 = vmatpush1.bf16.msra.mxu0 %v2748
        %3004 = vmatprep.subr.bf16.mxu0 %v2753
        %3005 = vmatpush1.bf16.msra.mxu0 %v2752
        %3006 = vmatprep.subr.bf16.mxu0 %v2757
        %3007 = vmatpush1.bf16.msra.mxu0 %v2756
        %3008 = vmatprep.subr.bf16.mxu0 %v2761
        %3009 = vmatpush1.bf16.msra.mxu0 %v2760
        %3010 = vmatprep.subr.bf16.mxu0 %v2765
        %3011 = vmatpush1.bf16.msra.mxu0 %v2764
        %3012 = vmatprep.subr.bf16.mxu0 %v2769
        %3013 = vmatpush1.bf16.msra.mxu0 %v2768
        %3014 = vmatprep.subr.bf16.mxu0 %v2773
        %3015 = vmatpush1.bf16.msra.mxu0 %v2772
        %3016 = vmatprep.subr.bf16.mxu0 %v2777
        %3017 = vmatpush1.bf16.msra.mxu0 %v2776
        %3018 = vmatprep.subr.bf16.mxu0 %v2781
        %3019 = vmatpush1.bf16.msra.mxu0 %v2780
        %3020 = vmatprep.subr.bf16.mxu0 %v2785
        %3021 = vmatpush1.bf16.msra.mxu0 %v2784
        %3022 = vmatprep.subr.bf16.mxu0 %v2789
        %3023 = vmatpush1.bf16.msra.mxu0 %v2788
        %3024 = vmatprep.subr.bf16.mxu0 %v2793
        %3025 = vmatpush1.bf16.msra.mxu0 %v2792
        %3026 = vmatprep.subr.bf16.mxu0 %v2797
        %3027 = vmatpush1.bf16.msra.mxu0 %v2796
        %3028 = vmatprep.subr.bf16.mxu0 %v2801
        %3029 = vmatpush1.bf16.msra.mxu0 %v2800
        %3030 = vmatprep.subr.bf16.mxu0 %v2805
        %3031 = vmatpush1.bf16.msra.mxu0 %v2804
        %3032 = vmatprep.mubr.bf16.mxu0 %v2207
        %3033 = vmatmul.mubr.bf16.gmra.mrb[0].mxu0 %v2206
        %v3034 = vpop.f32.mrb[0].mxu0
        %v3035 = vadd.f32 %v2343, %v3034
        %v3036 = vpop.f32.mrb[0].mxu0
        %v3037 = vadd.f32 %v2347, %v3036
        %v3038 = vpop.f32.mrb[0].mxu0
        %v3039 = vpop.f32.mrb[0].mxu0
        %3040 = vdwg.mxu0
        %3041 = vmatprep.subr.bf16.mxu0 %v2809
        %3042 = vmatpush1.bf16.msra.mxu0 %v2808
        %3043 = vmatprep.subr.bf16.mxu0 %v2813
        %3044 = vmatpush1.bf16.msra.mxu0 %v2812
        %3045 = vmatprep.subr.bf16.mxu0 %v2817
        %3046 = vmatpush1.bf16.msra.mxu0 %v2816
        %3047 = vmatprep.subr.bf16.mxu0 %v2821
        %3048 = vmatpush1.bf16.msra.mxu0 %v2820
        %3049 = vmatprep.subr.bf16.mxu0 %v2825
        %3050 = vmatpush1.bf16.msra.mxu0 %v2824
        %3051 = vmatprep.subr.bf16.mxu0 %v2829
        %3052 = vmatpush1.bf16.msra.mxu0 %v2828
        %3053 = vmatprep.subr.bf16.mxu0 %v2833
        %3054 = vmatpush1.bf16.msra.mxu0 %v2832
        %3055 = vmatprep.subr.bf16.mxu0 %v2837
        %3056 = vmatpush1.bf16.msra.mxu0 %v2836
        %3057 = vmatprep.subr.bf16.mxu0 %v2841
        %3058 = vmatpush1.bf16.msra.mxu0 %v2840
        %3059 = vmatprep.subr.bf16.mxu0 %v2845
        %3060 = vmatpush1.bf16.msra.mxu0 %v2844
        %3061 = vmatprep.subr.bf16.mxu0 %v2849
        %3062 = vmatpush1.bf16.msra.mxu0 %v2848
        %3063 = vmatprep.subr.bf16.mxu0 %v2853
        %3064 = vmatpush1.bf16.msra.mxu0 %v2852
        %3065 = vmatprep.subr.bf16.mxu0 %v2857
        %3066 = vmatpush1.bf16.msra.mxu0 %v2856
        %3067 = vmatprep.subr.bf16.mxu0 %v2861
        %3068 = vmatpush1.bf16.msra.mxu0 %v2860
        %3069 = vmatprep.subr.bf16.mxu0 %v2865
        %3070 = vmatpush1.bf16.msra.mxu0 %v2864
        %3071 = vmatprep.subr.bf16.mxu0 %v2869
        %3072 = vmatpush1.bf16.msra.mxu0 %v2868
        %3073 = vmatprep.mubr.bf16.mxu0 %v2209
        %3074 = vmatmul.mubr.bf16.gmra.mrb[0].mxu0 %v2208
        %v3075 = vpop.f32.mrb[0].mxu0
        %v3076 = vadd.f32 %v3035, %v3075
        %v3077 = vpop.f32.mrb[0].mxu0
        %v3078 = vadd.f32 %v3037, %v3077
        %v3079 = vpop.f32.mrb[0].mxu0
        %v3080 = vpop.f32.mrb[0].mxu0
        %3081 = vdwg.mxu0
        %3082 = vmatprep.subr.bf16.mxu0 %v2747
        %3083 = vmatpush1.bf16.msra.mxu0 %v2746
        %3084 = vmatprep.subr.bf16.mxu0 %v2751
        %3085 = vmatpush1.bf16.msra.mxu0 %v2750
        %3086 = vmatprep.subr.bf16.mxu0 %v2755
        %3087 = vmatpush1.bf16.msra.mxu0 %v2754
        %3088 = vmatprep.subr.bf16.mxu0 %v2759
        %3089 = vmatpush1.bf16.msra.mxu0 %v2758
        %3090 = vmatprep.subr.bf16.mxu0 %v2763
        %3091 = vmatpush1.bf16.msra.mxu0 %v2762
        %3092 = vmatprep.subr.bf16.mxu0 %v2767
        %3093 = vmatpush1.bf16.msra.mxu0 %v2766
        %3094 = vmatprep.subr.bf16.mxu0 %v2771
        %3095 = vmatpush1.bf16.msra.mxu0 %v2770
        %3096 = vmatprep.subr.bf16.mxu0 %v2775
        %3097 = vmatpush1.bf16.msra.mxu0 %v2774
        %3098 = vmatprep.subr.bf16.mxu0 %v2779
        %3099 = vmatpush1.bf16.msra.mxu0 %v2778
        %3100 = vmatprep.subr.bf16.mxu0 %v2783
        %3101 = vmatpush1.bf16.msra.mxu0 %v2782
        %3102 = vmatprep.subr.bf16.mxu0 %v2787
        %3103 = vmatpush1.bf16.msra.mxu0 %v2786
        %3104 = vmatprep.subr.bf16.mxu0 %v2791
        %3105 = vmatpush1.bf16.msra.mxu0 %v2790
        %3106 = vmatprep.subr.bf16.mxu0 %v2795
        %3107 = vmatpush1.bf16.msra.mxu0 %v2794
        %3108 = vmatprep.subr.bf16.mxu0 %v2799
        %3109 = vmatpush1.bf16.msra.mxu0 %v2798
        %3110 = vmatprep.subr.bf16.mxu0 %v2803
        %3111 = vmatpush1.bf16.msra.mxu0 %v2802
        %3112 = vmatprep.subr.bf16.mxu0 %v2807
        %3113 = vmatpush1.bf16.msra.mxu0 %v2806
        %3114 = vmatprep.mubr.bf16.mxu0 %v2207
        %3115 = vmatmul.mubr.bf16.gmra.mrb[0].mxu0 %v2206
        %v3116 = vpop.f32.mrb[0].mxu0
        %v3117 = vadd.f32 %v2351, %v3116
        %v3118 = vpop.f32.mrb[0].mxu0
        %v3119 = vadd.f32 %v2355, %v3118
        %v3120 = vpop.f32.mrb[0].mxu0
        %v3121 = vpop.f32.mrb[0].mxu0
        %3122 = vdwg.mxu0
        %3123 = vmatprep.subr.bf16.mxu0 %v2811
        %3124 = vmatpush1.bf16.msra.mxu0 %v2810
        %3125 = vmatprep.subr.bf16.mxu0 %v2815
        %3126 = vmatpush1.bf16.msra.mxu0 %v2814
        %3127 = vmatprep.subr.bf16.mxu0 %v2819
        %3128 = vmatpush1.bf16.msra.mxu0 %v2818
        %3129 = vmatprep.subr.bf16.mxu0 %v2823
        %3130 = vmatpush1.bf16.msra.mxu0 %v2822
        %3131 = vmatprep.subr.bf16.mxu0 %v2827
        %3132 = vmatpush1.bf16.msra.mxu0 %v2826
        %3133 = vmatprep.subr.bf16.mxu0 %v2831
        %3134 = vmatpush1.bf16.msra.mxu0 %v2830
        %3135 = vmatprep.subr.bf16.mxu0 %v2835
        %3136 = vmatpush1.bf16.msra.mxu0 %v2834
        %3137 = vmatprep.subr.bf16.mxu0 %v2839
        %3138 = vmatpush1.bf16.msra.mxu0 %v2838
        %3139 = vmatprep.subr.bf16.mxu0 %v2843
        %3140 = vmatpush1.bf16.msra.mxu0 %v2842
        %3141 = vmatprep.subr.bf16.mxu0 %v2847
        %3142 = vmatpush1.bf16.msra.mxu0 %v2846
        %3143 = vmatprep.subr.bf16.mxu0 %v2851
        %3144 = vmatpush1.bf16.msra.mxu0 %v2850
        %3145 = vmatprep.subr.bf16.mxu0 %v2855
        %3146 = vmatpush1.bf16.msra.mxu0 %v2854
        %3147 = vmatprep.subr.bf16.mxu0 %v2859
        %3148 = vmatpush1.bf16.msra.mxu0 %v2858
        %3149 = vmatprep.subr.bf16.mxu0 %v2863
        %3150 = vmatpush1.bf16.msra.mxu0 %v2862
        %3151 = vmatprep.subr.bf16.mxu0 %v2867
        %3152 = vmatpush1.bf16.msra.mxu0 %v2866
        %3153 = vmatprep.subr.bf16.mxu0 %v2871
        %3154 = vmatpush1.bf16.msra.mxu0 %v2870
        %3155 = vmatprep.mubr.bf16.mxu0 %v2209
        %3156 = vmatmul.mubr.bf16.gmra.mrb[0].mxu0 %v2208
        %v3157 = vpop.f32.mrb[0].mxu0
        %v3158 = vadd.f32 %v3117, %v3157
        %v3159 = vpop.f32.mrb[0].mxu0
        %v3160 = vadd.f32 %v3119, %v3159
        %v3161 = vpop.f32.mrb[0].mxu0
        %v3162 = vpop.f32.mrb[0].mxu0
        %3163 = vdwg.mxu0
        %v3164 = vmax.f32 %v3076, 0.0
        %v3165 = vmax.f32 %v3078, 0.0
        %v3166 = vmax.f32 %v3158, 0.0
        %v3167 = vmax.f32 %v3160, 0.0
        %v3168 = vpack.c.bf16 %v2202, %v2202
        %v3169 = vpack.c.bf16 %v2203, %v2203
        %v3170 = vpack.c.bf16 %v2204, %v2204
        %v3171 = vpack.c.bf16 %v2205, %v2205
        %v3172 = vld [vmem:[%s812] sm:$0xff]
        %v3173 = vld [vmem:[%s812 + $0x8] sm:$0xff]
        %v3174 = vld [vmem:[%s812 + $0x10] sm:$0xff]
        %v3175 = vld [vmem:[%s812 + $0x18] sm:$0xff]
        %v3176 = vld [vmem:[%s812 + $0x20] sm:$0xff]
        %v3177 = vld [vmem:[%s812 + $0x28] sm:$0xff]
        %v3178 = vld [vmem:[%s812 + $0x30] sm:$0xff]
        %v3179 = vld [vmem:[%s812 + $0x38] sm:$0xff]
        %v3180 = vld [vmem:[%s812 + $0x40] sm:$0xff]
        %v3181 = vld [vmem:[%s812 + $0x48] sm:$0xff]
        %v3182 = vld [vmem:[%s812 + $0x50] sm:$0xff]
        %v3183 = vld [vmem:[%s812 + $0x58] sm:$0xff]
        %v3184 = vld [vmem:[%s812 + $0x60] sm:$0xff]
        %v3185 = vld [vmem:[%s812 + $0x68] sm:$0xff]
        %v3186 = vld [vmem:[%s812 + $0x70] sm:$0xff]
        %v3187 = vld [vmem:[%s812 + $0x78] sm:$0xff]
        %v3188 = vld [vmem:[%s812 + $0x80] sm:$0xff]
        %v3189 = vld [vmem:[%s812 + $0x88] sm:$0xff]
        %v3190 = vld [vmem:[%s812 + $0x90] sm:$0xff]
        %v3191 = vld [vmem:[%s812 + $0x98] sm:$0xff]
        %v3192 = vld [vmem:[%s812 + $0xa0] sm:$0xff]
        %v3193 = vld [vmem:[%s812 + $0xa8] sm:$0xff]
        %v3194 = vld [vmem:[%s812 + $0xb0] sm:$0xff]
        %v3195 = vld [vmem:[%s812 + $0xb8] sm:$0xff]
        %v3196 = vld [vmem:[%s812 + $0xc0] sm:$0xff]
        %v3197 = vld [vmem:[%s812 + $0xc8] sm:$0xff]
        %v3198 = vld [vmem:[%s812 + $0xd0] sm:$0xff]
        %v3199 = vld [vmem:[%s812 + $0xd8] sm:$0xff]
        %v3200 = vld [vmem:[%s812 + $0xe0] sm:$0xff]
        %v3201 = vld [vmem:[%s812 + $0xe8] sm:$0xff]
        %v3202 = vld [vmem:[%s812 + $0xf0] sm:$0xff]
        %v3203 = vld [vmem:[%s812 + $0xf8] sm:$0xff]
        %v3204 = vld [vmem:[%s812 + $0x100] sm:$0xff]
        %v3205 = vld [vmem:[%s812 + $0x108] sm:$0xff]
        %v3206 = vld [vmem:[%s812 + $0x110] sm:$0xff]
        %v3207 = vld [vmem:[%s812 + $0x118] sm:$0xff]
        %v3208 = vld [vmem:[%s812 + $0x120] sm:$0xff]
        %v3209 = vld [vmem:[%s812 + $0x128] sm:$0xff]
        %v3210 = vld [vmem:[%s812 + $0x130] sm:$0xff]
        %v3211 = vld [vmem:[%s812 + $0x138] sm:$0xff]
        %v3212 = vld [vmem:[%s812 + $0x140] sm:$0xff]
        %v3213 = vld [vmem:[%s812 + $0x148] sm:$0xff]
        %v3214 = vld [vmem:[%s812 + $0x150] sm:$0xff]
        %v3215 = vld [vmem:[%s812 + $0x158] sm:$0xff]
        %v3216 = vld [vmem:[%s812 + $0x160] sm:$0xff]
        %v3217 = vld [vmem:[%s812 + $0x168] sm:$0xff]
        %v3218 = vld [vmem:[%s812 + $0x170] sm:$0xff]
        %v3219 = vld [vmem:[%s812 + $0x178] sm:$0xff]
        %v3220 = vld [vmem:[%s812 + $0x180] sm:$0xff]
        %v3221 = vld [vmem:[%s812 + $0x188] sm:$0xff]
        %v3222 = vld [vmem:[%s812 + $0x190] sm:$0xff]
        %v3223 = vld [vmem:[%s812 + $0x198] sm:$0xff]
        %v3224 = vld [vmem:[%s812 + $0x1a0] sm:$0xff]
        %v3225 = vld [vmem:[%s812 + $0x1a8] sm:$0xff]
        %v3226 = vld [vmem:[%s812 + $0x1b0] sm:$0xff]
        %v3227 = vld [vmem:[%s812 + $0x1b8] sm:$0xff]
        %v3228 = vld [vmem:[%s812 + $0x1c0] sm:$0xff]
        %v3229 = vld [vmem:[%s812 + $0x1c8] sm:$0xff]
        %v3230 = vld [vmem:[%s812 + $0x1d0] sm:$0xff]
        %v3231 = vld [vmem:[%s812 + $0x1d8] sm:$0xff]
        %v3232 = vld [vmem:[%s812 + $0x1e0] sm:$0xff]
        %v3233 = vld [vmem:[%s812 + $0x1e8] sm:$0xff]
        %v3234 = vld [vmem:[%s812 + $0x1f0] sm:$0xff]
        %v3235 = vld [vmem:[%s812 + $0x1f8] sm:$0xff]
        %v3236 = vld [vmem:[%s812 + $0x200] sm:$0xff]
        %v3237 = vld [vmem:[%s812 + $0x208] sm:$0xff]
        %v3238 = vld [vmem:[%s812 + $0x210] sm:$0xff]
        %v3239 = vld [vmem:[%s812 + $0x218] sm:$0xff]
        %v3240 = vld [vmem:[%s812 + $0x220] sm:$0xff]
        %v3241 = vld [vmem:[%s812 + $0x228] sm:$0xff]
        %v3242 = vld [vmem:[%s812 + $0x230] sm:$0xff]
        %v3243 = vld [vmem:[%s812 + $0x238] sm:$0xff]
        %v3244 = vld [vmem:[%s812 + $0x240] sm:$0xff]
        %v3245 = vld [vmem:[%s812 + $0x248] sm:$0xff]
        %v3246 = vld [vmem:[%s812 + $0x250] sm:$0xff]
        %v3247 = vld [vmem:[%s812 + $0x258] sm:$0xff]
        %v3248 = vld [vmem:[%s812 + $0x260] sm:$0xff]
        %v3249 = vld [vmem:[%s812 + $0x268] sm:$0xff]
        %v3250 = vld [vmem:[%s812 + $0x270] sm:$0xff]
        %v3251 = vld [vmem:[%s812 + $0x278] sm:$0xff]
        %v3252 = vld [vmem:[%s812 + $0x280] sm:$0xff]
        %v3253 = vld [vmem:[%s812 + $0x288] sm:$0xff]
        %v3254 = vld [vmem:[%s812 + $0x290] sm:$0xff]
        %v3255 = vld [vmem:[%s812 + $0x298] sm:$0xff]
        %v3256 = vld [vmem:[%s812 + $0x2a0] sm:$0xff]
        %v3257 = vld [vmem:[%s812 + $0x2a8] sm:$0xff]
        %v3258 = vld [vmem:[%s812 + $0x2b0] sm:$0xff]
        %v3259 = vld [vmem:[%s812 + $0x2b8] sm:$0xff]
        %v3260 = vld [vmem:[%s812 + $0x2c0] sm:$0xff]
        %v3261 = vld [vmem:[%s812 + $0x2c8] sm:$0xff]
        %v3262 = vld [vmem:[%s812 + $0x2d0] sm:$0xff]
        %v3263 = vld [vmem:[%s812 + $0x2d8] sm:$0xff]
        %v3264 = vld [vmem:[%s812 + $0x2e0] sm:$0xff]
        %v3265 = vld [vmem:[%s812 + $0x2e8] sm:$0xff]
        %v3266 = vld [vmem:[%s812 + $0x2f0] sm:$0xff]
        %v3267 = vld [vmem:[%s812 + $0x2f8] sm:$0xff]
        %v3268 = vld [vmem:[%s812 + $0x300] sm:$0xff]
        %v3269 = vld [vmem:[%s812 + $0x308] sm:$0xff]
        %v3270 = vld [vmem:[%s812 + $0x310] sm:$0xff]
        %v3271 = vld [vmem:[%s812 + $0x318] sm:$0xff]
        %v3272 = vld [vmem:[%s812 + $0x320] sm:$0xff]
        %v3273 = vld [vmem:[%s812 + $0x328] sm:$0xff]
        %v3274 = vld [vmem:[%s812 + $0x330] sm:$0xff]
        %v3275 = vld [vmem:[%s812 + $0x338] sm:$0xff]
        %v3276 = vld [vmem:[%s812 + $0x340] sm:$0xff]
        %v3277 = vld [vmem:[%s812 + $0x348] sm:$0xff]
        %v3278 = vld [vmem:[%s812 + $0x350] sm:$0xff]
        %v3279 = vld [vmem:[%s812 + $0x358] sm:$0xff]
        %v3280 = vld [vmem:[%s812 + $0x360] sm:$0xff]
        %v3281 = vld [vmem:[%s812 + $0x368] sm:$0xff]
        %v3282 = vld [vmem:[%s812 + $0x370] sm:$0xff]
        %v3283 = vld [vmem:[%s812 + $0x378] sm:$0xff]
        %v3284 = vld [vmem:[%s812 + $0x380] sm:$0xff]
        %v3285 = vld [vmem:[%s812 + $0x388] sm:$0xff]
        %v3286 = vld [vmem:[%s812 + $0x390] sm:$0xff]
        %v3287 = vld [vmem:[%s812 + $0x398] sm:$0xff]
        %v3288 = vld [vmem:[%s812 + $0x3a0] sm:$0xff]
        %v3289 = vld [vmem:[%s812 + $0x3a8] sm:$0xff]
        %v3290 = vld [vmem:[%s812 + $0x3b0] sm:$0xff]
        %v3291 = vld [vmem:[%s812 + $0x3b8] sm:$0xff]
        %v3292 = vld [vmem:[%s812 + $0x3c0] sm:$0xff]
        %v3293 = vld [vmem:[%s812 + $0x3c8] sm:$0xff]
        %v3294 = vld [vmem:[%s812 + $0x3d0] sm:$0xff]
        %v3295 = vld [vmem:[%s812 + $0x3d8] sm:$0xff]
        %v3296 = vld [vmem:[%s812 + $0x3e0] sm:$0xff]
        %v3297 = vld [vmem:[%s812 + $0x3e8] sm:$0xff]
        %v3298 = vld [vmem:[%s812 + $0x3f0] sm:$0xff]
        %v3299 = vld [vmem:[%s812 + $0x3f8] sm:$0xff]
        %v3300 = vld [vmem:[%s935] sm:$0xf]
        %v3302 = vlaneseq
        %v3303 = vshrl.u32 %v3302, 7
        %v3304 = vsub.s32 0, %v3303
        %v3305 = vrot.slane %v3300, %v3304
        %v3306 = vlaneseq
        %v3307 = vshrl.u32 %v3306, 7
        %v3308 = vsub.s32 1, %v3307
        %v3309 = vrot.slane %v3300, %v3308
        %v3310 = vlaneseq
        %v3311 = vshrl.u32 %v3310, 7
        %v3312 = vsub.s32 2, %v3311
        %v3313 = vrot.slane %v3300, %v3312
        %v3314 = vlaneseq
        %v3315 = vshrl.u32 %v3314, 7
        %v3316 = vsub.s32 3, %v3315
        %v3317 = vrot.slane %v3300, %v3316
        %v3450 = vunpack.c.l.b16 %v3172
        %v3451 = vunpack.c.h.b16 %v3172
        %v3452 = vunpack.c.l.b16 %v3173
        %v3453 = vunpack.c.h.b16 %v3173
        %v3454 = vunpack.c.l.b16 %v3174
        %v3455 = vunpack.c.h.b16 %v3174
        %v3456 = vunpack.c.l.b16 %v3175
        %v3457 = vunpack.c.h.b16 %v3175
        %v3458 = vunpack.c.l.b16 %v3176
        %v3459 = vunpack.c.h.b16 %v3176
        %v3460 = vunpack.c.l.b16 %v3177
        %v3461 = vunpack.c.h.b16 %v3177
        %v3462 = vunpack.c.l.b16 %v3178
        %v3463 = vunpack.c.h.b16 %v3178
        %v3464 = vunpack.c.l.b16 %v3179
        %v3465 = vunpack.c.h.b16 %v3179
        %v3466 = vunpack.c.l.b16 %v3180
        %v3467 = vunpack.c.h.b16 %v3180
        %v3468 = vunpack.c.l.b16 %v3181
        %v3469 = vunpack.c.h.b16 %v3181
        %v3470 = vunpack.c.l.b16 %v3182
        %v3471 = vunpack.c.h.b16 %v3182
        %v3472 = vunpack.c.l.b16 %v3183
        %v3473 = vunpack.c.h.b16 %v3183
        %v3474 = vunpack.c.l.b16 %v3184
        %v3475 = vunpack.c.h.b16 %v3184
        %v3476 = vunpack.c.l.b16 %v3185
        %v3477 = vunpack.c.h.b16 %v3185
        %v3478 = vunpack.c.l.b16 %v3186
        %v3479 = vunpack.c.h.b16 %v3186
        %v3480 = vunpack.c.l.b16 %v3187
        %v3481 = vunpack.c.h.b16 %v3187
        %v3482 = vunpack.c.l.b16 %v3188
        %v3483 = vunpack.c.h.b16 %v3188
        %v3484 = vunpack.c.l.b16 %v3189
        %v3485 = vunpack.c.h.b16 %v3189
        %v3486 = vunpack.c.l.b16 %v3190
        %v3487 = vunpack.c.h.b16 %v3190
        %v3488 = vunpack.c.l.b16 %v3191
        %v3489 = vunpack.c.h.b16 %v3191
        %v3490 = vunpack.c.l.b16 %v3192
        %v3491 = vunpack.c.h.b16 %v3192
        %v3492 = vunpack.c.l.b16 %v3193
        %v3493 = vunpack.c.h.b16 %v3193
        %v3494 = vunpack.c.l.b16 %v3194
        %v3495 = vunpack.c.h.b16 %v3194
        %v3496 = vunpack.c.l.b16 %v3195
        %v3497 = vunpack.c.h.b16 %v3195
        %v3498 = vunpack.c.l.b16 %v3196
        %v3499 = vunpack.c.h.b16 %v3196
        %v3500 = vunpack.c.l.b16 %v3197
        %v3501 = vunpack.c.h.b16 %v3197
        %v3502 = vunpack.c.l.b16 %v3198
        %v3503 = vunpack.c.h.b16 %v3198
        %v3504 = vunpack.c.l.b16 %v3199
        %v3505 = vunpack.c.h.b16 %v3199
        %v3506 = vunpack.c.l.b16 %v3200
        %v3507 = vunpack.c.h.b16 %v3200
        %v3508 = vunpack.c.l.b16 %v3201
        %v3509 = vunpack.c.h.b16 %v3201
        %v3510 = vunpack.c.l.b16 %v3202
        %v3511 = vunpack.c.h.b16 %v3202
        %v3512 = vunpack.c.l.b16 %v3203
        %v3513 = vunpack.c.h.b16 %v3203
        %v3514 = vunpack.c.l.b16 %v3204
        %v3515 = vunpack.c.h.b16 %v3204
        %v3516 = vunpack.c.l.b16 %v3205
        %v3517 = vunpack.c.h.b16 %v3205
        %v3518 = vunpack.c.l.b16 %v3206
        %v3519 = vunpack.c.h.b16 %v3206
        %v3520 = vunpack.c.l.b16 %v3207
        %v3521 = vunpack.c.h.b16 %v3207
        %v3522 = vunpack.c.l.b16 %v3208
        %v3523 = vunpack.c.h.b16 %v3208
        %v3524 = vunpack.c.l.b16 %v3209
        %v3525 = vunpack.c.h.b16 %v3209
        %v3526 = vunpack.c.l.b16 %v3210
        %v3527 = vunpack.c.h.b16 %v3210
        %v3528 = vunpack.c.l.b16 %v3211
        %v3529 = vunpack.c.h.b16 %v3211
        %v3530 = vunpack.c.l.b16 %v3212
        %v3531 = vunpack.c.h.b16 %v3212
        %v3532 = vunpack.c.l.b16 %v3213
        %v3533 = vunpack.c.h.b16 %v3213
        %v3534 = vunpack.c.l.b16 %v3214
        %v3535 = vunpack.c.h.b16 %v3214
        %v3536 = vunpack.c.l.b16 %v3215
        %v3537 = vunpack.c.h.b16 %v3215
        %v3538 = vunpack.c.l.b16 %v3216
        %v3539 = vunpack.c.h.b16 %v3216
        %v3540 = vunpack.c.l.b16 %v3217
        %v3541 = vunpack.c.h.b16 %v3217
        %v3542 = vunpack.c.l.b16 %v3218
        %v3543 = vunpack.c.h.b16 %v3218
        %v3544 = vunpack.c.l.b16 %v3219
        %v3545 = vunpack.c.h.b16 %v3219
        %v3546 = vunpack.c.l.b16 %v3220
        %v3547 = vunpack.c.h.b16 %v3220
        %v3548 = vunpack.c.l.b16 %v3221
        %v3549 = vunpack.c.h.b16 %v3221
        %v3550 = vunpack.c.l.b16 %v3222
        %v3551 = vunpack.c.h.b16 %v3222
        %v3552 = vunpack.c.l.b16 %v3223
        %v3553 = vunpack.c.h.b16 %v3223
        %v3554 = vunpack.c.l.b16 %v3224
        %v3555 = vunpack.c.h.b16 %v3224
        %v3556 = vunpack.c.l.b16 %v3225
        %v3557 = vunpack.c.h.b16 %v3225
        %v3558 = vunpack.c.l.b16 %v3226
        %v3559 = vunpack.c.h.b16 %v3226
        %v3560 = vunpack.c.l.b16 %v3227
        %v3561 = vunpack.c.h.b16 %v3227
        %v3562 = vunpack.c.l.b16 %v3228
        %v3563 = vunpack.c.h.b16 %v3228
        %v3564 = vunpack.c.l.b16 %v3229
        %v3565 = vunpack.c.h.b16 %v3229
        %v3566 = vunpack.c.l.b16 %v3230
        %v3567 = vunpack.c.h.b16 %v3230
        %v3568 = vunpack.c.l.b16 %v3231
        %v3569 = vunpack.c.h.b16 %v3231
        %v3570 = vunpack.c.l.b16 %v3232
        %v3571 = vunpack.c.h.b16 %v3232
        %v3572 = vunpack.c.l.b16 %v3233
        %v3573 = vunpack.c.h.b16 %v3233
        %v3574 = vunpack.c.l.b16 %v3234
        %v3575 = vunpack.c.h.b16 %v3234
        %v3576 = vunpack.c.l.b16 %v3235
        %v3577 = vunpack.c.h.b16 %v3235
        %v3578 = vunpack.c.l.b16 %v3236
        %v3579 = vunpack.c.h.b16 %v3236
        %v3580 = vunpack.c.l.b16 %v3237
        %v3581 = vunpack.c.h.b16 %v3237
        %v3582 = vunpack.c.l.b16 %v3238
        %v3583 = vunpack.c.h.b16 %v3238
        %v3584 = vunpack.c.l.b16 %v3239
        %v3585 = vunpack.c.h.b16 %v3239
        %v3586 = vunpack.c.l.b16 %v3240
        %v3587 = vunpack.c.h.b16 %v3240
        %v3588 = vunpack.c.l.b16 %v3241
        %v3589 = vunpack.c.h.b16 %v3241
        %v3590 = vunpack.c.l.b16 %v3242
        %v3591 = vunpack.c.h.b16 %v3242
        %v3592 = vunpack.c.l.b16 %v3243
        %v3593 = vunpack.c.h.b16 %v3243
        %v3594 = vunpack.c.l.b16 %v3244
        %v3595 = vunpack.c.h.b16 %v3244
        %v3596 = vunpack.c.l.b16 %v3245
        %v3597 = vunpack.c.h.b16 %v3245
        %v3598 = vunpack.c.l.b16 %v3246
        %v3599 = vunpack.c.h.b16 %v3246
        %v3600 = vunpack.c.l.b16 %v3247
        %v3601 = vunpack.c.h.b16 %v3247
        %v3602 = vunpack.c.l.b16 %v3248
        %v3603 = vunpack.c.h.b16 %v3248
        %v3604 = vunpack.c.l.b16 %v3249
        %v3605 = vunpack.c.h.b16 %v3249
        %v3606 = vunpack.c.l.b16 %v3250
        %v3607 = vunpack.c.h.b16 %v3250
        %v3608 = vunpack.c.l.b16 %v3251
        %v3609 = vunpack.c.h.b16 %v3251
        %v3610 = vunpack.c.l.b16 %v3252
        %v3611 = vunpack.c.h.b16 %v3252
        %v3612 = vunpack.c.l.b16 %v3253
        %v3613 = vunpack.c.h.b16 %v3253
        %v3614 = vunpack.c.l.b16 %v3254
        %v3615 = vunpack.c.h.b16 %v3254
        %v3616 = vunpack.c.l.b16 %v3255
        %v3617 = vunpack.c.h.b16 %v3255
        %v3618 = vunpack.c.l.b16 %v3256
        %v3619 = vunpack.c.h.b16 %v3256
        %v3620 = vunpack.c.l.b16 %v3257
        %v3621 = vunpack.c.h.b16 %v3257
        %v3622 = vunpack.c.l.b16 %v3258
        %v3623 = vunpack.c.h.b16 %v3258
        %v3624 = vunpack.c.l.b16 %v3259
        %v3625 = vunpack.c.h.b16 %v3259
        %v3626 = vunpack.c.l.b16 %v3260
        %v3627 = vunpack.c.h.b16 %v3260
        %v3628 = vunpack.c.l.b16 %v3261
        %v3629 = vunpack.c.h.b16 %v3261
        %v3630 = vunpack.c.l.b16 %v3262
        %v3631 = vunpack.c.h.b16 %v3262
        %v3632 = vunpack.c.l.b16 %v3263
        %v3633 = vunpack.c.h.b16 %v3263
        %v3634 = vunpack.c.l.b16 %v3264
        %v3635 = vunpack.c.h.b16 %v3264
        %v3636 = vunpack.c.l.b16 %v3265
        %v3637 = vunpack.c.h.b16 %v3265
        %v3638 = vunpack.c.l.b16 %v3266
        %v3639 = vunpack.c.h.b16 %v3266
        %v3640 = vunpack.c.l.b16 %v3267
        %v3641 = vunpack.c.h.b16 %v3267
        %v3642 = vunpack.c.l.b16 %v3268
        %v3643 = vunpack.c.h.b16 %v3268
        %v3644 = vunpack.c.l.b16 %v3269
        %v3645 = vunpack.c.h.b16 %v3269
        %v3646 = vunpack.c.l.b16 %v3270
        %v3647 = vunpack.c.h.b16 %v3270
        %v3648 = vunpack.c.l.b16 %v3271
        %v3649 = vunpack.c.h.b16 %v3271
        %v3650 = vunpack.c.l.b16 %v3272
        %v3651 = vunpack.c.h.b16 %v3272
        %v3652 = vunpack.c.l.b16 %v3273
        %v3653 = vunpack.c.h.b16 %v3273
        %v3654 = vunpack.c.l.b16 %v3274
        %v3655 = vunpack.c.h.b16 %v3274
        %v3656 = vunpack.c.l.b16 %v3275
        %v3657 = vunpack.c.h.b16 %v3275
        %v3658 = vunpack.c.l.b16 %v3276
        %v3659 = vunpack.c.h.b16 %v3276
        %v3660 = vunpack.c.l.b16 %v3277
        %v3661 = vunpack.c.h.b16 %v3277
        %v3662 = vunpack.c.l.b16 %v3278
        %v3663 = vunpack.c.h.b16 %v3278
        %v3664 = vunpack.c.l.b16 %v3279
        %v3665 = vunpack.c.h.b16 %v3279
        %v3666 = vunpack.c.l.b16 %v3280
        %v3667 = vunpack.c.h.b16 %v3280
        %v3668 = vunpack.c.l.b16 %v3281
        %v3669 = vunpack.c.h.b16 %v3281
        %v3670 = vunpack.c.l.b16 %v3282
        %v3671 = vunpack.c.h.b16 %v3282
        %v3672 = vunpack.c.l.b16 %v3283
        %v3673 = vunpack.c.h.b16 %v3283
        %v3674 = vunpack.c.l.b16 %v3284
        %v3675 = vunpack.c.h.b16 %v3284
        %v3676 = vunpack.c.l.b16 %v3285
        %v3677 = vunpack.c.h.b16 %v3285
        %v3678 = vunpack.c.l.b16 %v3286
        %v3679 = vunpack.c.h.b16 %v3286
        %v3680 = vunpack.c.l.b16 %v3287
        %v3681 = vunpack.c.h.b16 %v3287
        %v3682 = vunpack.c.l.b16 %v3288
        %v3683 = vunpack.c.h.b16 %v3288
        %v3684 = vunpack.c.l.b16 %v3289
        %v3685 = vunpack.c.h.b16 %v3289
        %v3686 = vunpack.c.l.b16 %v3290
        %v3687 = vunpack.c.h.b16 %v3290
        %v3688 = vunpack.c.l.b16 %v3291
        %v3689 = vunpack.c.h.b16 %v3291
        %v3690 = vunpack.c.l.b16 %v3292
        %v3691 = vunpack.c.h.b16 %v3292
        %v3692 = vunpack.c.l.b16 %v3293
        %v3693 = vunpack.c.h.b16 %v3293
        %v3694 = vunpack.c.l.b16 %v3294
        %v3695 = vunpack.c.h.b16 %v3294
        %v3696 = vunpack.c.l.b16 %v3295
        %v3697 = vunpack.c.h.b16 %v3295
        %v3698 = vunpack.c.l.b16 %v3296
        %v3699 = vunpack.c.h.b16 %v3296
        %v3700 = vunpack.c.l.b16 %v3297
        %v3701 = vunpack.c.h.b16 %v3297
        %v3702 = vunpack.c.l.b16 %v3298
        %v3703 = vunpack.c.h.b16 %v3298
        %v3704 = vunpack.c.l.b16 %v3299
        %v3705 = vunpack.c.h.b16 %v3299
        %v3706 = vpack.c.b16 %v3454, %v3450
        %v3707 = vpack.c.b16 %v3455, %v3451
        %v3708 = vpack.c.b16 %v3456, %v3452
        %v3709 = vpack.c.b16 %v3457, %v3453
        %v3710 = vpack.c.b16 %v3462, %v3458
        %v3711 = vpack.c.b16 %v3463, %v3459
        %v3712 = vpack.c.b16 %v3464, %v3460
        %v3713 = vpack.c.b16 %v3465, %v3461
        %v3714 = vpack.c.b16 %v3470, %v3466
        %v3715 = vpack.c.b16 %v3471, %v3467
        %v3716 = vpack.c.b16 %v3472, %v3468
        %v3717 = vpack.c.b16 %v3473, %v3469
        %v3718 = vpack.c.b16 %v3478, %v3474
        %v3719 = vpack.c.b16 %v3479, %v3475
        %v3720 = vpack.c.b16 %v3480, %v3476
        %v3721 = vpack.c.b16 %v3481, %v3477
        %v3722 = vpack.c.b16 %v3486, %v3482
        %v3723 = vpack.c.b16 %v3487, %v3483
        %v3724 = vpack.c.b16 %v3488, %v3484
        %v3725 = vpack.c.b16 %v3489, %v3485
        %v3726 = vpack.c.b16 %v3494, %v3490
        %v3727 = vpack.c.b16 %v3495, %v3491
        %v3728 = vpack.c.b16 %v3496, %v3492
        %v3729 = vpack.c.b16 %v3497, %v3493
        %v3730 = vpack.c.b16 %v3502, %v3498
        %v3731 = vpack.c.b16 %v3503, %v3499
        %v3732 = vpack.c.b16 %v3504, %v3500
        %v3733 = vpack.c.b16 %v3505, %v3501
        %v3734 = vpack.c.b16 %v3510, %v3506
        %v3735 = vpack.c.b16 %v3511, %v3507
        %v3736 = vpack.c.b16 %v3512, %v3508
        %v3737 = vpack.c.b16 %v3513, %v3509
        %v3738 = vpack.c.b16 %v3518, %v3514
        %v3739 = vpack.c.b16 %v3519, %v3515
        %v3740 = vpack.c.b16 %v3520, %v3516
        %v3741 = vpack.c.b16 %v3521, %v3517
        %v3742 = vpack.c.b16 %v3526, %v3522
        %v3743 = vpack.c.b16 %v3527, %v3523
        %v3744 = vpack.c.b16 %v3528, %v3524
        %v3745 = vpack.c.b16 %v3529, %v3525
        %v3746 = vpack.c.b16 %v3534, %v3530
        %v3747 = vpack.c.b16 %v3535, %v3531
        %v3748 = vpack.c.b16 %v3536, %v3532
        %v3749 = vpack.c.b16 %v3537, %v3533
        %v3750 = vpack.c.b16 %v3542, %v3538
        %v3751 = vpack.c.b16 %v3543, %v3539
        %v3752 = vpack.c.b16 %v3544, %v3540
        %v3753 = vpack.c.b16 %v3545, %v3541
        %v3754 = vpack.c.b16 %v3550, %v3546
        %v3755 = vpack.c.b16 %v3551, %v3547
        %v3756 = vpack.c.b16 %v3552, %v3548
        %v3757 = vpack.c.b16 %v3553, %v3549
        %v3758 = vpack.c.b16 %v3558, %v3554
        %v3759 = vpack.c.b16 %v3559, %v3555
        %v3760 = vpack.c.b16 %v3560, %v3556
        %v3761 = vpack.c.b16 %v3561, %v3557
        %v3762 = vpack.c.b16 %v3566, %v3562
        %v3763 = vpack.c.b16 %v3567, %v3563
        %v3764 = vpack.c.b16 %v3568, %v3564
        %v3765 = vpack.c.b16 %v3569, %v3565
        %v3766 = vpack.c.b16 %v3574, %v3570
        %v3767 = vpack.c.b16 %v3575, %v3571
        %v3768 = vpack.c.b16 %v3576, %v3572
        %v3769 = vpack.c.b16 %v3577, %v3573
        %v3770 = vpack.c.b16 %v3582, %v3578
        %v3771 = vpack.c.b16 %v3583, %v3579
        %v3772 = vpack.c.b16 %v3584, %v3580
        %v3773 = vpack.c.b16 %v3585, %v3581
        %v3774 = vpack.c.b16 %v3590, %v3586
        %v3775 = vpack.c.b16 %v3591, %v3587
        %v3776 = vpack.c.b16 %v3592, %v3588
        %v3777 = vpack.c.b16 %v3593, %v3589
        %v3778 = vpack.c.b16 %v3598, %v3594
        %v3779 = vpack.c.b16 %v3599, %v3595
        %v3780 = vpack.c.b16 %v3600, %v3596
        %v3781 = vpack.c.b16 %v3601, %v3597
        %v3782 = vpack.c.b16 %v3606, %v3602
        %v3783 = vpack.c.b16 %v3607, %v3603
        %v3784 = vpack.c.b16 %v3608, %v3604
        %v3785 = vpack.c.b16 %v3609, %v3605
        %v3786 = vpack.c.b16 %v3614, %v3610
        %v3787 = vpack.c.b16 %v3615, %v3611
        %v3788 = vpack.c.b16 %v3616, %v3612
        %v3789 = vpack.c.b16 %v3617, %v3613
        %v3790 = vpack.c.b16 %v3622, %v3618
        %v3791 = vpack.c.b16 %v3623, %v3619
        %v3792 = vpack.c.b16 %v3624, %v3620
        %v3793 = vpack.c.b16 %v3625, %v3621
        %v3794 = vpack.c.b16 %v3630, %v3626
        %v3795 = vpack.c.b16 %v3631, %v3627
        %v3796 = vpack.c.b16 %v3632, %v3628
        %v3797 = vpack.c.b16 %v3633, %v3629
        %v3798 = vpack.c.b16 %v3638, %v3634
        %v3799 = vpack.c.b16 %v3639, %v3635
        %v3800 = vpack.c.b16 %v3640, %v3636
        %v3801 = vpack.c.b16 %v3641, %v3637
        %v3802 = vpack.c.b16 %v3646, %v3642
        %v3803 = vpack.c.b16 %v3647, %v3643
        %v3804 = vpack.c.b16 %v3648, %v3644
        %v3805 = vpack.c.b16 %v3649, %v3645
        %v3806 = vpack.c.b16 %v3654, %v3650
        %v3807 = vpack.c.b16 %v3655, %v3651
        %v3808 = vpack.c.b16 %v3656, %v3652
        %v3809 = vpack.c.b16 %v3657, %v3653
        %v3810 = vpack.c.b16 %v3662, %v3658
        %v3811 = vpack.c.b16 %v3663, %v3659
        %v3812 = vpack.c.b16 %v3664, %v3660
        %v3813 = vpack.c.b16 %v3665, %v3661
        %v3814 = vpack.c.b16 %v3670, %v3666
        %v3815 = vpack.c.b16 %v3671, %v3667
        %v3816 = vpack.c.b16 %v3672, %v3668
        %v3817 = vpack.c.b16 %v3673, %v3669
        %v3818 = vpack.c.b16 %v3678, %v3674
        %v3819 = vpack.c.b16 %v3679, %v3675
        %v3820 = vpack.c.b16 %v3680, %v3676
        %v3821 = vpack.c.b16 %v3681, %v3677
        %v3822 = vpack.c.b16 %v3686, %v3682
        %v3823 = vpack.c.b16 %v3687, %v3683
        %v3824 = vpack.c.b16 %v3688, %v3684
        %v3825 = vpack.c.b16 %v3689, %v3685
        %v3826 = vpack.c.b16 %v3694, %v3690
        %v3827 = vpack.c.b16 %v3695, %v3691
        %v3828 = vpack.c.b16 %v3696, %v3692
        %v3829 = vpack.c.b16 %v3697, %v3693
        %v3830 = vpack.c.b16 %v3702, %v3698
        %v3831 = vpack.c.b16 %v3703, %v3699
        %v3832 = vpack.c.b16 %v3704, %v3700
        %v3833 = vpack.c.b16 %v3705, %v3701
        %3962 = vmatprep.subr.bf16.mxu0 %v3707
        %3963 = vmatpush1.bf16.msra.mxu0 %v3706
        %3964 = vmatprep.subr.bf16.mxu0 %v3711
        %3965 = vmatpush1.bf16.msra.mxu0 %v3710
        %3966 = vmatprep.subr.bf16.mxu0 %v3715
        %3967 = vmatpush1.bf16.msra.mxu0 %v3714
        %3968 = vmatprep.subr.bf16.mxu0 %v3719
        %3969 = vmatpush1.bf16.msra.mxu0 %v3718
        %3970 = vmatprep.subr.bf16.mxu0 %v3723
        %3971 = vmatpush1.bf16.msra.mxu0 %v3722
        %3972 = vmatprep.subr.bf16.mxu0 %v3727
        %3973 = vmatpush1.bf16.msra.mxu0 %v3726
        %3974 = vmatprep.subr.bf16.mxu0 %v3731
        %3975 = vmatpush1.bf16.msra.mxu0 %v3730
        %3976 = vmatprep.subr.bf16.mxu0 %v3735
        %3977 = vmatpush1.bf16.msra.mxu0 %v3734
        %3978 = vmatprep.subr.bf16.mxu0 %v3739
        %3979 = vmatpush1.bf16.msra.mxu0 %v3738
        %3980 = vmatprep.subr.bf16.mxu0 %v3743
        %3981 = vmatpush1.bf16.msra.mxu0 %v3742
        %3982 = vmatprep.subr.bf16.mxu0 %v3747
        %3983 = vmatpush1.bf16.msra.mxu0 %v3746
        %3984 = vmatprep.subr.bf16.mxu0 %v3751
        %3985 = vmatpush1.bf16.msra.mxu0 %v3750
        %3986 = vmatprep.subr.bf16.mxu0 %v3755
        %3987 = vmatpush1.bf16.msra.mxu0 %v3754
        %3988 = vmatprep.subr.bf16.mxu0 %v3759
        %3989 = vmatpush1.bf16.msra.mxu0 %v3758
        %3990 = vmatprep.subr.bf16.mxu0 %v3763
        %3991 = vmatpush1.bf16.msra.mxu0 %v3762
        %3992 = vmatprep.subr.bf16.mxu0 %v3767
        %3993 = vmatpush1.bf16.msra.mxu0 %v3766
        %3994 = vmatprep.mubr.bf16.mxu0 %v3169
        %3995 = vmatmul.mubr.bf16.gmra.mrb[0].mxu0 %v3168
        %v3996 = vpop.f32.mrb[0].mxu0
        %v3997 = vadd.f32 %v3305, %v3996
        %v3998 = vpop.f32.mrb[0].mxu0
        %v3999 = vadd.f32 %v3309, %v3998
        %v4000 = vpop.f32.mrb[0].mxu0
        %v4001 = vpop.f32.mrb[0].mxu0
        %4002 = vdwg.mxu0
        %4003 = vmatprep.subr.bf16.mxu0 %v3771
        %4004 = vmatpush1.bf16.msra.mxu0 %v3770
        %4005 = vmatprep.subr.bf16.mxu0 %v3775
        %4006 = vmatpush1.bf16.msra.mxu0 %v3774
        %4007 = vmatprep.subr.bf16.mxu0 %v3779
        %4008 = vmatpush1.bf16.msra.mxu0 %v3778
        %4009 = vmatprep.subr.bf16.mxu0 %v3783
        %4010 = vmatpush1.bf16.msra.mxu0 %v3782
        %4011 = vmatprep.subr.bf16.mxu0 %v3787
        %4012 = vmatpush1.bf16.msra.mxu0 %v3786
        %4013 = vmatprep.subr.bf16.mxu0 %v3791
        %4014 = vmatpush1.bf16.msra.mxu0 %v3790
        %4015 = vmatprep.subr.bf16.mxu0 %v3795
        %4016 = vmatpush1.bf16.msra.mxu0 %v3794
        %4017 = vmatprep.subr.bf16.mxu0 %v3799
        %4018 = vmatpush1.bf16.msra.mxu0 %v3798
        %4019 = vmatprep.subr.bf16.mxu0 %v3803
        %4020 = vmatpush1.bf16.msra.mxu0 %v3802
        %4021 = vmatprep.subr.bf16.mxu0 %v3807
        %4022 = vmatpush1.bf16.msra.mxu0 %v3806
        %4023 = vmatprep.subr.bf16.mxu0 %v3811
        %4024 = vmatpush1.bf16.msra.mxu0 %v3810
        %4025 = vmatprep.subr.bf16.mxu0 %v3815
        %4026 = vmatpush1.bf16.msra.mxu0 %v3814
        %4027 = vmatprep.subr.bf16.mxu0 %v3819
        %4028 = vmatpush1.bf16.msra.mxu0 %v3818
        %4029 = vmatprep.subr.bf16.mxu0 %v3823
        %4030 = vmatpush1.bf16.msra.mxu0 %v3822
        %4031 = vmatprep.subr.bf16.mxu0 %v3827
        %4032 = vmatpush1.bf16.msra.mxu0 %v3826
        %4033 = vmatprep.subr.bf16.mxu0 %v3831
        %4034 = vmatpush1.bf16.msra.mxu0 %v3830
        %4035 = vmatprep.mubr.bf16.mxu0 %v3171
        %4036 = vmatmul.mubr.bf16.gmra.mrb[0].mxu0 %v3170
        %v4037 = vpop.f32.mrb[0].mxu0
        %v4038 = vadd.f32 %v3997, %v4037
        %v4039 = vpop.f32.mrb[0].mxu0
        %v4040 = vadd.f32 %v3999, %v4039
        %v4041 = vpop.f32.mrb[0].mxu0
        %v4042 = vpop.f32.mrb[0].mxu0
        %4043 = vdwg.mxu0
        %4044 = vmatprep.subr.bf16.mxu0 %v3709
        %4045 = vmatpush1.bf16.msra.mxu0 %v3708
        %4046 = vmatprep.subr.bf16.mxu0 %v3713
        %4047 = vmatpush1.bf16.msra.mxu0 %v3712
        %4048 = vmatprep.subr.bf16.mxu0 %v3717
        %4049 = vmatpush1.bf16.msra.mxu0 %v3716
        %4050 = vmatprep.subr.bf16.mxu0 %v3721
        %4051 = vmatpush1.bf16.msra.mxu0 %v3720
        %4052 = vmatprep.subr.bf16.mxu0 %v3725
        %4053 = vmatpush1.bf16.msra.mxu0 %v3724
        %4054 = vmatprep.subr.bf16.mxu0 %v3729
        %4055 = vmatpush1.bf16.msra.mxu0 %v3728
        %4056 = vmatprep.subr.bf16.mxu0 %v3733
        %4057 = vmatpush1.bf16.msra.mxu0 %v3732
        %4058 = vmatprep.subr.bf16.mxu0 %v3737
        %4059 = vmatpush1.bf16.msra.mxu0 %v3736
        %4060 = vmatprep.subr.bf16.mxu0 %v3741
        %4061 = vmatpush1.bf16.msra.mxu0 %v3740
        %4062 = vmatprep.subr.bf16.mxu0 %v3745
        %4063 = vmatpush1.bf16.msra.mxu0 %v3744
        %4064 = vmatprep.subr.bf16.mxu0 %v3749
        %4065 = vmatpush1.bf16.msra.mxu0 %v3748
        %4066 = vmatprep.subr.bf16.mxu0 %v3753
        %4067 = vmatpush1.bf16.msra.mxu0 %v3752
        %4068 = vmatprep.subr.bf16.mxu0 %v3757
        %4069 = vmatpush1.bf16.msra.mxu0 %v3756
        %4070 = vmatprep.subr.bf16.mxu0 %v3761
        %4071 = vmatpush1.bf16.msra.mxu0 %v3760
        %4072 = vmatprep.subr.bf16.mxu0 %v3765
        %4073 = vmatpush1.bf16.msra.mxu0 %v3764
        %4074 = vmatprep.subr.bf16.mxu0 %v3769
        %4075 = vmatpush1.bf16.msra.mxu0 %v3768
        %4076 = vmatprep.mubr.bf16.mxu0 %v3169
        %4077 = vmatmul.mubr.bf16.gmra.mrb[0].mxu0 %v3168
        %v4078 = vpop.f32.mrb[0].mxu0
        %v4079 = vadd.f32 %v3313, %v4078
        %v4080 = vpop.f32.mrb[0].mxu0
        %v4081 = vadd.f32 %v3317, %v4080
        %v4082 = vpop.f32.mrb[0].mxu0
        %v4083 = vpop.f32.mrb[0].mxu0
        %4084 = vdwg.mxu0
        %4085 = vmatprep.subr.bf16.mxu0 %v3773
        %4086 = vmatpush1.bf16.msra.mxu0 %v3772
        %4087 = vmatprep.subr.bf16.mxu0 %v3777
        %4088 = vmatpush1.bf16.msra.mxu0 %v3776
        %4089 = vmatprep.subr.bf16.mxu0 %v3781
        %4090 = vmatpush1.bf16.msra.mxu0 %v3780
        %4091 = vmatprep.subr.bf16.mxu0 %v3785
        %4092 = vmatpush1.bf16.msra.mxu0 %v3784
        %4093 = vmatprep.subr.bf16.mxu0 %v3789
        %4094 = vmatpush1.bf16.msra.mxu0 %v3788
        %4095 = vmatprep.subr.bf16.mxu0 %v3793
        %4096 = vmatpush1.bf16.msra.mxu0 %v3792
        %4097 = vmatprep.subr.bf16.mxu0 %v3797
        %4098 = vmatpush1.bf16.msra.mxu0 %v3796
        %4099 = vmatprep.subr.bf16.mxu0 %v3801
        %4100 = vmatpush1.bf16.msra.mxu0 %v3800
        %4101 = vmatprep.subr.bf16.mxu0 %v3805
        %4102 = vmatpush1.bf16.msra.mxu0 %v3804
        %4103 = vmatprep.subr.bf16.mxu0 %v3809
        %4104 = vmatpush1.bf16.msra.mxu0 %v3808
        %4105 = vmatprep.subr.bf16.mxu0 %v3813
        %4106 = vmatpush1.bf16.msra.mxu0 %v3812
        %4107 = vmatprep.subr.bf16.mxu0 %v3817
        %4108 = vmatpush1.bf16.msra.mxu0 %v3816
        %4109 = vmatprep.subr.bf16.mxu0 %v3821
        %4110 = vmatpush1.bf16.msra.mxu0 %v3820
        %4111 = vmatprep.subr.bf16.mxu0 %v3825
        %4112 = vmatpush1.bf16.msra.mxu0 %v3824
        %4113 = vmatprep.subr.bf16.mxu0 %v3829
        %4114 = vmatpush1.bf16.msra.mxu0 %v3828
        %4115 = vmatprep.subr.bf16.mxu0 %v3833
        %4116 = vmatpush1.bf16.msra.mxu0 %v3832
        %4117 = vmatprep.mubr.bf16.mxu0 %v3171
        %4118 = vmatmul.mubr.bf16.gmra.mrb[0].mxu0 %v3170
        %v4119 = vpop.f32.mrb[0].mxu0
        %v4120 = vadd.f32 %v4079, %v4119
        %v4121 = vpop.f32.mrb[0].mxu0
        %v4122 = vadd.f32 %v4081, %v4121
        %v4123 = vpop.f32.mrb[0].mxu0
        %v4124 = vpop.f32.mrb[0].mxu0
        %4125 = vdwg.mxu0
        %v4126 = vmax.f32 %v4038, 0.0
        %v4127 = vmax.f32 %v4040, 0.0
        %v4128 = vmax.f32 %v4120, 0.0
        %v4129 = vmax.f32 %v4122, 0.0
        %v4130 = vpack.c.bf16 %v3164, %v3164
        %v4131 = vpack.c.bf16 %v3165, %v3165
        %v4132 = vpack.c.bf16 %v3166, %v3166
        %v4133 = vpack.c.bf16 %v3167, %v3167
        %v4134 = vld [vmem:[%s940] sm:$0xf]
        %v4135 = vld [vmem:[%s940 + $0x4] sm:$0xf]
        %v4136 = vld [vmem:[%s940 + $0x8] sm:$0xf]
        %v4137 = vld [vmem:[%s940 + $0xc] sm:$0xf]
        %v4138 = vld [vmem:[%s940 + $0x10] sm:$0xf]
        %v4139 = vld [vmem:[%s940 + $0x14] sm:$0xf]
        %v4140 = vld [vmem:[%s940 + $0x18] sm:$0xf]
        %v4141 = vld [vmem:[%s940 + $0x1c] sm:$0xf]
        %v4142 = vld [vmem:[%s940 + $0x20] sm:$0xf]
        %v4143 = vld [vmem:[%s940 + $0x24] sm:$0xf]
        %v4144 = vld [vmem:[%s940 + $0x28] sm:$0xf]
        %v4145 = vld [vmem:[%s940 + $0x2c] sm:$0xf]
        %v4146 = vld [vmem:[%s940 + $0x30] sm:$0xf]
        %v4147 = vld [vmem:[%s940 + $0x34] sm:$0xf]
        %v4148 = vld [vmem:[%s940 + $0x38] sm:$0xf]
        %v4149 = vld [vmem:[%s940 + $0x3c] sm:$0xf]
        %v4150 = vld [vmem:[%s940 + $0x40] sm:$0xf]
        %v4151 = vld [vmem:[%s940 + $0x44] sm:$0xf]
        %v4152 = vld [vmem:[%s940 + $0x48] sm:$0xf]
        %v4153 = vld [vmem:[%s940 + $0x4c] sm:$0xf]
        %v4154 = vld [vmem:[%s940 + $0x50] sm:$0xf]
        %v4155 = vld [vmem:[%s940 + $0x54] sm:$0xf]
        %v4156 = vld [vmem:[%s940 + $0x58] sm:$0xf]
        %v4157 = vld [vmem:[%s940 + $0x5c] sm:$0xf]
        %v4158 = vld [vmem:[%s940 + $0x60] sm:$0xf]
        %v4159 = vld [vmem:[%s940 + $0x64] sm:$0xf]
        %v4160 = vld [vmem:[%s940 + $0x68] sm:$0xf]
        %v4161 = vld [vmem:[%s940 + $0x6c] sm:$0xf]
        %v4162 = vld [vmem:[%s940 + $0x70] sm:$0xf]
        %v4163 = vld [vmem:[%s940 + $0x74] sm:$0xf]
        %v4164 = vld [vmem:[%s940 + $0x78] sm:$0xf]
        %v4165 = vld [vmem:[%s940 + $0x7c] sm:$0xf]
        %v4166 = vld [vmem:[%s940 + $0x80] sm:$0xf]
        %v4167 = vld [vmem:[%s940 + $0x84] sm:$0xf]
        %v4168 = vld [vmem:[%s940 + $0x88] sm:$0xf]
        %v4169 = vld [vmem:[%s940 + $0x8c] sm:$0xf]
        %v4170 = vld [vmem:[%s940 + $0x90] sm:$0xf]
        %v4171 = vld [vmem:[%s940 + $0x94] sm:$0xf]
        %v4172 = vld [vmem:[%s940 + $0x98] sm:$0xf]
        %v4173 = vld [vmem:[%s940 + $0x9c] sm:$0xf]
        %v4174 = vld [vmem:[%s940 + $0xa0] sm:$0xf]
        %v4175 = vld [vmem:[%s940 + $0xa4] sm:$0xf]
        %v4176 = vld [vmem:[%s940 + $0xa8] sm:$0xf]
        %v4177 = vld [vmem:[%s940 + $0xac] sm:$0xf]
        %v4178 = vld [vmem:[%s940 + $0xb0] sm:$0xf]
        %v4179 = vld [vmem:[%s940 + $0xb4] sm:$0xf]
        %v4180 = vld [vmem:[%s940 + $0xb8] sm:$0xf]
        %v4181 = vld [vmem:[%s940 + $0xbc] sm:$0xf]
        %v4182 = vld [vmem:[%s940 + $0xc0] sm:$0xf]
        %v4183 = vld [vmem:[%s940 + $0xc4] sm:$0xf]
        %v4184 = vld [vmem:[%s940 + $0xc8] sm:$0xf]
        %v4185 = vld [vmem:[%s940 + $0xcc] sm:$0xf]
        %v4186 = vld [vmem:[%s940 + $0xd0] sm:$0xf]
        %v4187 = vld [vmem:[%s940 + $0xd4] sm:$0xf]
        %v4188 = vld [vmem:[%s940 + $0xd8] sm:$0xf]
        %v4189 = vld [vmem:[%s940 + $0xdc] sm:$0xf]
        %v4190 = vld [vmem:[%s940 + $0xe0] sm:$0xf]
        %v4191 = vld [vmem:[%s940 + $0xe4] sm:$0xf]
        %v4192 = vld [vmem:[%s940 + $0xe8] sm:$0xf]
        %v4193 = vld [vmem:[%s940 + $0xec] sm:$0xf]
        %v4194 = vld [vmem:[%s940 + $0xf0] sm:$0xf]
        %v4195 = vld [vmem:[%s940 + $0xf4] sm:$0xf]
        %v4196 = vld [vmem:[%s940 + $0xf8] sm:$0xf]
        %v4197 = vld [vmem:[%s940 + $0xfc] sm:$0xf]
        %v4198 = vld [vmem:[%s943] sm:$0x1]
        %v4200 = vlaneseq
        %v4201 = vshrl.u32 %v4200, 7
        %v4202 = vsub.s32 0, %v4201
        %v4203 = vrot.slane %v4198, %v4202
        %v4269 = vunpack.c.l.b16 %v4134
        %v4270 = vunpack.c.l.b16 %v4135
        %v4271 = vunpack.c.l.b16 %v4136
        %v4272 = vunpack.c.l.b16 %v4137
        %v4273 = vunpack.c.l.b16 %v4138
        %v4274 = vunpack.c.l.b16 %v4139
        %v4275 = vunpack.c.l.b16 %v4140
        %v4276 = vunpack.c.l.b16 %v4141
        %v4277 = vunpack.c.l.b16 %v4142
        %v4278 = vunpack.c.l.b16 %v4143
        %v4279 = vunpack.c.l.b16 %v4144
        %v4280 = vunpack.c.l.b16 %v4145
        %v4281 = vunpack.c.l.b16 %v4146
        %v4282 = vunpack.c.l.b16 %v4147
        %v4283 = vunpack.c.l.b16 %v4148
        %v4284 = vunpack.c.l.b16 %v4149
        %v4285 = vunpack.c.l.b16 %v4150
        %v4286 = vunpack.c.l.b16 %v4151
        %v4287 = vunpack.c.l.b16 %v4152
        %v4288 = vunpack.c.l.b16 %v4153
        %v4289 = vunpack.c.l.b16 %v4154
        %v4290 = vunpack.c.l.b16 %v4155
        %v4291 = vunpack.c.l.b16 %v4156
        %v4292 = vunpack.c.l.b16 %v4157
        %v4293 = vunpack.c.l.b16 %v4158
        %v4294 = vunpack.c.l.b16 %v4159
        %v4295 = vunpack.c.l.b16 %v4160
        %v4296 = vunpack.c.l.b16 %v4161
        %v4297 = vunpack.c.l.b16 %v4162
        %v4298 = vunpack.c.l.b16 %v4163
        %v4299 = vunpack.c.l.b16 %v4164
        %v4300 = vunpack.c.l.b16 %v4165
        %v4301 = vunpack.c.l.b16 %v4166
        %v4302 = vunpack.c.l.b16 %v4167
        %v4303 = vunpack.c.l.b16 %v4168
        %v4304 = vunpack.c.l.b16 %v4169
        %v4305 = vunpack.c.l.b16 %v4170
        %v4306 = vunpack.c.l.b16 %v4171
        %v4307 = vunpack.c.l.b16 %v4172
        %v4308 = vunpack.c.l.b16 %v4173
        %v4309 = vunpack.c.l.b16 %v4174
        %v4310 = vunpack.c.l.b16 %v4175
        %v4311 = vunpack.c.l.b16 %v4176
        %v4312 = vunpack.c.l.b16 %v4177
        %v4313 = vunpack.c.l.b16 %v4178
        %v4314 = vunpack.c.l.b16 %v4179
        %v4315 = vunpack.c.l.b16 %v4180
        %v4316 = vunpack.c.l.b16 %v4181
        %v4317 = vunpack.c.l.b16 %v4182
        %v4318 = vunpack.c.l.b16 %v4183
        %v4319 = vunpack.c.l.b16 %v4184
        %v4320 = vunpack.c.l.b16 %v4185
        %v4321 = vunpack.c.l.b16 %v4186
        %v4322 = vunpack.c.l.b16 %v4187
        %v4323 = vunpack.c.l.b16 %v4188
        %v4324 = vunpack.c.l.b16 %v4189
        %v4325 = vunpack.c.l.b16 %v4190
        %v4326 = vunpack.c.l.b16 %v4191
        %v4327 = vunpack.c.l.b16 %v4192
        %v4328 = vunpack.c.l.b16 %v4193
        %v4329 = vunpack.c.l.b16 %v4194
        %v4330 = vunpack.c.l.b16 %v4195
        %v4331 = vunpack.c.l.b16 %v4196
        %v4332 = vunpack.c.l.b16 %v4197
        %v4333 = vpack.c.b16 %v4270, %v4269
        %v4334 = vpack.c.b16 %v4272, %v4271
        %v4335 = vpack.c.b16 %v4274, %v4273
        %v4336 = vpack.c.b16 %v4276, %v4275
        %v4337 = vpack.c.b16 %v4278, %v4277
        %v4338 = vpack.c.b16 %v4280, %v4279
        %v4339 = vpack.c.b16 %v4282, %v4281
        %v4340 = vpack.c.b16 %v4284, %v4283
        %v4341 = vpack.c.b16 %v4286, %v4285
        %v4342 = vpack.c.b16 %v4288, %v4287
        %v4343 = vpack.c.b16 %v4290, %v4289
        %v4344 = vpack.c.b16 %v4292, %v4291
        %v4345 = vpack.c.b16 %v4294, %v4293
        %v4346 = vpack.c.b16 %v4296, %v4295
        %v4347 = vpack.c.b16 %v4298, %v4297
        %v4348 = vpack.c.b16 %v4300, %v4299
        %v4349 = vpack.c.b16 %v4302, %v4301
        %v4350 = vpack.c.b16 %v4304, %v4303
        %v4351 = vpack.c.b16 %v4306, %v4305
        %v4352 = vpack.c.b16 %v4308, %v4307
        %v4353 = vpack.c.b16 %v4310, %v4309
        %v4354 = vpack.c.b16 %v4312, %v4311
        %v4355 = vpack.c.b16 %v4314, %v4313
        %v4356 = vpack.c.b16 %v4316, %v4315
        %v4357 = vpack.c.b16 %v4318, %v4317
        %v4358 = vpack.c.b16 %v4320, %v4319
        %v4359 = vpack.c.b16 %v4322, %v4321
        %v4360 = vpack.c.b16 %v4324, %v4323
        %v4361 = vpack.c.b16 %v4326, %v4325
        %v4362 = vpack.c.b16 %v4328, %v4327
        %v4363 = vpack.c.b16 %v4330, %v4329
        %v4364 = vpack.c.b16 %v4332, %v4331
        %4397 = vmatprep.subr.bf16.mxu0 0
        %4398 = vmatpush1.bf16.msra.mxu0 %v4333
        %4399 = vmatprep.subr.bf16.mxu0 0
        %4400 = vmatpush1.bf16.msra.mxu0 %v4334
        %4401 = vmatprep.subr.bf16.mxu0 0
        %4402 = vmatpush1.bf16.msra.mxu0 %v4335
        %4403 = vmatprep.subr.bf16.mxu0 0
        %4404 = vmatpush1.bf16.msra.mxu0 %v4336
        %4405 = vmatprep.subr.bf16.mxu0 0
        %4406 = vmatpush1.bf16.msra.mxu0 %v4337
        %4407 = vmatprep.subr.bf16.mxu0 0
        %4408 = vmatpush1.bf16.msra.mxu0 %v4338
        %4409 = vmatprep.subr.bf16.mxu0 0
        %4410 = vmatpush1.bf16.msra.mxu0 %v4339
        %4411 = vmatprep.subr.bf16.mxu0 0
        %4412 = vmatpush1.bf16.msra.mxu0 %v4340
        %4413 = vmatprep.subr.bf16.mxu0 0
        %4414 = vmatpush1.bf16.msra.mxu0 %v4341
        %4415 = vmatprep.subr.bf16.mxu0 0
        %4416 = vmatpush1.bf16.msra.mxu0 %v4342
        %4417 = vmatprep.subr.bf16.mxu0 0
        %4418 = vmatpush1.bf16.msra.mxu0 %v4343
        %4419 = vmatprep.subr.bf16.mxu0 0
        %4420 = vmatpush1.bf16.msra.mxu0 %v4344
        %4421 = vmatprep.subr.bf16.mxu0 0
        %4422 = vmatpush1.bf16.msra.mxu0 %v4345
        %4423 = vmatprep.subr.bf16.mxu0 0
        %4424 = vmatpush1.bf16.msra.mxu0 %v4346
        %4425 = vmatprep.subr.bf16.mxu0 0
        %4426 = vmatpush1.bf16.msra.mxu0 %v4347
        %4427 = vmatprep.subr.bf16.mxu0 0
        %4428 = vmatpush1.bf16.msra.mxu0 %v4348
        %4429 = vmatprep.mubr.bf16.mxu0 %v4131
        %4430 = vmatmul.mubr.bf16.gmra.mrb[0].mxu0 %v4130
        %v4431 = vpop.f32.mrb[0].mxu0
        %v4432 = vadd.f32 %v4203, %v4431
        %v4433 = vpop.f32.mrb[0].mxu0
        %v4434 = vpop.f32.mrb[0].mxu0
        %v4435 = vpop.f32.mrb[0].mxu0
        %4436 = vdwg.mxu0
        %4437 = vmatprep.subr.bf16.mxu0 0
        %4438 = vmatpush1.bf16.msra.mxu0 %v4349
        %4439 = vmatprep.subr.bf16.mxu0 0
        %4440 = vmatpush1.bf16.msra.mxu0 %v4350
        %4441 = vmatprep.subr.bf16.mxu0 0
        %4442 = vmatpush1.bf16.msra.mxu0 %v4351
        %4443 = vmatprep.subr.bf16.mxu0 0
        %4444 = vmatpush1.bf16.msra.mxu0 %v4352
        %4445 = vmatprep.subr.bf16.mxu0 0
        %4446 = vmatpush1.bf16.msra.mxu0 %v4353
        %4447 = vmatprep.subr.bf16.mxu0 0
        %4448 = vmatpush1.bf16.msra.mxu0 %v4354
        %4449 = vmatprep.subr.bf16.mxu0 0
        %4450 = vmatpush1.bf16.msra.mxu0 %v4355
        %4451 = vmatprep.subr.bf16.mxu0 0
        %4452 = vmatpush1.bf16.msra.mxu0 %v4356
        %4453 = vmatprep.subr.bf16.mxu0 0
        %4454 = vmatpush1.bf16.msra.mxu0 %v4357
        %4455 = vmatprep.subr.bf16.mxu0 0
        %4456 = vmatpush1.bf16.msra.mxu0 %v4358
        %4457 = vmatprep.subr.bf16.mxu0 0
        %4458 = vmatpush1.bf16.msra.mxu0 %v4359
        %4459 = vmatprep.subr.bf16.mxu0 0
        %4460 = vmatpush1.bf16.msra.mxu0 %v4360
        %4461 = vmatprep.subr.bf16.mxu0 0
        %4462 = vmatpush1.bf16.msra.mxu0 %v4361
        %4463 = vmatprep.subr.bf16.mxu0 0
        %4464 = vmatpush1.bf16.msra.mxu0 %v4362
        %4465 = vmatprep.subr.bf16.mxu0 0
        %4466 = vmatpush1.bf16.msra.mxu0 %v4363
        %4467 = vmatprep.subr.bf16.mxu0 0
        %4468 = vmatpush1.bf16.msra.mxu0 %v4364
        %4469 = vmatprep.mubr.bf16.mxu0 %v4133
        %4470 = vmatmul.mubr.bf16.gmra.mrb[0].mxu0 %v4132
        %v4471 = vpop.f32.mrb[0].mxu0
        %v4472 = vadd.f32 %v4432, %v4471
        %v4473 = vpop.f32.mrb[0].mxu0
        %v4474 = vpop.f32.mrb[0].mxu0
        %v4475 = vpop.f32.mrb[0].mxu0
        %4476 = vdwg.mxu0
        %v4477 = vtanh.pop %v4472
        %v4478 = vpack.c.bf16 %v4126, %v4126
        %v4479 = vpack.c.bf16 %v4127, %v4127
        %v4480 = vpack.c.bf16 %v4128, %v4128
        %v4481 = vpack.c.bf16 %v4129, %v4129
        %v4482 = vld [vmem:[%s948] sm:$0xf]
        %v4483 = vld [vmem:[%s948 + $0x4] sm:$0xf]
        %v4484 = vld [vmem:[%s948 + $0x8] sm:$0xf]
        %v4485 = vld [vmem:[%s948 + $0xc] sm:$0xf]
        %v4486 = vld [vmem:[%s948 + $0x10] sm:$0xf]
        %v4487 = vld [vmem:[%s948 + $0x14] sm:$0xf]
        %v4488 = vld [vmem:[%s948 + $0x18] sm:$0xf]
        %v4489 = vld [vmem:[%s948 + $0x1c] sm:$0xf]
        %v4490 = vld [vmem:[%s948 + $0x20] sm:$0xf]
        %v4491 = vld [vmem:[%s948 + $0x24] sm:$0xf]
        %v4492 = vld [vmem:[%s948 + $0x28] sm:$0xf]
        %v4493 = vld [vmem:[%s948 + $0x2c] sm:$0xf]
        %v4494 = vld [vmem:[%s948 + $0x30] sm:$0xf]
        %v4495 = vld [vmem:[%s948 + $0x34] sm:$0xf]
        %v4496 = vld [vmem:[%s948 + $0x38] sm:$0xf]
        %v4497 = vld [vmem:[%s948 + $0x3c] sm:$0xf]
        %v4498 = vld [vmem:[%s948 + $0x40] sm:$0xf]
        %v4499 = vld [vmem:[%s948 + $0x44] sm:$0xf]
        %v4500 = vld [vmem:[%s948 + $0x48] sm:$0xf]
        %v4501 = vld [vmem:[%s948 + $0x4c] sm:$0xf]
        %v4502 = vld [vmem:[%s948 + $0x50] sm:$0xf]
        %v4503 = vld [vmem:[%s948 + $0x54] sm:$0xf]
        %v4504 = vld [vmem:[%s948 + $0x58] sm:$0xf]
        %v4505 = vld [vmem:[%s948 + $0x5c] sm:$0xf]
        %v4506 = vld [vmem:[%s948 + $0x60] sm:$0xf]
        %v4507 = vld [vmem:[%s948 + $0x64] sm:$0xf]
        %v4508 = vld [vmem:[%s948 + $0x68] sm:$0xf]
        %v4509 = vld [vmem:[%s948 + $0x6c] sm:$0xf]
        %v4510 = vld [vmem:[%s948 + $0x70] sm:$0xf]
        %v4511 = vld [vmem:[%s948 + $0x74] sm:$0xf]
        %v4512 = vld [vmem:[%s948 + $0x78] sm:$0xf]
        %v4513 = vld [vmem:[%s948 + $0x7c] sm:$0xf]
        %v4514 = vld [vmem:[%s948 + $0x80] sm:$0xf]
        %v4515 = vld [vmem:[%s948 + $0x84] sm:$0xf]
        %v4516 = vld [vmem:[%s948 + $0x88] sm:$0xf]
        %v4517 = vld [vmem:[%s948 + $0x8c] sm:$0xf]
        %v4518 = vld [vmem:[%s948 + $0x90] sm:$0xf]
        %v4519 = vld [vmem:[%s948 + $0x94] sm:$0xf]
        %v4520 = vld [vmem:[%s948 + $0x98] sm:$0xf]
        %v4521 = vld [vmem:[%s948 + $0x9c] sm:$0xf]
        %v4522 = vld [vmem:[%s948 + $0xa0] sm:$0xf]
        %v4523 = vld [vmem:[%s948 + $0xa4] sm:$0xf]
        %v4524 = vld [vmem:[%s948 + $0xa8] sm:$0xf]
        %v4525 = vld [vmem:[%s948 + $0xac] sm:$0xf]
        %v4526 = vld [vmem:[%s948 + $0xb0] sm:$0xf]
        %v4527 = vld [vmem:[%s948 + $0xb4] sm:$0xf]
        %v4528 = vld [vmem:[%s948 + $0xb8] sm:$0xf]
        %v4529 = vld [vmem:[%s948 + $0xbc] sm:$0xf]
        %v4530 = vld [vmem:[%s948 + $0xc0] sm:$0xf]
        %v4531 = vld [vmem:[%s948 + $0xc4] sm:$0xf]
        %v4532 = vld [vmem:[%s948 + $0xc8] sm:$0xf]
        %v4533 = vld [vmem:[%s948 + $0xcc] sm:$0xf]
        %v4534 = vld [vmem:[%s948 + $0xd0] sm:$0xf]
        %v4535 = vld [vmem:[%s948 + $0xd4] sm:$0xf]
        %v4536 = vld [vmem:[%s948 + $0xd8] sm:$0xf]
        %v4537 = vld [vmem:[%s948 + $0xdc] sm:$0xf]
        %v4538 = vld [vmem:[%s948 + $0xe0] sm:$0xf]
        %v4539 = vld [vmem:[%s948 + $0xe4] sm:$0xf]
        %v4540 = vld [vmem:[%s948 + $0xe8] sm:$0xf]
        %v4541 = vld [vmem:[%s948 + $0xec] sm:$0xf]
        %v4542 = vld [vmem:[%s948 + $0xf0] sm:$0xf]
        %v4543 = vld [vmem:[%s948 + $0xf4] sm:$0xf]
        %v4544 = vld [vmem:[%s948 + $0xf8] sm:$0xf]
        %v4545 = vld [vmem:[%s948 + $0xfc] sm:$0xf]
        %v4546 = vld [vmem:[%s951] sm:$0x1]
        %v4548 = vlaneseq
        %v4549 = vshrl.u32 %v4548, 7
        %v4550 = vsub.s32 0, %v4549
        %v4551 = vrot.slane %v4546, %v4550
        %v4617 = vunpack.c.l.b16 %v4482
        %v4618 = vunpack.c.l.b16 %v4483
        %v4619 = vunpack.c.l.b16 %v4484
        %v4620 = vunpack.c.l.b16 %v4485
        %v4621 = vunpack.c.l.b16 %v4486
        %v4622 = vunpack.c.l.b16 %v4487
        %v4623 = vunpack.c.l.b16 %v4488
        %v4624 = vunpack.c.l.b16 %v4489
        %v4625 = vunpack.c.l.b16 %v4490
        %v4626 = vunpack.c.l.b16 %v4491
        %v4627 = vunpack.c.l.b16 %v4492
        %v4628 = vunpack.c.l.b16 %v4493
        %v4629 = vunpack.c.l.b16 %v4494
        %v4630 = vunpack.c.l.b16 %v4495
        %v4631 = vunpack.c.l.b16 %v4496
        %v4632 = vunpack.c.l.b16 %v4497
        %v4633 = vunpack.c.l.b16 %v4498
        %v4634 = vunpack.c.l.b16 %v4499
        %v4635 = vunpack.c.l.b16 %v4500
        %v4636 = vunpack.c.l.b16 %v4501
        %v4637 = vunpack.c.l.b16 %v4502
        %v4638 = vunpack.c.l.b16 %v4503
        %v4639 = vunpack.c.l.b16 %v4504
        %v4640 = vunpack.c.l.b16 %v4505
        %v4641 = vunpack.c.l.b16 %v4506
        %v4642 = vunpack.c.l.b16 %v4507
        %v4643 = vunpack.c.l.b16 %v4508
        %v4644 = vunpack.c.l.b16 %v4509
        %v4645 = vunpack.c.l.b16 %v4510
        %v4646 = vunpack.c.l.b16 %v4511
        %v4647 = vunpack.c.l.b16 %v4512
        %v4648 = vunpack.c.l.b16 %v4513
        %v4649 = vunpack.c.l.b16 %v4514
        %v4650 = vunpack.c.l.b16 %v4515
        %v4651 = vunpack.c.l.b16 %v4516
        %v4652 = vunpack.c.l.b16 %v4517
        %v4653 = vunpack.c.l.b16 %v4518
        %v4654 = vunpack.c.l.b16 %v4519
        %v4655 = vunpack.c.l.b16 %v4520
        %v4656 = vunpack.c.l.b16 %v4521
        %v4657 = vunpack.c.l.b16 %v4522
        %v4658 = vunpack.c.l.b16 %v4523
        %v4659 = vunpack.c.l.b16 %v4524
        %v4660 = vunpack.c.l.b16 %v4525
        %v4661 = vunpack.c.l.b16 %v4526
        %v4662 = vunpack.c.l.b16 %v4527
        %v4663 = vunpack.c.l.b16 %v4528
        %v4664 = vunpack.c.l.b16 %v4529
        %v4665 = vunpack.c.l.b16 %v4530
        %v4666 = vunpack.c.l.b16 %v4531
        %v4667 = vunpack.c.l.b16 %v4532
        %v4668 = vunpack.c.l.b16 %v4533
        %v4669 = vunpack.c.l.b16 %v4534
        %v4670 = vunpack.c.l.b16 %v4535
        %v4671 = vunpack.c.l.b16 %v4536
        %v4672 = vunpack.c.l.b16 %v4537
        %v4673 = vunpack.c.l.b16 %v4538
        %v4674 = vunpack.c.l.b16 %v4539
        %v4675 = vunpack.c.l.b16 %v4540
        %v4676 = vunpack.c.l.b16 %v4541
        %v4677 = vunpack.c.l.b16 %v4542
        %v4678 = vunpack.c.l.b16 %v4543
        %v4679 = vunpack.c.l.b16 %v4544
        %v4680 = vunpack.c.l.b16 %v4545
        %v4681 = vpack.c.b16 %v4618, %v4617
        %v4682 = vpack.c.b16 %v4620, %v4619
        %v4683 = vpack.c.b16 %v4622, %v4621
        %v4684 = vpack.c.b16 %v4624, %v4623
        %v4685 = vpack.c.b16 %v4626, %v4625
        %v4686 = vpack.c.b16 %v4628, %v4627
        %v4687 = vpack.c.b16 %v4630, %v4629
        %v4688 = vpack.c.b16 %v4632, %v4631
        %v4689 = vpack.c.b16 %v4634, %v4633
        %v4690 = vpack.c.b16 %v4636, %v4635
        %v4691 = vpack.c.b16 %v4638, %v4637
        %v4692 = vpack.c.b16 %v4640, %v4639
        %v4693 = vpack.c.b16 %v4642, %v4641
        %v4694 = vpack.c.b16 %v4644, %v4643
        %v4695 = vpack.c.b16 %v4646, %v4645
        %v4696 = vpack.c.b16 %v4648, %v4647
        %v4697 = vpack.c.b16 %v4650, %v4649
        %v4698 = vpack.c.b16 %v4652, %v4651
        %v4699 = vpack.c.b16 %v4654, %v4653
        %v4700 = vpack.c.b16 %v4656, %v4655
        %v4701 = vpack.c.b16 %v4658, %v4657
        %v4702 = vpack.c.b16 %v4660, %v4659
        %v4703 = vpack.c.b16 %v4662, %v4661
        %v4704 = vpack.c.b16 %v4664, %v4663
        %v4705 = vpack.c.b16 %v4666, %v4665
        %v4706 = vpack.c.b16 %v4668, %v4667
        %v4707 = vpack.c.b16 %v4670, %v4669
        %v4708 = vpack.c.b16 %v4672, %v4671
        %v4709 = vpack.c.b16 %v4674, %v4673
        %v4710 = vpack.c.b16 %v4676, %v4675
        %v4711 = vpack.c.b16 %v4678, %v4677
        %v4712 = vpack.c.b16 %v4680, %v4679
        %4745 = vmatprep.subr.bf16.mxu0 0
        %4746 = vmatpush1.bf16.msra.mxu0 %v4681
        %4747 = vmatprep.subr.bf16.mxu0 0
        %4748 = vmatpush1.bf16.msra.mxu0 %v4682
        %4749 = vmatprep.subr.bf16.mxu0 0
        %4750 = vmatpush1.bf16.msra.mxu0 %v4683
        %4751 = vmatprep.subr.bf16.mxu0 0
        %4752 = vmatpush1.bf16.msra.mxu0 %v4684
        %4753 = vmatprep.subr.bf16.mxu0 0
        %4754 = vmatpush1.bf16.msra.mxu0 %v4685
        %4755 = vmatprep.subr.bf16.mxu0 0
        %4756 = vmatpush1.bf16.msra.mxu0 %v4686
        %4757 = vmatprep.subr.bf16.mxu0 0
        %4758 = vmatpush1.bf16.msra.mxu0 %v4687
        %4759 = vmatprep.subr.bf16.mxu0 0
        %4760 = vmatpush1.bf16.msra.mxu0 %v4688
        %4761 = vmatprep.subr.bf16.mxu0 0
        %4762 = vmatpush1.bf16.msra.mxu0 %v4689
        %4763 = vmatprep.subr.bf16.mxu0 0
        %4764 = vmatpush1.bf16.msra.mxu0 %v4690
        %4765 = vmatprep.subr.bf16.mxu0 0
        %4766 = vmatpush1.bf16.msra.mxu0 %v4691
        %4767 = vmatprep.subr.bf16.mxu0 0
        %4768 = vmatpush1.bf16.msra.mxu0 %v4692
        %4769 = vmatprep.subr.bf16.mxu0 0
        %4770 = vmatpush1.bf16.msra.mxu0 %v4693
        %4771 = vmatprep.subr.bf16.mxu0 0
        %4772 = vmatpush1.bf16.msra.mxu0 %v4694
        %4773 = vmatprep.subr.bf16.mxu0 0
        %4774 = vmatpush1.bf16.msra.mxu0 %v4695
        %4775 = vmatprep.subr.bf16.mxu0 0
        %4776 = vmatpush1.bf16.msra.mxu0 %v4696
        %4777 = vmatprep.mubr.bf16.mxu0 %v4479
        %4778 = vmatmul.mubr.bf16.gmra.mrb[0].mxu0 %v4478
        %v4779 = vpop.f32.mrb[0].mxu0
        %v4780 = vadd.f32 %v4551, %v4779
        %v4781 = vpop.f32.mrb[0].mxu0
        %v4782 = vpop.f32.mrb[0].mxu0
        %v4783 = vpop.f32.mrb[0].mxu0
        %4784 = vdwg.mxu0
        %4785 = vmatprep.subr.bf16.mxu0 0
        %4786 = vmatpush1.bf16.msra.mxu0 %v4697
        %4787 = vmatprep.subr.bf16.mxu0 0
        %4788 = vmatpush1.bf16.msra.mxu0 %v4698
        %4789 = vmatprep.subr.bf16.mxu0 0
        %4790 = vmatpush1.bf16.msra.mxu0 %v4699
        %4791 = vmatprep.subr.bf16.mxu0 0
        %4792 = vmatpush1.bf16.msra.mxu0 %v4700
        %4793 = vmatprep.subr.bf16.mxu0 0
        %4794 = vmatpush1.bf16.msra.mxu0 %v4701
        %4795 = vmatprep.subr.bf16.mxu0 0
        %4796 = vmatpush1.bf16.msra.mxu0 %v4702
        %4797 = vmatprep.subr.bf16.mxu0 0
        %4798 = vmatpush1.bf16.msra.mxu0 %v4703
        %4799 = vmatprep.subr.bf16.mxu0 0
        %4800 = vmatpush1.bf16.msra.mxu0 %v4704
        %4801 = vmatprep.subr.bf16.mxu0 0
        %4802 = vmatpush1.bf16.msra.mxu0 %v4705
        %4803 = vmatprep.subr.bf16.mxu0 0
        %4804 = vmatpush1.bf16.msra.mxu0 %v4706
        %4805 = vmatprep.subr.bf16.mxu0 0
        %4806 = vmatpush1.bf16.msra.mxu0 %v4707
        %4807 = vmatprep.subr.bf16.mxu0 0
        %4808 = vmatpush1.bf16.msra.mxu0 %v4708
        %4809 = vmatprep.subr.bf16.mxu0 0
        %4810 = vmatpush1.bf16.msra.mxu0 %v4709
        %4811 = vmatprep.subr.bf16.mxu0 0
        %4812 = vmatpush1.bf16.msra.mxu0 %v4710
        %4813 = vmatprep.subr.bf16.mxu0 0
        %4814 = vmatpush1.bf16.msra.mxu0 %v4711
        %4815 = vmatprep.subr.bf16.mxu0 0
        %4816 = vmatpush1.bf16.msra.mxu0 %v4712
        %4817 = vmatprep.mubr.bf16.mxu0 %v4481
        %4818 = vmatmul.mubr.bf16.gmra.mrb[0].mxu0 %v4480
        %v4819 = vpop.f32.mrb[0].mxu0
        %v4820 = vadd.f32 %v4780, %v4819
        %v4821 = vpop.f32.mrb[0].mxu0
        %v4822 = vpop.f32.mrb[0].mxu0
        %v4823 = vpop.f32.mrb[0].mxu0
        %4824 = vdwg.mxu0
        %v4825 = vsub.f32 1.0, %v1937
        %v4826 = vmul.f32 %v4477, 1.442695
        %v4827 = vpow.pop %v4826
        %v4828 = vmul.f32 %v1929, %v4827
        %v4829 = vadd.f32 %v4828, %v4820
        %v4830 = vmul.f32 %v4825, %v4829
        %v4831 = vadd.f32 %v1938, %v4830
        %vm4832 = vcmask 123904
        %4833 = vst.msk [vmem:[#allocation2] sm:$0x3] %vm4832, %v4831
        %p4834 = scmp.eq.s32.totalorder %s42, 3
        // Predicated region
        $region125: #{forward.3} parent=115 // pred_check
          %p4835 = pneg %p4834
        $region126: #{forward.3} parent=115 // pred_check_branch
          %4837 = sbr.rel (%p4835) target = $region128
        $region127: #{forward.3} parent=115 // pred_region
          %v4838 = vmul.f32 %v4831, 0.05
          %v4839 = vpack.c.bf16 %v4838, %v4838
          %v4840 = vld [vmem:[%s22] sm:$0xff]
          %v4841 = vld [vmem:[%s22 + $0x8] sm:$0xff]
          %v4842 = vld [vmem:[%s22 + $0x10] sm:$0xff]
          %v4843 = vld [vmem:[%s22 + $0x18] sm:$0xff]
          %v4844 = vld [vmem:[%s22 + $0x20] sm:$0xff]
          %v4845 = vld [vmem:[%s22 + $0x28] sm:$0xff]
          %v4846 = vld [vmem:[%s22 + $0x30] sm:$0xff]
          %v4847 = vld [vmem:[%s22 + $0x38] sm:$0xff]
          %v4848 = vld [vmem:[%s22 + $0x40] sm:$0xff]
          %v4849 = vld [vmem:[%s22 + $0x48] sm:$0xff]
          %v4850 = vld [vmem:[%s22 + $0x50] sm:$0xff]
          %v4851 = vld [vmem:[%s22 + $0x58] sm:$0xff]
          %v4852 = vld [vmem:[%s23] sm:$0xff]
          %v4853 = vld [vmem:[%s23 + $0x8] sm:$0xf]
          %v4856 = vlaneseq
          %v4857 = vshrl.u32 %v4856, 7
          %v4858 = vsub.s32 0, %v4857
          %v4859 = vrot.slane %v4852, %v4858
          %v4860 = vlaneseq
          %v4861 = vshrl.u32 %v4860, 7
          %v4862 = vsub.s32 1, %v4861
          %v4863 = vrot.slane %v4852, %v4862
          %v4864 = vlaneseq
          %v4865 = vshrl.u32 %v4864, 7
          %v4866 = vsub.s32 2, %v4865
          %v4867 = vrot.slane %v4852, %v4866
          %v4868 = vlaneseq
          %v4869 = vshrl.u32 %v4868, 7
          %v4870 = vsub.s32 3, %v4869
          %v4871 = vrot.slane %v4852, %v4870
          %v4872 = vlaneseq
          %v4873 = vshrl.u32 %v4872, 7
          %v4874 = vsub.s32 4, %v4873
          %v4875 = vrot.slane %v4852, %v4874
          %v4876 = vlaneseq
          %v4877 = vshrl.u32 %v4876, 7
          %v4878 = vsub.s32 5, %v4877
          %v4879 = vrot.slane %v4852, %v4878
          %v4880 = vlaneseq
          %v4881 = vshrl.u32 %v4880, 7
          %v4882 = vsub.s32 6, %v4881
          %v4883 = vrot.slane %v4852, %v4882
          %v4884 = vlaneseq
          %v4885 = vshrl.u32 %v4884, 7
          %v4886 = vsub.s32 7, %v4885
          %v4887 = vrot.slane %v4852, %v4886
          %v4888 = vlaneseq
          %v4889 = vshrl.u32 %v4888, 7
          %v4890 = vsub.s32 0, %v4889
          %v4891 = vrot.slane %v4853, %v4890
          %v4892 = vlaneseq
          %v4893 = vshrl.u32 %v4892, 7
          %v4894 = vsub.s32 1, %v4893
          %v4895 = vrot.slane %v4853, %v4894
          %v4896 = vlaneseq
          %v4897 = vshrl.u32 %v4896, 7
          %v4898 = vsub.s32 2, %v4897
          %v4899 = vrot.slane %v4853, %v4898
          %v4900 = vlaneseq
          %v4901 = vshrl.u32 %v4900, 7
          %v4902 = vsub.s32 3, %v4901
          %v4903 = vrot.slane %v4853, %v4902
          %v4928 = vunpack.c.l.b16 %v4840
          %v4929 = vunpack.c.h.b16 %v4840
          %v4930 = vunpack.c.l.b16 %v4841
          %v4931 = vunpack.c.h.b16 %v4841
          %v4932 = vunpack.c.l.b16 %v4842
          %v4933 = vunpack.c.h.b16 %v4842
          %v4934 = vunpack.c.l.b16 %v4843
          %v4935 = vunpack.c.h.b16 %v4843
          %v4936 = vunpack.c.l.b16 %v4844
          %v4937 = vunpack.c.h.b16 %v4844
          %v4938 = vunpack.c.l.b16 %v4845
          %v4939 = vunpack.c.h.b16 %v4845
          %v4940 = vunpack.c.l.b16 %v4846
          %v4941 = vunpack.c.h.b16 %v4846
          %v4942 = vunpack.c.l.b16 %v4847
          %v4943 = vunpack.c.h.b16 %v4847
          %v4944 = vunpack.c.l.b16 %v4848
          %v4945 = vunpack.c.h.b16 %v4848
          %v4946 = vunpack.c.l.b16 %v4849
          %v4947 = vunpack.c.h.b16 %v4849
          %v4948 = vunpack.c.l.b16 %v4850
          %v4949 = vunpack.c.h.b16 %v4850
          %v4950 = vunpack.c.l.b16 %v4851
          %v4951 = vunpack.c.h.b16 %v4851
          %v4952 = vpack.c.b16 %v4940, %v4928
          %v4953 = vpack.c.b16 %v4941, %v4929
          %v4954 = vpack.c.b16 %v4942, %v4930
          %v4955 = vpack.c.b16 %v4943, %v4931
          %v4956 = vpack.c.b16 %v4944, %v4932
          %v4957 = vpack.c.b16 %v4945, %v4933
          %v4958 = vpack.c.b16 %v4946, %v4934
          %v4959 = vpack.c.b16 %v4947, %v4935
          %v4960 = vpack.c.b16 %v4948, %v4936
          %v4961 = vpack.c.b16 %v4949, %v4937
          %v4962 = vpack.c.b16 %v4950, %v4938
          %v4963 = vpack.c.b16 %v4951, %v4939
          %v4977 = vsel %vm2030, %v4839, 0
          %4979 = vmatprep.subr.bf16.mxu0 %v4953
          %4980 = vmatpush1.bf16.msra.mxu0 %v4952
          %4981 = vmatprep.subr.bf16.mxu0 0
          %4982 = vmatpush1.bf16.msra.mxu0 0
          %4983 = vmatprep.subr.bf16.mxu0 0
          %4984 = vmatpush1.bf16.msra.mxu0 0
          %4985 = vmatprep.subr.bf16.mxu0 0
          %4986 = vmatpush1.bf16.msra.mxu0 0
          %4987 = vmatprep.subr.bf16.mxu0 0
          %4988 = vmatpush1.bf16.msra.mxu0 0
          %4989 = vmatprep.subr.bf16.mxu0 0
          %4990 = vmatpush1.bf16.msra.mxu0 0
          %4991 = vmatprep.subr.bf16.mxu0 0
          %4992 = vmatpush1.bf16.msra.mxu0 0
          %4993 = vmatprep.subr.bf16.mxu0 0
          %4994 = vmatpush1.bf16.msra.mxu0 0
          %4995 = vmatprep.subr.bf16.mxu0 0
          %4996 = vmatpush1.bf16.msra.mxu0 0
          %4997 = vmatprep.subr.bf16.mxu0 0
          %4998 = vmatpush1.bf16.msra.mxu0 0
          %4999 = vmatprep.subr.bf16.mxu0 0
          %5000 = vmatpush1.bf16.msra.mxu0 0
          %5001 = vmatprep.subr.bf16.mxu0 0
          %5002 = vmatpush1.bf16.msra.mxu0 0
          %5003 = vmatprep.subr.bf16.mxu0 0
          %5004 = vmatpush1.bf16.msra.mxu0 0
          %5005 = vmatprep.subr.bf16.mxu0 0
          %5006 = vmatpush1.bf16.msra.mxu0 0
          %5007 = vmatprep.subr.bf16.mxu0 0
          %5008 = vmatpush1.bf16.msra.mxu0 0
          %5009 = vmatprep.subr.bf16.mxu0 0
          %5010 = vmatpush1.bf16.msra.mxu0 0
          %5011 = vmatprep.mubr.bf16.mxu0 0
          %5012 = vmatmul.mubr.bf16.gmra.mrb[0].mxu0 %v4977
          %v5013 = vpop.f32.mrb[0].mxu0
          %v5014 = vadd.f32 %v4859, %v5013
          %v5015 = vpop.f32.mrb[0].mxu0
          %v5016 = vadd.f32 %v4863, %v5015
          %v5017 = vpop.f32.mrb[0].mxu0
          %v5018 = vpop.f32.mrb[0].mxu0
          %5019 = vdwg.mxu0
          %5020 = vmatprep.subr.bf16.mxu0 %v4955
          %5021 = vmatpush1.bf16.msra.mxu0 %v4954
          %5022 = vmatprep.subr.bf16.mxu0 0
          %5023 = vmatpush1.bf16.msra.mxu0 0
          %5024 = vmatprep.subr.bf16.mxu0 0
          %5025 = vmatpush1.bf16.msra.mxu0 0
          %5026 = vmatprep.subr.bf16.mxu0 0
          %5027 = vmatpush1.bf16.msra.mxu0 0
          %5028 = vmatprep.subr.bf16.mxu0 0
          %5029 = vmatpush1.bf16.msra.mxu0 0
          %5030 = vmatprep.subr.bf16.mxu0 0
          %5031 = vmatpush1.bf16.msra.mxu0 0
          %5032 = vmatprep.subr.bf16.mxu0 0
          %5033 = vmatpush1.bf16.msra.mxu0 0
          %5034 = vmatprep.subr.bf16.mxu0 0
          %5035 = vmatpush1.bf16.msra.mxu0 0
          %5036 = vmatprep.subr.bf16.mxu0 0
          %5037 = vmatpush1.bf16.msra.mxu0 0
          %5038 = vmatprep.subr.bf16.mxu0 0
          %5039 = vmatpush1.bf16.msra.mxu0 0
          %5040 = vmatprep.subr.bf16.mxu0 0
          %5041 = vmatpush1.bf16.msra.mxu0 0
          %5042 = vmatprep.subr.bf16.mxu0 0
          %5043 = vmatpush1.bf16.msra.mxu0 0
          %5044 = vmatprep.subr.bf16.mxu0 0
          %5045 = vmatpush1.bf16.msra.mxu0 0
          %5046 = vmatprep.subr.bf16.mxu0 0
          %5047 = vmatpush1.bf16.msra.mxu0 0
          %5048 = vmatprep.subr.bf16.mxu0 0
          %5049 = vmatpush1.bf16.msra.mxu0 0
          %5050 = vmatprep.subr.bf16.mxu0 0
          %5051 = vmatpush1.bf16.msra.mxu0 0
          %5052 = vmatprep.mubr.bf16.mxu0 0
          %5053 = vmatmul.mubr.bf16.gmra.mrb[0].mxu0 %v4977
          %v5054 = vpop.f32.mrb[0].mxu0
          %v5055 = vadd.f32 %v4867, %v5054
          %v5056 = vpop.f32.mrb[0].mxu0
          %v5057 = vadd.f32 %v4871, %v5056
          %v5058 = vpop.f32.mrb[0].mxu0
          %v5059 = vpop.f32.mrb[0].mxu0
          %5060 = vdwg.mxu0
          %5061 = vmatprep.subr.bf16.mxu0 %v4957
          %5062 = vmatpush1.bf16.msra.mxu0 %v4956
          %5063 = vmatprep.subr.bf16.mxu0 0
          %5064 = vmatpush1.bf16.msra.mxu0 0
          %5065 = vmatprep.subr.bf16.mxu0 0
          %5066 = vmatpush1.bf16.msra.mxu0 0
          %5067 = vmatprep.subr.bf16.mxu0 0
          %5068 = vmatpush1.bf16.msra.mxu0 0
          %5069 = vmatprep.subr.bf16.mxu0 0
          %5070 = vmatpush1.bf16.msra.mxu0 0
          %5071 = vmatprep.subr.bf16.mxu0 0
          %5072 = vmatpush1.bf16.msra.mxu0 0
          %5073 = vmatprep.subr.bf16.mxu0 0
          %5074 = vmatpush1.bf16.msra.mxu0 0
          %5075 = vmatprep.subr.bf16.mxu0 0
          %5076 = vmatpush1.bf16.msra.mxu0 0
          %5077 = vmatprep.subr.bf16.mxu0 0
          %5078 = vmatpush1.bf16.msra.mxu0 0
          %5079 = vmatprep.subr.bf16.mxu0 0
          %5080 = vmatpush1.bf16.msra.mxu0 0
          %5081 = vmatprep.subr.bf16.mxu0 0
          %5082 = vmatpush1.bf16.msra.mxu0 0
          %5083 = vmatprep.subr.bf16.mxu0 0
          %5084 = vmatpush1.bf16.msra.mxu0 0
          %5085 = vmatprep.subr.bf16.mxu0 0
          %5086 = vmatpush1.bf16.msra.mxu0 0
          %5087 = vmatprep.subr.bf16.mxu0 0
          %5088 = vmatpush1.bf16.msra.mxu0 0
          %5089 = vmatprep.subr.bf16.mxu0 0
          %5090 = vmatpush1.bf16.msra.mxu0 0
          %5091 = vmatprep.subr.bf16.mxu0 0
          %5092 = vmatpush1.bf16.msra.mxu0 0
          %5093 = vmatprep.mubr.bf16.mxu0 0
          %5094 = vmatmul.mubr.bf16.gmra.mrb[0].mxu0 %v4977
          %v5095 = vpop.f32.mrb[0].mxu0
          %v5096 = vadd.f32 %v4875, %v5095
          %v5097 = vpop.f32.mrb[0].mxu0
          %v5098 = vadd.f32 %v4879, %v5097
          %v5099 = vpop.f32.mrb[0].mxu0
          %v5100 = vpop.f32.mrb[0].mxu0
          %5101 = vdwg.mxu0
          %5102 = vmatprep.subr.bf16.mxu0 %v4959
          %5103 = vmatpush1.bf16.msra.mxu0 %v4958
          %5104 = vmatprep.subr.bf16.mxu0 0
          %5105 = vmatpush1.bf16.msra.mxu0 0
          %5106 = vmatprep.subr.bf16.mxu0 0
          %5107 = vmatpush1.bf16.msra.mxu0 0
          %5108 = vmatprep.subr.bf16.mxu0 0
          %5109 = vmatpush1.bf16.msra.mxu0 0
          %5110 = vmatprep.subr.bf16.mxu0 0
          %5111 = vmatpush1.bf16.msra.mxu0 0
          %5112 = vmatprep.subr.bf16.mxu0 0
          %5113 = vmatpush1.bf16.msra.mxu0 0
          %5114 = vmatprep.subr.bf16.mxu0 0
          %5115 = vmatpush1.bf16.msra.mxu0 0
          %5116 = vmatprep.subr.bf16.mxu0 0
          %5117 = vmatpush1.bf16.msra.mxu0 0
          %5118 = vmatprep.subr.bf16.mxu0 0
          %5119 = vmatpush1.bf16.msra.mxu0 0
          %5120 = vmatprep.subr.bf16.mxu0 0
          %5121 = vmatpush1.bf16.msra.mxu0 0
          %5122 = vmatprep.subr.bf16.mxu0 0
          %5123 = vmatpush1.bf16.msra.mxu0 0
          %5124 = vmatprep.subr.bf16.mxu0 0
          %5125 = vmatpush1.bf16.msra.mxu0 0
          %5126 = vmatprep.subr.bf16.mxu0 0
          %5127 = vmatpush1.bf16.msra.mxu0 0
          %5128 = vmatprep.subr.bf16.mxu0 0
          %5129 = vmatpush1.bf16.msra.mxu0 0
          %5130 = vmatprep.subr.bf16.mxu0 0
          %5131 = vmatpush1.bf16.msra.mxu0 0
          %5132 = vmatprep.subr.bf16.mxu0 0
          %5133 = vmatpush1.bf16.msra.mxu0 0
          %5134 = vmatprep.mubr.bf16.mxu0 0
          %5135 = vmatmul.mubr.bf16.gmra.mrb[0].mxu0 %v4977
          %v5136 = vpop.f32.mrb[0].mxu0
          %v5137 = vadd.f32 %v4883, %v5136
          %v5138 = vpop.f32.mrb[0].mxu0
          %v5139 = vadd.f32 %v4887, %v5138
          %v5140 = vpop.f32.mrb[0].mxu0
          %v5141 = vpop.f32.mrb[0].mxu0
          %5142 = vdwg.mxu0
          %5143 = vmatprep.subr.bf16.mxu0 %v4961
          %5144 = vmatpush1.bf16.msra.mxu0 %v4960
          %5145 = vmatprep.subr.bf16.mxu0 0
          %5146 = vmatpush1.bf16.msra.mxu0 0
          %5147 = vmatprep.subr.bf16.mxu0 0
          %5148 = vmatpush1.bf16.msra.mxu0 0
          %5149 = vmatprep.subr.bf16.mxu0 0
          %5150 = vmatpush1.bf16.msra.mxu0 0
          %5151 = vmatprep.subr.bf16.mxu0 0
          %5152 = vmatpush1.bf16.msra.mxu0 0
          %5153 = vmatprep.subr.bf16.mxu0 0
          %5154 = vmatpush1.bf16.msra.mxu0 0
          %5155 = vmatprep.subr.bf16.mxu0 0
          %5156 = vmatpush1.bf16.msra.mxu0 0
          %5157 = vmatprep.subr.bf16.mxu0 0
          %5158 = vmatpush1.bf16.msra.mxu0 0
          %5159 = vmatprep.subr.bf16.mxu0 0
          %5160 = vmatpush1.bf16.msra.mxu0 0
          %5161 = vmatprep.subr.bf16.mxu0 0
          %5162 = vmatpush1.bf16.msra.mxu0 0
          %5163 = vmatprep.subr.bf16.mxu0 0
          %5164 = vmatpush1.bf16.msra.mxu0 0
          %5165 = vmatprep.subr.bf16.mxu0 0
          %5166 = vmatpush1.bf16.msra.mxu0 0
          %5167 = vmatprep.subr.bf16.mxu0 0
          %5168 = vmatpush1.bf16.msra.mxu0 0
          %5169 = vmatprep.subr.bf16.mxu0 0
          %5170 = vmatpush1.bf16.msra.mxu0 0
          %5171 = vmatprep.subr.bf16.mxu0 0
          %5172 = vmatpush1.bf16.msra.mxu0 0
          %5173 = vmatprep.subr.bf16.mxu0 0
          %5174 = vmatpush1.bf16.msra.mxu0 0
          %5175 = vmatprep.mubr.bf16.mxu0 0
          %5176 = vmatmul.mubr.bf16.gmra.mrb[0].mxu0 %v4977
          %v5177 = vpop.f32.mrb[0].mxu0
          %v5178 = vadd.f32 %v4891, %v5177
          %v5179 = vpop.f32.mrb[0].mxu0
          %v5180 = vadd.f32 %v4895, %v5179
          %v5181 = vpop.f32.mrb[0].mxu0
          %v5182 = vpop.f32.mrb[0].mxu0
          %5183 = vdwg.mxu0
          %5184 = vmatprep.subr.bf16.mxu0 %v4963
          %5185 = vmatpush1.bf16.msra.mxu0 %v4962
          %5186 = vmatprep.subr.bf16.mxu0 0
          %5187 = vmatpush1.bf16.msra.mxu0 0
          %5188 = vmatprep.subr.bf16.mxu0 0
          %5189 = vmatpush1.bf16.msra.mxu0 0
          %5190 = vmatprep.subr.bf16.mxu0 0
          %5191 = vmatpush1.bf16.msra.mxu0 0
          %5192 = vmatprep.subr.bf16.mxu0 0
          %5193 = vmatpush1.bf16.msra.mxu0 0
          %5194 = vmatprep.subr.bf16.mxu0 0
          %5195 = vmatpush1.bf16.msra.mxu0 0
          %5196 = vmatprep.subr.bf16.mxu0 0
          %5197 = vmatpush1.bf16.msra.mxu0 0
          %5198 = vmatprep.subr.bf16.mxu0 0
          %5199 = vmatpush1.bf16.msra.mxu0 0
          %5200 = vmatprep.subr.bf16.mxu0 0
          %5201 = vmatpush1.bf16.msra.mxu0 0
          %5202 = vmatprep.subr.bf16.mxu0 0
          %5203 = vmatpush1.bf16.msra.mxu0 0
          %5204 = vmatprep.subr.bf16.mxu0 0
          %5205 = vmatpush1.bf16.msra.mxu0 0
          %5206 = vmatprep.subr.bf16.mxu0 0
          %5207 = vmatpush1.bf16.msra.mxu0 0
          %5208 = vmatprep.subr.bf16.mxu0 0
          %5209 = vmatpush1.bf16.msra.mxu0 0
          %5210 = vmatprep.subr.bf16.mxu0 0
          %5211 = vmatpush1.bf16.msra.mxu0 0
          %5212 = vmatprep.subr.bf16.mxu0 0
          %5213 = vmatpush1.bf16.msra.mxu0 0
          %5214 = vmatprep.subr.bf16.mxu0 0
          %5215 = vmatpush1.bf16.msra.mxu0 0
          %5216 = vmatprep.mubr.bf16.mxu0 0
          %5217 = vmatmul.mubr.bf16.gmra.mrb[0].mxu0 %v4977
          %v5218 = vpop.f32.mrb[0].mxu0
          %v5219 = vadd.f32 %v4899, %v5218
          %v5220 = vpop.f32.mrb[0].mxu0
          %v5221 = vadd.f32 %v4903, %v5220
          %v5222 = vpop.f32.mrb[0].mxu0
          %v5223 = vpop.f32.mrb[0].mxu0
          %5224 = vdwg.mxu0
          %v5237 = vcombine.low %v5014, %v5016
          %v5238 = vcombine.low %v5055, %v5057
          %v5240 = vunpack.c.l.s4 1983009808
          %v5241 = vunpack.c.0.s8 %v5240
          %v5242 = vlaneseq
          %v5243 = vshrl.u32 %v5242, 7
          %v5244 = vsub.s32 %v5241, %v5243
          %v5245 = vrot.slane %v5237, %v5244
          %v5247 = vunpack.c.l.s4 1983009808
          %v5248 = vunpack.c.0.s8 %v5247
          %v5249 = vlaneseq
          %v5250 = vshrl.u32 %v5249, 7
          %v5251 = vsub.s32 %v5248, %v5250
          %v5252 = vrot.slane %v5238, %v5251
          %v5253 = vcombine.low %v5245, %v5252
          %v5254 = vcombine.low %v5096, %v5098
          %v5255 = vcombine.low %v5137, %v5139
          %v5257 = vunpack.c.l.s4 1983009808
          %v5258 = vunpack.c.0.s8 %v5257
          %v5259 = vlaneseq
          %v5260 = vshrl.u32 %v5259, 7
          %v5261 = vsub.s32 %v5258, %v5260
          %v5262 = vrot.slane %v5254, %v5261
          %v5264 = vunpack.c.l.s4 1983009808
          %v5265 = vunpack.c.0.s8 %v5264
          %v5266 = vlaneseq
          %v5267 = vshrl.u32 %v5266, 7
          %v5268 = vsub.s32 %v5265, %v5267
          %v5269 = vrot.slane %v5255, %v5268
          %v5270 = vcombine.low %v5262, %v5269
          %v5271 = vcombine.low %v5178, %v5180
          %v5272 = vcombine.low %v5219, %v5221
          %v5274 = vunpack.c.l.s4 1983009808
          %v5275 = vunpack.c.0.s8 %v5274
          %v5276 = vlaneseq
          %v5277 = vshrl.u32 %v5276, 7
          %v5278 = vsub.s32 %v5275, %v5277
          %v5279 = vrot.slane %v5271, %v5278
          %v5281 = vunpack.c.l.s4 1983009808
          %v5282 = vunpack.c.0.s8 %v5281
          %v5283 = vlaneseq
          %v5284 = vshrl.u32 %v5283, 7
          %v5285 = vsub.s32 %v5282, %v5284
          %v5286 = vrot.slane %v5272, %v5285
          %v5287 = vcombine.low %v5279, %v5286
          %5291 = vst [vmem:[%s26] sm:$0xff] %v5253
          %5292 = vst [vmem:[%s26 + $0x8] sm:$0xff] %v5270
          %5293 = vst [vmem:[%s26 + $0x10] sm:$0xff] %v5287
        $region128: #{forward.3} parent=115 // pred_fallthru
          _
        // Predicated region
        $region129: #{forward.3} parent=115 // pred_check
          %p5294 = pneg %p609
        $region130: #{forward.3} parent=115 // pred_check_branch
          %5296 = sbr.rel (%p5294) target = $region132
        $region131: #{forward.3} parent=115 // pred_region
          %s5298 = ssub.s32 32, 32
          %5299 = vsyncadd [#allocation5], %s5298
          %s5301 = sshll.u32 [#allocation6], 4
          %s5302 = int_to_ptr.vmem [resolvable:$true] %s5301
          %5304 = dma.vmem_to_hbm [thread:$0]  %s5302, 32, %s24, [#allocation5]
        $region132: #{forward.3} parent=115 // pred_fallthru
          _
        // Predicated region
        $region133: #{forward.3} parent=115 // pred_check
          %p5305 = pneg %p630
        $region134: #{forward.3} parent=115 // pred_check_branch
          %5307 = sbr.rel (%p5305) target = $region136
        $region135: #{forward.3} parent=115 // pred_region
          _
        $region136: #{forward.3} parent=115 // pred_fallthru
          _
        // Predicated region
        $region137: #{forward.3} parent=115 // pred_check
          %p5308 = pneg %p651
        $region138: #{forward.3} parent=115 // pred_check_branch
          %5310 = sbr.rel (%p5308) target = $region140
        $region139: #{forward.3} parent=115 // pred_region
          _
        $region140: #{forward.3} parent=115 // pred_fallthru
          _
        // Predicated region
        $region141: #{forward.3} parent=115 // pred_check
          %p5311 = pneg %p609
        $region142: #{forward.3} parent=115 // pred_check_branch
          %5313 = sbr.rel (%p5311) target = $region144
        $region143: #{forward.3} parent=115 // pred_region
          %5314 = dma.done [#allocation5], 32
        $region144: #{forward.3} parent=115 // pred_fallthru
          _
        // Predicated region
        $region145: #{forward.3} parent=115 // pred_check
          %p5315 = pneg %p630
        $region146: #{forward.3} parent=115 // pred_check_branch
          %5317 = sbr.rel (%p5315) target = $region148
        $region147: #{forward.3} parent=115 // pred_region
          _
        $region148: #{forward.3} parent=115 // pred_fallthru
          _
        // Predicated region
        $region149: #{forward.3} parent=115 // pred_check
          %p5318 = pneg %p651
        $region150: #{forward.3} parent=115 // pred_check_branch
          %5320 = sbr.rel (%p5318) target = $region152
        $region151: #{forward.3} parent=115 // pred_region
          _
        $region152: #{forward.3} parent=115 // pred_fallthru
          _
      $region116: #{forward.3} parent=5 // pred_fallthru
        _
      %p5321 = scmp.le.s32.totalorder 2, %s37
      // Predicated region
      $region153: #{forward.3} parent=5 // pred_check
        %p5322 = pneg %p5321
      $region154: #{forward.3} parent=5 // pred_check_branch
        %5324 = sbr.rel (%p5322) target = $region156
      $region155: #{forward.3} parent=5 // pred_region
        %s5325 = ssub.s32 %s37, 2
      $region156: #{forward.3} parent=5 // pred_fallthru
        _
    $region6: #{forward.3} parent=1 // loop_footer
      %s41 = sadd.s32 1, %s37
    $region7: #{forward.3} parent=1 // loop_footer_branch
      %36 = sbr.rel target = $region3
    $region8: #{forward.3} parent=1 // loop_exit
      _
    %5326 = vsyncpa [#allocation4], 1
    %s5327 = scalar_lea.sflag [#allocation4], 1
    %5328 = vsyncpa %s5327, 1
    %5329 = vsyncpa [#allocation5], 1
    %s5330 = scalar_lea.sflag [#allocation5], 1
    %5331 = vsyncpa %s5330, 1

</llo_original>
